<compile_context>
chip_gen: v7x
topology: tpu7x:2x2x1
jax: 0.10.0
libtpu: 0.0.40
codegen_flags: <defaults>
</compile_context>

<pallas_src>
import functools

import jax
import jax.numpy as jnp
from jax import lax
from jax.experimental import pallas as pl
from jax.experimental.pallas import tpu as pltpu

EPS = 1e-6
NUM_GROUPS = 32
LANE = 128
LOG2E = 1.4426950408889634


def _round_up(x, m):
    return (x + m - 1) // m * m


def _pick_tile(hwp, target):
    """Largest divisor of hwp that is a multiple of 128 and <= target (hwp is a mult. of 128)."""
    if hwp <= target:
        return hwp
    best = LANE
    d = 2 * LANE
    while d <= target:
        if hwp % d == 0:
            best = d
        d += LANE
    return best


def _vmem_limit_bytes(frac=0.75):
    """Scoped-VMEM cap derived from the physical capacity (v7x has only 64 MiB)."""
    cap = None
    try:
        cap = getattr(pltpu.get_tpu_info(), "vmem_capacity_bytes", None)
    except Exception:
        cap = None
    if not cap:
        cap = 64 << 20  # conservative default (v7x physical size)
    return int(int(cap) * frac)


# --------------------------------------------------------------------------------------
# Kernel 1: GroupNorm statistics -> per-channel affine (a, b).   grid = (B, nT)
# --------------------------------------------------------------------------------------
def gn_stats_kernel(x_ref, gamma_ref, beta_ref, gmap_ref, gmapT_ref,
                    ab_ref, sum_scr, sumsq_scr, *, inv_n):
    ti = pl.program_id(1)

    @pl.when(ti == 0)
    def _():
        sum_scr[...] = jnp.zeros(sum_scr.shape, jnp.float32)
        sumsq_scr[...] = jnp.zeros(sumsq_scr.shape, jnp.float32)

    x = x_ref[0].astype(jnp.float32)                         # (T, Cp); padded rows are zero
    sum_scr[...] += jnp.sum(x, axis=0, keepdims=True)        # (1, Cp)
    sumsq_scr[...] += jnp.sum(x * x, axis=0, keepdims=True)  # (1, Cp)

    @pl.when(ti == pl.num_programs(1) - 1)
    def _():
        # per-channel sums -> per-group sums via a tiny matmul (no reshapes / relayouts)
        sum_g = jnp.dot(sum_scr[...], gmap_ref[...], preferred_element_type=jnp.float32)
        sumsq_g = jnp.dot(sumsq_scr[...], gmap_ref[...], preferred_element_type=jnp.float32)
        mean_g = sum_g * inv_n
        # clamp: E[x^2]-E[x]^2 can go slightly negative from cancellation
        var_g = jnp.maximum(sumsq_g * inv_n - mean_g * mean_g, 0.0)
        inv_g = lax.rsqrt(var_g + EPS)
        # broadcast group stats back to channels (gmap^T is precomputed on the host)
        mean_c = jnp.dot(mean_g, gmapT_ref[...], preferred_element_type=jnp.float32)
        inv_c = jnp.dot(inv_g, gmapT_ref[...], preferred_element_type=jnp.float32)
        a_c = inv_c * gamma_ref[...]                         # (1, Cp)
        b_c = beta_ref[...] - mean_c * a_c                   # (1, Cp)
        ab_ref[0] = jnp.concatenate([a_c, b_c], axis=0)      # (2, Cp)


# --------------------------------------------------------------------------------------
# Kernel 2: affine + fused QKV projection.   grid = (B, nT), fully parallel
# --------------------------------------------------------------------------------------
def gn_qkv_kernel(x_ref, ab_ref, wqkv_ref, bqkv_ref, q_ref, k_ref, v_ref, *, cp):
    x = x_ref[0].astype(jnp.float32)                         # (T, Cp)
    ab = ab_ref[0]                                           # (2, Cp)
    h = (x * ab[0:1, :] + ab[1:2, :]).astype(jnp.bfloat16)   # single mul+add VPU pass

    # three separate (T,Cp)x(Cp,Cp) dots; cast each result to bf16 immediately so the
    # (T, 3Cp) f32 intermediate never exists (keeps peak VMEM small on v7x).
    q = jnp.dot(h, wqkv_ref[:, 0 * cp:1 * cp],
                preferred_element_type=jnp.float32) + bqkv_ref[:, 0 * cp:1 * cp]
    q_ref[0] = q.astype(q_ref.dtype)                         # scale*log2(e) already folded in
    k = jnp.dot(h, wqkv_ref[:, 1 * cp:2 * cp],
                preferred_element_type=jnp.float32) + bqkv_ref[:, 1 * cp:2 * cp]
    k_ref[0] = k.astype(k_ref.dtype)
    v = jnp.dot(h, wqkv_ref[:, 2 * cp:3 * cp],
                preferred_element_type=jnp.float32) + bqkv_ref[:, 2 * cp:3 * cp]
    v_ref[0] = v.astype(v_ref.dtype)


# --------------------------------------------------------------------------------------
# Kernel 3: flash-style attention + proj_out + residual.   grid = (B, nQ, nK)
# --------------------------------------------------------------------------------------
def attn_proj_kernel(x_ref, q_ref, k_ref, v_ref, wp_ref, bp_ref,
                     o_ref, m_ref, l_ref, acc_ref, *, cp, hw, tk, need_mask):
    ki = pl.program_id(2)

    @pl.when(ki == 0)
    def _():
        m_ref[...] = jnp.full(m_ref.shape, -jnp.inf, jnp.float32)
        l_ref[...] = jnp.zeros(l_ref.shape, jnp.float32)
        acc_ref[...] = jnp.zeros(acc_ref.shape, jnp.float32)

    q = q_ref[0]                                             # (TQ, Cp) bf16 (pre-scaled)
    k = k_ref[0]                                             # (TK, Cp) bf16
    # contract over the channel dim directly -- no transposed copy of k
    s = lax.dot_general(q, k, (((1,), (1,)), ((), ())),
                        preferred_element_type=jnp.float32)  # (TQ, TK) f32, log2 domain

    if need_mask:
        col = lax.broadcasted_iota(jnp.int32, s.shape, 1) + ki * tk
        s = jnp.where(col < hw, s, -jnp.inf)                 # mask padded key tokens

    m_prev = m_ref[...]                                      # (TQ, LANE) lane-replicated
    m_new = jnp.maximum(m_prev, jnp.max(s, axis=-1, keepdims=True))
    alpha = jnp.exp2(m_prev - m_new)                         # exp2: log2(e) folded into q
    p = jnp.exp2(s - m_new[:, 0:1])                          # (TQ, TK)
    l_ref[...] = alpha * l_ref[...] + jnp.sum(p, axis=-1, keepdims=True)
    acc_scale = alpha if cp == alpha.shape[-1] else alpha[:, 0:1]
    acc_ref[...] = acc_scale * acc_ref[...] + jnp.dot(
        p.astype(jnp.bfloat16), v_ref[0], preferred_element_type=jnp.float32)
    m_ref[...] = m_new

    @pl.when(ki == pl.num_programs(2) - 1)
    def _():
        l = l_ref[...]
        l_use = l if cp == l.shape[-1] else l[:, 0:1]
        o = acc_ref[...] / l_use                             # exact normalize (once per q-tile)
        proj = jnp.dot(o.astype(jnp.bfloat16), wp_ref[...],
                       preferred_element_type=jnp.float32) + bp_ref[...]
        o_ref[0] = (x_ref[0] + proj).astype(o_ref.dtype)     # residual


# --------------------------------------------------------------------------------------
# Wrapper
# --------------------------------------------------------------------------------------
def attn_block(x_nchw, params, *, q_tile=1024, k_tile=512, gn_tile=512, kv_buffers=None):
    """x_nchw: (B, C, H, W) float32. Returns (B, C, H, W) float32."""
    B, C, H, W = x_nchw.shape
    assert C % NUM_GROUPS == 0, "GroupNorm(32) needs C divisible by 32"
    HW = H * W
    Cp = _round_up(max(C, LANE), LANE)        # lane-dense channel dim
    HWp = _round_up(HW, LANE)                 # tileable token dim (padded keys masked)

    TQ = _pick_tile(HWp, q_tile)
    TK = _pick_tile(HWp, k_tile)
    TS = _pick_tile(HWp, gn_tile)
    nQ, nK, nS = HWp // TQ, HWp // TK, HWp // TS
    need_mask = HWp != HW

    vmem_limit = _vmem_limit_bytes()

    # NCHW -> tokens-major (B, HWp, Cp), zero-padded tokens/channels
    x_tok = jnp.transpose(x_nchw, (0, 2, 3, 1)).reshape(B, HW, C)
    x_tok = jnp.pad(x_tok, ((0, 0), (0, HWp - HW), (0, Cp - C))).astype(jnp.float32)

    # softmax scale 1/sqrt(C) (real C) * log2(e) folded into Wq/bq -> exp2 softmax in-kernel
    scale = float(C) ** (-0.5) * LOG2E

    def pad_vec(v):
        return jnp.pad(v.reshape(1, C), ((0, 0), (0, Cp - C))).astype(jnp.float32)

    def pad_w(w):
        return jnp.pad(w, ((0, Cp - C), (0, Cp - C)))

    gamma = pad_vec(params["gamma"])
    beta = pad_vec(params["beta"])

    # one-hot group membership (Cp, G) and its transpose; padded channel rows are all-zero
    cg = C // NUM_GROUPS
    ch = jnp.arange(Cp)
    gmap = jnp.where(
        (ch[:, None] < C) & (ch[:, None] // cg == jnp.arange(NUM_GROUPS)[None, :]),
        1.0, 0.0).astype(jnp.float32)
    gmapT = gmap.T                            # precomputed on host, no in-kernel transpose

    wqkv = jnp.concatenate(
        [pad_w(params["wq"] * scale), pad_w(params["wk"]), pad_w(params["wv"])],
        axis=1).astype(jnp.bfloat16)          # (Cp, 3Cp) bf16
    bqkv = jnp.concatenate(
        [pad_vec(params["bq"] * scale), pad_vec(params["bk"]), pad_vec(params["bv"])],
        axis=1)                               # (1, 3Cp) f32
    wp = pad_w(params["wp"]).astype(jnp.bfloat16)            # (Cp, Cp)
    bp = pad_vec(params["bp"])                               # (1, Cp)

    # ---------------- stage 1a: GroupNorm stats -> per-channel affine ----------------
    ab = pl.pallas_call(
        functools.partial(gn_stats_kernel, inv_n=1.0 / float(HW * cg)),
        out_shape=jax.ShapeDtypeStruct((B, 2, Cp), jnp.float32),
        grid=(B, nS),
        in_specs=[
            pl.BlockSpec((1, TS, Cp), lambda b, t: (b, t, 0)),       # x tile
            pl.BlockSpec((1, Cp), lambda b, t: (0, 0)),              # gamma
            pl.BlockSpec((1, Cp), lambda b, t: (0, 0)),              # beta
            pl.BlockSpec((Cp, NUM_GROUPS), lambda b, t: (0, 0)),     # group map
            pl.BlockSpec((NUM_GROUPS, Cp), lambda b, t: (0, 0)),     # group map^T
        ],
        out_specs=pl.BlockSpec((1, 2, Cp), lambda b, t: (b, 0, 0)),
        scratch_shapes=[pltpu.VMEM((1, Cp), jnp.float32),
                        pltpu.VMEM((1, Cp), jnp.float32)],
        compiler_params=pltpu.CompilerParams(
            dimension_semantics=("parallel", "arbitrary"),
            vmem_limit_bytes=vmem_limit),
        cost_estimate=pl.CostEstimate(
            flops=int(3 * B * HWp * Cp),
            transcendentals=0,
            bytes_accessed=int(B * HWp * Cp * 4 + B * 2 * Cp * 4)),
    )(x_tok, gamma, beta, gmap, gmapT)

    # ---------------- stage 1b: affine + fused QKV (token-tiled, fully parallel) ------
    qkv_shape = jax.ShapeDtypeStruct((B, HWp, Cp), jnp.bfloat16)
    q, k, v = pl.pallas_call(
        functools.partial(gn_qkv_kernel, cp=Cp),
        out_shape=(qkv_shape, qkv_shape, qkv_shape),
        grid=(B, nS),
        in_specs=[
            pl.BlockSpec((1, TS, Cp), lambda b, t: (b, t, 0)),       # x tile
            pl.BlockSpec((1, 2, Cp), lambda b, t: (b, 0, 0)),        # affine (a, b)
            pl.BlockSpec((Cp, 3 * Cp), lambda b, t: (0, 0)),         # fused Wqkv (bf16)
            pl.BlockSpec((1, 3 * Cp), lambda b, t: (0, 0)),          # fused bqkv (f32)
        ],
        out_specs=[
            pl.BlockSpec((1, TS, Cp), lambda b, t: (b, t, 0)),
            pl.BlockSpec((1, TS, Cp), lambda b, t: (b, t, 0)),
            pl.BlockSpec((1, TS, Cp), lambda b, t: (b, t, 0)),
        ],
        compiler_params=pltpu.CompilerParams(
            dimension_semantics=("parallel", "parallel"),
            vmem_limit_bytes=vmem_limit),
        cost_estimate=pl.CostEstimate(
            flops=int(2 * B * HWp * Cp * 3 * Cp + 4 * B * HWp * Cp),
            transcendentals=0,
            bytes_accessed=int(B * HWp * Cp * 4 + 3 * B * HWp * Cp * 2 + Cp * 3 * Cp * 2)),
    )(x_tok, ab, wqkv, bqkv)

    # ---------------- stage 2: flash attention + proj_out + residual ------------------
    kv_kwargs = {} if kv_buffers is None else {"pipeline_mode": pl.Buffered(kv_buffers)}
    out_tok = pl.pallas_call(
        functools.partial(attn_proj_kernel, cp=Cp, hw=HW, tk=TK, need_mask=need_mask),
        out_shape=jax.ShapeDtypeStruct((B, HWp, Cp), jnp.float32),
        grid=(B, nQ, nK),
        in_specs=[
            pl.BlockSpec((1, TQ, Cp), lambda b, qi, ki: (b, qi, 0)),             # x (residual)
            pl.BlockSpec((1, TQ, Cp), lambda b, qi, ki: (b, qi, 0)),             # q
            pl.BlockSpec((1, TK, Cp), lambda b, qi, ki: (b, ki, 0), **kv_kwargs),  # k
            pl.BlockSpec((1, TK, Cp), lambda b, qi, ki: (b, ki, 0), **kv_kwargs),  # v
            pl.BlockSpec((Cp, Cp), lambda b, qi, ki: (0, 0)),                    # Wproj (bf16)
            pl.BlockSpec((1, Cp), lambda b, qi, ki: (0, 0)),                     # bproj (f32)
        ],
        out_specs=pl.BlockSpec((1, TQ, Cp), lambda b, qi, ki: (b, qi, 0)),
        scratch_shapes=[
            pltpu.VMEM((TQ, LANE), jnp.float32),   # running max m (lane-replicated)
            pltpu.VMEM((TQ, LANE), jnp.float32),   # running denom l (lane-replicated)
            pltpu.VMEM((TQ, Cp), jnp.float32),     # un-normalized accumulator
        ],
        input_output_aliases={0: 0},               # residual x buffer reused for the output
        compiler_params=pltpu.CompilerParams(
            dimension_semantics=("parallel", "parallel", "arbitrary"),
            vmem_limit_bytes=vmem_limit),
        cost_estimate=pl.CostEstimate(
            flops=int(B * (4 * HWp * HWp * Cp + 2 * HWp * Cp * Cp)),
            transcendentals=int(2 * B * HWp * HWp),
            # includes the nQ-fold re-reads of k and v (bf16)
            bytes_accessed=int(B * HWp * Cp * (4 + 2 + 4)
                               + B * nQ * HWp * Cp * 2 * 2 + Cp * Cp * 2)),
    )(x_tok, q, k, v, wp, bp)

    # drop token/channel padding, tokens-major -> NCHW
    # TODO(synk): if the surrounding graph is NHWC, return out_tok[..., :C] directly and skip
    # the NCHW<->NHWC round trips entirely.
    out = out_tok[:, :HW, :C].reshape(B, H, W, C)
    return jnp.transpose(out, (0, 3, 1, 2))


# --------------------------------------------------------------------------------------
# Params + pure-JAX reference (for a correctness sanity check)
# --------------------------------------------------------------------------------------
def init_params(key, C):
    ks = jax.random.split(key, 10)
    # Conv2d(C, C, 1) weight is (C_out, C_in, 1, 1) in torch; applied in (HW, C) layout as
    # y = h @ W with W = conv.weight[:, :, 0, 0].T. Here we generate the (C_in, C_out)
    # matrices directly.
    def w(k):
        return 0.1 * jax.random.normal(k, (C, C), jnp.float32)

    def b(k):
        return 0.02 * jax.random.normal(k, (C,), jnp.float32)

    return {
        "gamma": 1.0 + 0.1 * jax.random.normal(ks[0], (C,), jnp.float32),
        "beta": 0.1 * jax.random.normal(ks[1], (C,), jnp.float32),
        "wq": w(ks[2]), "bq": b(ks[3]),
        "wk": w(ks[4]), "bk": b(ks[5]),
        "wv": w(ks[6]), "bv": b(ks[7]),
        "wp": w(ks[8]), "bp": b(ks[9]),
    }


def ref_attn_block(x, params):
    B, C, H, W = x.shape
    HW = H * W
    xg = x.reshape(B, NUM_GROUPS, C // NUM_GROUPS, H, W)
    mean = xg.mean(axis=(2, 3, 4), keepdims=True)
    var = xg.var(axis=(2, 3, 4), keepdims=True)
    hn = ((xg - mean) / jnp.sqrt(var + EPS)).reshape(B, C, H, W)
    hn = hn * params["gamma"][None, :, None, None] + params["beta"][None, :, None, None]
    ht = jnp.transpose(hn, (0, 2, 3, 1)).reshape(B, HW, C)
    q = ht @ params["wq"] + params["bq"]
    k = ht @ params["wk"] + params["bk"]
    v = ht @ params["wv"] + params["bv"]
    s = jnp.einsum("bqc,bkc->bqk", q, k) * (float(C) ** -0.5)
    p = jax.nn.softmax(s, axis=-1)
    o = jnp.einsum("bqk,bkc->bqc", p, v)
    o = o @ params["wp"] + params["bp"]
    return x + jnp.transpose(o.reshape(B, H, W, C), (0, 3, 1, 2))


if __name__ == "__main__":
    key = jax.random.PRNGKey(0)
    k_x, k_p, k_x2 = jax.random.split(key, 3)

    # Case 1: C=64 (multiple of 32), 16x16 spatial. 128-wide tiles force the multi-tile
    # flash / stats-reduction paths (HWp=256 -> 2 tiles per axis).
    B, C, H, W = 2, 64, 16, 16
    x = jax.random.normal(k_x, (B, C, H, W), jnp.float32)
    params = init_params(k_p, C)

    fn = jax.jit(functools.partial(attn_block, q_tile=128, k_tile=128, gn_tile=128))
    out = fn(x, params)
    jax.block_until_ready(out)
    assert out.shape == (B, C, H, W)
    assert bool(jnp.all(jnp.isfinite(out)))
    ref = ref_attn_block(x, params)
    err1 = float(jnp.max(jnp.abs(out - ref)))
    assert err1 < 1e-1, f"case1 max abs error vs reference too large: {err1}"

    # Case 2: 10x10 spatial (HW=100, not a multiple of 128) exercises the padded+masked path.
    B2, C2, H2, W2 = 1, 64, 10, 10
    x2 = jax.random.normal(k_x2, (B2, C2, H2, W2), jnp.float32)
    out2 = jax.jit(attn_block)(x2, params)
    jax.block_until_ready(out2)
    assert out2.shape == (B2, C2, H2, W2)
    ref2 = ref_attn_block(x2, params)
    err2 = float(jnp.max(jnp.abs(out2 - ref2)))
    assert err2 < 1e-1, f"case2 max abs error vs reference too large: {err2}"

    print("KERNEL_OK")
</pallas_src>

<mosaic_0001>
module attributes {stable_mosaic.version = 11 : i64} {
  func.func @gn_qkv_kernel(%arg0: i32, %arg1: i32, %arg2: memref<1x128x128xf32, #tpu.memory_space<vmem>>, %arg3: memref<1x2x128xf32, #tpu.memory_space<vmem>>, %arg4: memref<128x384xbf16, #tpu.memory_space<vmem>>, %arg5: memref<1x384xf32, #tpu.memory_space<vmem>>, %arg6: memref<1x128x128xbf16, #tpu.memory_space<vmem>>, %arg7: memref<1x128x128xbf16, #tpu.memory_space<vmem>>, %arg8: memref<1x128x128xbf16, #tpu.memory_space<vmem>>) attributes {dimension_semantics = [#tpu.dimension_semantics<parallel>, #tpu.dimension_semantics<parallel>], iteration_bounds = array<i64: 2, 2>, scalar_prefetch = 0 : i64, scratch_operands = 0 : i64, tpu.core_type = #tpu.core_type<tc>, window_params = [{transform_indices = @transform_0, window_bounds = array<i64: 1, 128, 128>}, {transform_indices = @transform_1, window_bounds = array<i64: 1, 2, 128>}, {pipeline_mode = #tpu.pipeline_mode<synchronous>, transform_indices = @transform_2, window_bounds = array<i64: 128, 384>}, {pipeline_mode = #tpu.pipeline_mode<synchronous>, transform_indices = @transform_3, window_bounds = array<i64: 1, 384>}, {transform_indices = @transform_4, window_bounds = array<i64: 1, 128, 128>}, {transform_indices = @transform_5, window_bounds = array<i64: 1, 128, 128>}, {transform_indices = @transform_6, window_bounds = array<i64: 1, 128, 128>}]} {
    %c0 = arith.constant 0 : index
    %c0_0 = arith.constant 0 : index
    %c0_1 = arith.constant 0 : index
    %0 = vector.load %arg2[%c0, %c0_0, %c0_1] : memref<1x128x128xf32, #tpu.memory_space<vmem>>, vector<1x128x128xf32>
    %1 = vector.shape_cast %0 : vector<1x128x128xf32> to vector<128x128xf32>
    %c0_2 = arith.constant 0 : index
    %c0_3 = arith.constant 0 : index
    %c0_4 = arith.constant 0 : index
    %2 = vector.load %arg3[%c0_2, %c0_3, %c0_4] : memref<1x2x128xf32, #tpu.memory_space<vmem>>, vector<1x2x128xf32>
    %3 = vector.shape_cast %2 : vector<1x2x128xf32> to vector<2x128xf32>
    %4 = vector.extract_strided_slice %3 {offsets = [0, 0], sizes = [1, 128], strides = [1, 1]} : vector<2x128xf32> to vector<1x128xf32>
    %5 = vector.broadcast %4 : vector<1x128xf32> to vector<128x128xf32>
    %6 = arith.mulf %1, %5 : vector<128x128xf32>
    %7 = vector.extract_strided_slice %3 {offsets = [1, 0], sizes = [1, 128], strides = [1, 1]} : vector<2x128xf32> to vector<1x128xf32>
    %8 = vector.broadcast %7 : vector<1x128xf32> to vector<128x128xf32>
    %9 = arith.addf %6, %8 : vector<128x128xf32>
    %10 = arith.truncf %9 : vector<128x128xf32> to vector<128x128xbf16>
    %c0_5 = arith.constant 0 : index
    %c0_6 = arith.constant 0 : index
    %11 = vector.load %arg4[%c0_5, %c0_6] : memref<128x384xbf16, #tpu.memory_space<vmem>>, vector<128x128xbf16>
    %cst = arith.constant dense<0.000000e+00> : vector<128x128xf32>
    %12 = tpu.matmul %10, %11, %cst {dimension_numbers = #tpu.dot_dimension_numbers<[1], [0], [0], [1], [0, 0, 1, 1], [], []>} : vector<128x128xbf16>, vector<128x128xbf16>, vector<128x128xf32> -> vector<128x128xf32>
    %c0_7 = arith.constant 0 : index
    %c0_8 = arith.constant 0 : index
    %13 = vector.load %arg5[%c0_7, %c0_8] : memref<1x384xf32, #tpu.memory_space<vmem>>, vector<1x128xf32>
    %14 = vector.broadcast %13 : vector<1x128xf32> to vector<128x128xf32>
    %15 = arith.addf %12, %14 : vector<128x128xf32>
    %16 = arith.truncf %15 : vector<128x128xf32> to vector<128x128xbf16>
    %c0_9 = arith.constant 0 : index
    %c0_10 = arith.constant 0 : index
    %c0_11 = arith.constant 0 : index
    %17 = vector.load %arg6[%c0_9, %c0_10, %c0_11] : memref<1x128x128xbf16, #tpu.memory_space<vmem>>, vector<1x128x128xbf16>
    %18 = vector.shape_cast %17 : vector<1x128x128xbf16> to vector<128x128xbf16>
    %19 = vector.shape_cast %16 : vector<128x128xbf16> to vector<1x128x128xbf16>
    tpu.vector_store %arg6[%c0_9, %c0_10, %c0_11], %19 {strides = array<i32>} : memref<1x128x128xbf16, #tpu.memory_space<vmem>>, vector<1x128x128xbf16>,
    %c0_12 = arith.constant 0 : index
    %c128 = arith.constant 128 : index
    %20 = vector.load %arg4[%c0_12, %c128] : memref<128x384xbf16, #tpu.memory_space<vmem>>, vector<128x128xbf16>
    %cst_13 = arith.constant dense<0.000000e+00> : vector<128x128xf32>
    %21 = tpu.matmul %10, %20, %cst_13 {dimension_numbers = #tpu.dot_dimension_numbers<[1], [0], [0], [1], [0, 0, 1, 1], [], []>} : vector<128x128xbf16>, vector<128x128xbf16>, vector<128x128xf32> -> vector<128x128xf32>
    %c0_14 = arith.constant 0 : index
    %c128_15 = arith.constant 128 : index
    %22 = vector.load %arg5[%c0_14, %c128_15] : memref<1x384xf32, #tpu.memory_space<vmem>>, vector<1x128xf32>
    %23 = vector.broadcast %22 : vector<1x128xf32> to vector<128x128xf32>
    %24 = arith.addf %21, %23 : vector<128x128xf32>
    %25 = arith.truncf %24 : vector<128x128xf32> to vector<128x128xbf16>
    %c0_16 = arith.constant 0 : index
    %c0_17 = arith.constant 0 : index
    %c0_18 = arith.constant 0 : index
    %26 = vector.load %arg7[%c0_16, %c0_17, %c0_18] : memref<1x128x128xbf16, #tpu.memory_space<vmem>>, vector<1x128x128xbf16>
    %27 = vector.shape_cast %26 : vector<1x128x128xbf16> to vector<128x128xbf16>
    %28 = vector.shape_cast %25 : vector<128x128xbf16> to vector<1x128x128xbf16>
    tpu.vector_store %arg7[%c0_16, %c0_17, %c0_18], %28 {strides = array<i32>} : memref<1x128x128xbf16, #tpu.memory_space<vmem>>, vector<1x128x128xbf16>,
    %c0_19 = arith.constant 0 : index
    %c256 = arith.constant 256 : index
    %29 = vector.load %arg4[%c0_19, %c256] : memref<128x384xbf16, #tpu.memory_space<vmem>>, vector<128x128xbf16>
    %cst_20 = arith.constant dense<0.000000e+00> : vector<128x128xf32>
    %30 = tpu.matmul %10, %29, %cst_20 {dimension_numbers = #tpu.dot_dimension_numbers<[1], [0], [0], [1], [0, 0, 1, 1], [], []>} : vector<128x128xbf16>, vector<128x128xbf16>, vector<128x128xf32> -> vector<128x128xf32>
    %c0_21 = arith.constant 0 : index
    %c256_22 = arith.constant 256 : index
    %31 = vector.load %arg5[%c0_21, %c256_22] : memref<1x384xf32, #tpu.memory_space<vmem>>, vector<1x128xf32>
    %32 = vector.broadcast %31 : vector<1x128xf32> to vector<128x128xf32>
    %33 = arith.addf %30, %32 : vector<128x128xf32>
    %34 = arith.truncf %33 : vector<128x128xf32> to vector<128x128xbf16>
    %c0_23 = arith.constant 0 : index
    %c0_24 = arith.constant 0 : index
    %c0_25 = arith.constant 0 : index
    %35 = vector.load %arg8[%c0_23, %c0_24, %c0_25] : memref<1x128x128xbf16, #tpu.memory_space<vmem>>, vector<1x128x128xbf16>
    %36 = vector.shape_cast %35 : vector<1x128x128xbf16> to vector<128x128xbf16>
    %37 = vector.shape_cast %34 : vector<128x128xbf16> to vector<1x128x128xbf16>
    tpu.vector_store %arg8[%c0_23, %c0_24, %c0_25], %37 {strides = array<i32>} : memref<1x128x128xbf16, #tpu.memory_space<vmem>>, vector<1x128x128xbf16>,
    return
  }
  func.func @transform_0(%arg0: i32, %arg1: i32) -> (i32, i32, i32) {
    %c0_i32 = arith.constant 0 : i32
    %c0_i32_0 = arith.constant 0 : i32
    return %arg0, %arg1, %c0_i32 : i32, i32, i32
  }
  func.func @transform_1(%arg0: i32, %arg1: i32) -> (i32, i32, i32) {
    %c0_i32 = arith.constant 0 : i32
    %c0_i32_0 = arith.constant 0 : i32
    %c0_i32_1 = arith.constant 0 : i32
    return %arg0, %c0_i32, %c0_i32_0 : i32, i32, i32
  }
  func.func @transform_2(%arg0: i32, %arg1: i32) -> (i32, i32) {
    %c0_i32 = arith.constant 0 : i32
    %c0_i32_0 = arith.constant 0 : i32
    %c0_i32_1 = arith.constant 0 : i32
    return %c0_i32, %c0_i32_0 : i32, i32
  }
  func.func @transform_3(%arg0: i32, %arg1: i32) -> (i32, i32) {
    %c0_i32 = arith.constant 0 : i32
    %c0_i32_0 = arith.constant 0 : i32
    %c0_i32_1 = arith.constant 0 : i32
    return %c0_i32, %c0_i32_0 : i32, i32
  }
  func.func @transform_4(%arg0: i32, %arg1: i32) -> (i32, i32, i32) {
    %c0_i32 = arith.constant 0 : i32
    %c0_i32_0 = arith.constant 0 : i32
    return %arg0, %arg1, %c0_i32 : i32, i32, i32
  }
  func.func @transform_5(%arg0: i32, %arg1: i32) -> (i32, i32, i32) {
    %c0_i32 = arith.constant 0 : i32
    %c0_i32_0 = arith.constant 0 : i32
    return %arg0, %arg1, %c0_i32 : i32, i32, i32
  }
  func.func @transform_6(%arg0: i32, %arg1: i32) -> (i32, i32, i32) {
    %c0_i32 = arith.constant 0 : i32
    %c0_i32_0 = arith.constant 0 : i32
    return %arg0, %arg1, %c0_i32 : i32, i32, i32
  }
}

module attributes {stable_mosaic.version = 11 : i64} {
  func.func @gn_stats_kernel(%arg0: i32, %arg1: i32, %arg2: memref<1x128x128xf32, #tpu.memory_space<vmem>>, %arg3: memref<1x128xf32, #tpu.memory_space<vmem>>, %arg4: memref<1x128xf32, #tpu.memory_space<vmem>>, %arg5: memref<128x32xf32, #tpu.memory_space<vmem>>, %arg6: memref<32x128xf32, #tpu.memory_space<vmem>>, %arg7: memref<1x2x128xf32, #tpu.memory_space<vmem>>, %arg8: memref<1x128xf32, #tpu.memory_space<vmem>>, %arg9: memref<1x128xf32, #tpu.memory_space<vmem>>) attributes {dimension_semantics = [#tpu.dimension_semantics<parallel>, #tpu.dimension_semantics<arbitrary>], iteration_bounds = array<i64: 2, 2>, scalar_prefetch = 0 : i64, scratch_operands = 2 : i64, tpu.core_type = #tpu.core_type<tc>, window_params = [{transform_indices = @transform_0, window_bounds = array<i64: 1, 128, 128>}, {pipeline_mode = #tpu.pipeline_mode<synchronous>, transform_indices = @transform_1, window_bounds = array<i64: 1, 128>}, {pipeline_mode = #tpu.pipeline_mode<synchronous>, transform_indices = @transform_2, window_bounds = array<i64: 1, 128>}, {pipeline_mode = #tpu.pipeline_mode<synchronous>, transform_indices = @transform_3, window_bounds = array<i64: 128, 32>}, {pipeline_mode = #tpu.pipeline_mode<synchronous>, transform_indices = @transform_4, window_bounds = array<i64: 32, 128>}, {transform_indices = @transform_5, window_bounds = array<i64: 1, 2, 128>}]} {
    %c0_i32 = arith.constant 0 : i32
    %0 = arith.cmpi eq, %arg1, %c0_i32 : i32
    %1 = arith.extui %0 : i1 to i32
    %c0_i32_0 = arith.constant 0 : i32
    %2 = arith.cmpi ne, %1, %c0_i32_0 : i32
    scf.if %2 {
      %cst_13 = arith.constant 0.000000e+00 : f32
      %19 = vector.broadcast %cst_13 : f32 to vector<1x128xf32>
      %c0_14 = arith.constant 0 : index
      %c0_15 = arith.constant 0 : index
      %20 = vector.load %arg8[%c0_14, %c0_15] : memref<1x128xf32, #tpu.memory_space<vmem>>, vector<1x128xf32>
      tpu.vector_store %arg8[%c0_14, %c0_15], %19 {strides = array<i32>} : memref<1x128xf32, #tpu.memory_space<vmem>>, vector<1x128xf32>,
      %cst_16 = arith.constant 0.000000e+00 : f32
      %21 = vector.broadcast %cst_16 : f32 to vector<1x128xf32>
      %c0_17 = arith.constant 0 : index
      %c0_18 = arith.constant 0 : index
      %22 = vector.load %arg9[%c0_17, %c0_18] : memref<1x128xf32, #tpu.memory_space<vmem>>, vector<1x128xf32>
      tpu.vector_store %arg9[%c0_17, %c0_18], %21 {strides = array<i32>} : memref<1x128xf32, #tpu.memory_space<vmem>>, vector<1x128xf32>,
    } else {
    }
    %c0 = arith.constant 0 : index
    %c0_1 = arith.constant 0 : index
    %c0_2 = arith.constant 0 : index
    %3 = vector.load %arg2[%c0, %c0_1, %c0_2] : memref<1x128x128xf32, #tpu.memory_space<vmem>>, vector<1x128x128xf32>
    %4 = vector.shape_cast %3 : vector<1x128x128xf32> to vector<128x128xf32>
    %c0_3 = arith.constant 0 : index
    %c0_4 = arith.constant 0 : index
    %5 = vector.load %arg8[%c0_3, %c0_4] : memref<1x128xf32, #tpu.memory_space<vmem>>, vector<1x128xf32>
    %cst = arith.constant dense<0.000000e+00> : vector<128xf32>
    %6 = vector.multi_reduction <add>, %4, %cst [0] : vector<128x128xf32> to vector<128xf32>
    %7 = vector.shape_cast %6 : vector<128xf32> to vector<1x128xf32>
    %8 = arith.addf %5, %7 : vector<1x128xf32>
    %c0_5 = arith.constant 0 : index
    %c0_6 = arith.constant 0 : index
    %9 = vector.load %arg8[%c0_5, %c0_6] : memref<1x128xf32, #tpu.memory_space<vmem>>, vector<1x128xf32>
    tpu.vector_store %arg8[%c0_5, %c0_6], %8 {strides = array<i32>} : memref<1x128xf32, #tpu.memory_space<vmem>>, vector<1x128xf32>,
    %c0_7 = arith.constant 0 : index
    %c0_8 = arith.constant 0 : index
    %10 = vector.load %arg9[%c0_7, %c0_8] : memref<1x128xf32, #tpu.memory_space<vmem>>, vector<1x128xf32>
    %11 = arith.mulf %4, %4 : vector<128x128xf32>
    %cst_9 = arith.constant dense<0.000000e+00> : vector<128xf32>
    %12 = vector.multi_reduction <add>, %11, %cst_9 [0] : vector<128x128xf32> to vector<128xf32>
    %13 = vector.shape_cast %12 : vector<128xf32> to vector<1x128xf32>
    %14 = arith.addf %10, %13 : vector<1x128xf32>
    %c0_10 = arith.constant 0 : index
    %c0_11 = arith.constant 0 : index
    %15 = vector.load %arg9[%c0_10, %c0_11] : memref<1x128xf32, #tpu.memory_space<vmem>>, vector<1x128xf32>
    tpu.vector_store %arg9[%c0_10, %c0_11], %14 {strides = array<i32>} : memref<1x128xf32, #tpu.memory_space<vmem>>, vector<1x128xf32>,
    %c1_i32 = arith.constant 1 : i32
    %16 = arith.cmpi eq, %arg1, %c1_i32 : i32
    %17 = arith.extui %16 : i1 to i32
    %c0_i32_12 = arith.constant 0 : i32
    %18 = arith.cmpi ne, %17, %c0_i32_12 : i32
    scf.if %18 {
      %c0_13 = arith.constant 0 : index
      %c0_14 = arith.constant 0 : index
      %19 = vector.load %arg8[%c0_13, %c0_14] : memref<1x128xf32, #tpu.memory_space<vmem>>, vector<1x128xf32>
      %c0_15 = arith.constant 0 : index
      %c0_16 = arith.constant 0 : index
      %20 = vector.load %arg5[%c0_15, %c0_16] : memref<128x32xf32, #tpu.memory_space<vmem>>, vector<128x32xf32>
      %cst_17 = arith.constant dense<0.000000e+00> : vector<1x32xf32>
      %21 = tpu.matmul %19, %20, %cst_17 {dimension_numbers = #tpu.dot_dimension_numbers<[1], [0], [0], [1], [0, 0, 1, 1], [], []>} : vector<1x128xf32>, vector<128x32xf32>, vector<1x32xf32> -> vector<1x32xf32>
      %c0_18 = arith.constant 0 : index
      %c0_19 = arith.constant 0 : index
      %22 = vector.load %arg9[%c0_18, %c0_19] : memref<1x128xf32, #tpu.memory_space<vmem>>, vector<1x128xf32>
      %c0_20 = arith.constant 0 : index
      %c0_21 = arith.constant 0 : index
      %23 = vector.load %arg5[%c0_20, %c0_21] : memref<128x32xf32, #tpu.memory_space<vmem>>, vector<128x32xf32>
      %cst_22 = arith.constant dense<0.000000e+00> : vector<1x32xf32>
      %24 = tpu.matmul %22, %23, %cst_22 {dimension_numbers = #tpu.dot_dimension_numbers<[1], [0], [0], [1], [0, 0, 1, 1], [], []>} : vector<1x128xf32>, vector<128x32xf32>, vector<1x32xf32> -> vector<1x32xf32>
      %cst_23 = arith.constant 0.001953125 : f32
      %25 = vector.broadcast %cst_23 : f32 to vector<1x32xf32>
      %26 = arith.mulf %21, %25 : vector<1x32xf32>
      %cst_24 = arith.constant 0.001953125 : f32
      %27 = vector.broadcast %cst_24 : f32 to vector<1x32xf32>
      %28 = arith.mulf %24, %27 : vector<1x32xf32>
      %29 = arith.mulf %26, %26 : vector<1x32xf32>
      %30 = arith.subf %28, %29 : vector<1x32xf32>
      %cst_25 = arith.constant 0.000000e+00 : f32
      %31 = vector.broadcast %cst_25 : f32 to vector<1x32xf32>
      %32 = arith.maximumf %30, %31 : vector<1x32xf32>
      %cst_26 = arith.constant 9.99999997E-7 : f32
      %33 = vector.broadcast %cst_26 : f32 to vector<1x32xf32>
      %34 = arith.addf %32, %33 : vector<1x32xf32>
      %35 = math.rsqrt %34 : vector<1x32xf32>
      %c0_27 = arith.constant 0 : index
      %c0_28 = arith.constant 0 : index
      %36 = vector.load %arg6[%c0_27, %c0_28] : memref<32x128xf32, #tpu.memory_space<vmem>>, vector<32x128xf32>
      %cst_29 = arith.constant dense<0.000000e+00> : vector<1x128xf32>
      %37 = tpu.matmul %26, %36, %cst_29 {dimension_numbers = #tpu.dot_dimension_numbers<[1], [0], [0], [1], [0, 0, 1, 1], [], []>} : vector<1x32xf32>, vector<32x128xf32>, vector<1x128xf32> -> vector<1x128xf32>
      %c0_30 = arith.constant 0 : index
      %c0_31 = arith.constant 0 : index
      %38 = vector.load %arg6[%c0_30, %c0_31] : memref<32x128xf32, #tpu.memory_space<vmem>>, vector<32x128xf32>
      %cst_32 = arith.constant dense<0.000000e+00> : vector<1x128xf32>
      %39 = tpu.matmul %35, %38, %cst_32 {dimension_numbers = #tpu.dot_dimension_numbers<[1], [0], [0], [1], [0, 0, 1, 1], [], []>} : vector<1x32xf32>, vector<32x128xf32>, vector<1x128xf32> -> vector<1x128xf32>
      %c0_33 = arith.constant 0 : index
      %c0_34 = arith.constant 0 : index
      %40 = vector.load %arg3[%c0_33, %c0_34] : memref<1x128xf32, #tpu.memory_space<vmem>>, vector<1x128xf32>
      %41 = arith.mulf %39, %40 : vector<1x128xf32>
      %c0_35 = arith.constant 0 : index
      %c0_36 = arith.constant 0 : index
      %42 = vector.load %arg4[%c0_35, %c0_36] : memref<1x128xf32, #tpu.memory_space<vmem>>, vector<1x128xf32>
      %43 = arith.mulf %37, %41 : vector<1x128xf32>
      %44 = arith.subf %42, %43 : vector<1x128xf32>
      %45 = tpu.concatenate %41, %44 in 0 : vector<1x128xf32>, vector<1x128xf32> -> vector<2x128xf32>
      %c0_37 = arith.constant 0 : index
      %c0_38 = arith.constant 0 : index
      %c0_39 = arith.constant 0 : index
      %46 = vector.load %arg7[%c0_37, %c0_38, %c0_39] : memref<1x2x128xf32, #tpu.memory_space<vmem>>, vector<1x2x128xf32>
      %47 = vector.shape_cast %46 : vector<1x2x128xf32> to vector<2x128xf32>
      %48 = vector.shape_cast %45 : vector<2x128xf32> to vector<1x2x128xf32>
      tpu.vector_store %arg7[%c0_37, %c0_38, %c0_39], %48 {strides = array<i32>} : memref<1x2x128xf32, #tpu.memory_space<vmem>>, vector<1x2x128xf32>,
    } else {
    }
    return
  }
  func.func @transform_0(%arg0: i32, %arg1: i32) -> (i32, i32, i32) {
    %c0_i32 = arith.constant 0 : i32
    %c0_i32_0 = arith.constant 0 : i32
    return %arg0, %arg1, %c0_i32 : i32, i32, i32
  }
  func.func @transform_1(%arg0: i32, %arg1: i32) -> (i32, i32) {
    %c0_i32 = arith.constant 0 : i32
    %c0_i32_0 = arith.constant 0 : i32
    %c0_i32_1 = arith.constant 0 : i32
    return %c0_i32, %c0_i32_0 : i32, i32
  }
  func.func @transform_2(%arg0: i32, %arg1: i32) -> (i32, i32) {
    %c0_i32 = arith.constant 0 : i32
    %c0_i32_0 = arith.constant 0 : i32
    %c0_i32_1 = arith.constant 0 : i32
    return %c0_i32, %c0_i32_0 : i32, i32
  }
  func.func @transform_3(%arg0: i32, %arg1: i32) -> (i32, i32) {
    %c0_i32 = arith.constant 0 : i32
    %c0_i32_0 = arith.constant 0 : i32
    %c0_i32_1 = arith.constant 0 : i32
    return %c0_i32, %c0_i32_0 : i32, i32
  }
  func.func @transform_4(%arg0: i32, %arg1: i32) -> (i32, i32) {
    %c0_i32 = arith.constant 0 : i32
    %c0_i32_0 = arith.constant 0 : i32
    %c0_i32_1 = arith.constant 0 : i32
    return %c0_i32, %c0_i32_0 : i32, i32
  }
  func.func @transform_5(%arg0: i32, %arg1: i32) -> (i32, i32, i32) {
    %c0_i32 = arith.constant 0 : i32
    %c0_i32_0 = arith.constant 0 : i32
    %c0_i32_1 = arith.constant 0 : i32
    return %arg0, %c0_i32, %c0_i32_0 : i32, i32, i32
  }
}

module attributes {stable_mosaic.version = 11 : i64} {
  func.func @attn_proj_kernel(%arg0: i32, %arg1: i32, %arg2: i32, %arg3: memref<1x128x128xf32, #tpu.memory_space<vmem>>, %arg4: memref<1x128x128xbf16, #tpu.memory_space<vmem>>, %arg5: memref<1x128x128xbf16, #tpu.memory_space<vmem>>, %arg6: memref<1x128x128xbf16, #tpu.memory_space<vmem>>, %arg7: memref<128x128xbf16, #tpu.memory_space<vmem>>, %arg8: memref<1x128xf32, #tpu.memory_space<vmem>>, %arg9: memref<1x128x128xf32, #tpu.memory_space<vmem>>, %arg10: memref<128x128xf32, #tpu.memory_space<vmem>>, %arg11: memref<128x128xf32, #tpu.memory_space<vmem>>, %arg12: memref<128x128xf32, #tpu.memory_space<vmem>>) attributes {dimension_semantics = [#tpu.dimension_semantics<parallel>, #tpu.dimension_semantics<parallel>, #tpu.dimension_semantics<arbitrary>], iteration_bounds = array<i64: 2, 2, 2>, scalar_prefetch = 0 : i64, scratch_operands = 3 : i64, tpu.core_type = #tpu.core_type<tc>, window_params = [{transform_indices = @transform_0, window_bounds = array<i64: 1, 128, 128>}, {transform_indices = @transform_1, window_bounds = array<i64: 1, 128, 128>}, {transform_indices = @transform_2, window_bounds = array<i64: 1, 128, 128>}, {transform_indices = @transform_3, window_bounds = array<i64: 1, 128, 128>}, {pipeline_mode = #tpu.pipeline_mode<synchronous>, transform_indices = @transform_4, window_bounds = array<i64: 128, 128>}, {pipeline_mode = #tpu.pipeline_mode<synchronous>, transform_indices = @transform_5, window_bounds = array<i64: 1, 128>}, {transform_indices = @transform_6, window_bounds = array<i64: 1, 128, 128>}]} {
    %c0_i32 = arith.constant 0 : i32
    %0 = arith.cmpi eq, %arg2, %c0_i32 : i32
    %1 = arith.extui %0 : i1 to i32
    %c0_i32_0 = arith.constant 0 : i32
    %2 = arith.cmpi ne, %1, %c0_i32_0 : i32
    scf.if %2 {
      %cst_25 = arith.constant 0xFF800000 : f32
      %38 = vector.broadcast %cst_25 : f32 to vector<128x128xf32>
      %c0_26 = arith.constant 0 : index
      %c0_27 = arith.constant 0 : index
      %39 = vector.load %arg10[%c0_26, %c0_27] : memref<128x128xf32, #tpu.memory_space<vmem>>, vector<128x128xf32>
      tpu.vector_store %arg10[%c0_26, %c0_27], %38 {strides = array<i32>} : memref<128x128xf32, #tpu.memory_space<vmem>>, vector<128x128xf32>,
      %cst_28 = arith.constant 0.000000e+00 : f32
      %40 = vector.broadcast %cst_28 : f32 to vector<128x128xf32>
      %c0_29 = arith.constant 0 : index
      %c0_30 = arith.constant 0 : index
      %41 = vector.load %arg11[%c0_29, %c0_30] : memref<128x128xf32, #tpu.memory_space<vmem>>, vector<128x128xf32>
      tpu.vector_store %arg11[%c0_29, %c0_30], %40 {strides = array<i32>} : memref<128x128xf32, #tpu.memory_space<vmem>>, vector<128x128xf32>,
      %cst_31 = arith.constant 0.000000e+00 : f32
      %42 = vector.broadcast %cst_31 : f32 to vector<128x128xf32>
      %c0_32 = arith.constant 0 : index
      %c0_33 = arith.constant 0 : index
      %43 = vector.load %arg12[%c0_32, %c0_33] : memref<128x128xf32, #tpu.memory_space<vmem>>, vector<128x128xf32>
      tpu.vector_store %arg12[%c0_32, %c0_33], %42 {strides = array<i32>} : memref<128x128xf32, #tpu.memory_space<vmem>>, vector<128x128xf32>,
    } else {
    }
    %c0 = arith.constant 0 : index
    %c0_1 = arith.constant 0 : index
    %c0_2 = arith.constant 0 : index
    %3 = vector.load %arg4[%c0, %c0_1, %c0_2] : memref<1x128x128xbf16, #tpu.memory_space<vmem>>, vector<1x128x128xbf16>
    %4 = vector.shape_cast %3 : vector<1x128x128xbf16> to vector<128x128xbf16>
    %c0_3 = arith.constant 0 : index
    %c0_4 = arith.constant 0 : index
    %c0_5 = arith.constant 0 : index
    %5 = vector.load %arg5[%c0_3, %c0_4, %c0_5] : memref<1x128x128xbf16, #tpu.memory_space<vmem>>, vector<1x128x128xbf16>
    %6 = vector.shape_cast %5 : vector<1x128x128xbf16> to vector<128x128xbf16>
    %cst = arith.constant dense<0.000000e+00> : vector<128x128xf32>
    %7 = tpu.matmul %4, %6, %cst {dimension_numbers = #tpu.dot_dimension_numbers<[1], [1], [0], [0], [0, 0, 1, 0], [], []>} : vector<128x128xbf16>, vector<128x128xbf16>, vector<128x128xf32> -> vector<128x128xf32>
    %c0_6 = arith.constant 0 : index
    %c0_7 = arith.constant 0 : index
    %8 = vector.load %arg10[%c0_6, %c0_7] : memref<128x128xf32, #tpu.memory_space<vmem>>, vector<128x128xf32>
    %cst_8 = arith.constant dense<0xFF800000> : vector<128xf32>
    %9 = vector.multi_reduction <maximumf>, %7, %cst_8 [1] : vector<128x128xf32> to vector<128xf32>
    %10 = vector.shape_cast %9 : vector<128xf32> to vector<128x1xf32>
    %11 = vector.broadcast %10 : vector<128x1xf32> to vector<128x128xf32>
    %12 = arith.maximumf %8, %11 : vector<128x128xf32>
    %13 = arith.subf %8, %12 : vector<128x128xf32>
    %14 = math.exp2 %13 : vector<128x128xf32>
    %15 = vector.extract_strided_slice %12 {offsets = [0, 0], sizes = [128, 1], strides = [1, 1]} : vector<128x128xf32> to vector<128x1xf32>
    %16 = vector.broadcast %15 : vector<128x1xf32> to vector<128x128xf32>
    %17 = arith.subf %7, %16 : vector<128x128xf32>
    %18 = math.exp2 %17 : vector<128x128xf32>
    %c0_9 = arith.constant 0 : index
    %c0_10 = arith.constant 0 : index
    %19 = vector.load %arg11[%c0_9, %c0_10] : memref<128x128xf32, #tpu.memory_space<vmem>>, vector<128x128xf32>
    %20 = arith.mulf %14, %19 : vector<128x128xf32>
    %cst_11 = arith.constant dense<0.000000e+00> : vector<128xf32>
    %21 = vector.multi_reduction <add>, %18, %cst_11 [1] : vector<128x128xf32> to vector<128xf32>
    %22 = vector.shape_cast %21 : vector<128xf32> to vector<128x1xf32>
    %23 = vector.broadcast %22 : vector<128x1xf32> to vector<128x128xf32>
    %24 = arith.addf %20, %23 : vector<128x128xf32>
    %c0_12 = arith.constant 0 : index
    %c0_13 = arith.constant 0 : index
    %25 = vector.load %arg11[%c0_12, %c0_13] : memref<128x128xf32, #tpu.memory_space<vmem>>, vector<128x128xf32>
    tpu.vector_store %arg11[%c0_12, %c0_13], %24 {strides = array<i32>} : memref<128x128xf32, #tpu.memory_space<vmem>>, vector<128x128xf32>,
    %c0_14 = arith.constant 0 : index
    %c0_15 = arith.constant 0 : index
    %26 = vector.load %arg12[%c0_14, %c0_15] : memref<128x128xf32, #tpu.memory_space<vmem>>, vector<128x128xf32>
    %27 = arith.mulf %14, %26 : vector<128x128xf32>
    %28 = arith.truncf %18 : vector<128x128xf32> to vector<128x128xbf16>
    %c0_16 = arith.constant 0 : index
    %c0_17 = arith.constant 0 : index
    %c0_18 = arith.constant 0 : index
    %29 = vector.load %arg6[%c0_16, %c0_17, %c0_18] : memref<1x128x128xbf16, #tpu.memory_space<vmem>>, vector<1x128x128xbf16>
    %30 = vector.shape_cast %29 : vector<1x128x128xbf16> to vector<128x128xbf16>
    %cst_19 = arith.constant dense<0.000000e+00> : vector<128x128xf32>
    %31 = tpu.matmul %28, %30, %cst_19 {dimension_numbers = #tpu.dot_dimension_numbers<[1], [0], [0], [1], [0, 0, 1, 1], [], []>} : vector<128x128xbf16>, vector<128x128xbf16>, vector<128x128xf32> -> vector<128x128xf32>
    %32 = arith.addf %27, %31 : vector<128x128xf32>
    %c0_20 = arith.constant 0 : index
    %c0_21 = arith.constant 0 : index
    %33 = vector.load %arg12[%c0_20, %c0_21] : memref<128x128xf32, #tpu.memory_space<vmem>>, vector<128x128xf32>
    tpu.vector_store %arg12[%c0_20, %c0_21], %32 {strides = array<i32>} : memref<128x128xf32, #tpu.memory_space<vmem>>, vector<128x128xf32>,
    %c0_22 = arith.constant 0 : index
    %c0_23 = arith.constant 0 : index
    %34 = vector.load %arg10[%c0_22, %c0_23] : memref<128x128xf32, #tpu.memory_space<vmem>>, vector<128x128xf32>
    tpu.vector_store %arg10[%c0_22, %c0_23], %12 {strides = array<i32>} : memref<128x128xf32, #tpu.memory_space<vmem>>, vector<128x128xf32>,
    %c1_i32 = arith.constant 1 : i32
    %35 = arith.cmpi eq, %arg2, %c1_i32 : i32
    %36 = arith.extui %35 : i1 to i32
    %c0_i32_24 = arith.constant 0 : i32
    %37 = arith.cmpi ne, %36, %c0_i32_24 : i32
    scf.if %37 {
      %c0_25 = arith.constant 0 : index
      %c0_26 = arith.constant 0 : index
      %38 = vector.load %arg11[%c0_25, %c0_26] : memref<128x128xf32, #tpu.memory_space<vmem>>, vector<128x128xf32>
      %c0_27 = arith.constant 0 : index
      %c0_28 = arith.constant 0 : index
      %39 = vector.load %arg12[%c0_27, %c0_28] : memref<128x128xf32, #tpu.memory_space<vmem>>, vector<128x128xf32>
      %40 = arith.divf %39, %38 : vector<128x128xf32>
      %41 = arith.truncf %40 : vector<128x128xf32> to vector<128x128xbf16>
      %c0_29 = arith.constant 0 : index
      %c0_30 = arith.constant 0 : index
      %42 = vector.load %arg7[%c0_29, %c0_30] : memref<128x128xbf16, #tpu.memory_space<vmem>>, vector<128x128xbf16>
      %cst_31 = arith.constant dense<0.000000e+00> : vector<128x128xf32>
      %43 = tpu.matmul %41, %42, %cst_31 {dimension_numbers = #tpu.dot_dimension_numbers<[1], [0], [0], [1], [0, 0, 1, 1], [], []>} : vector<128x128xbf16>, vector<128x128xbf16>, vector<128x128xf32> -> vector<128x128xf32>
      %c0_32 = arith.constant 0 : index
      %c0_33 = arith.constant 0 : index
      %44 = vector.load %arg8[%c0_32, %c0_33] : memref<1x128xf32, #tpu.memory_space<vmem>>, vector<1x128xf32>
      %45 = vector.broadcast %44 : vector<1x128xf32> to vector<128x128xf32>
      %46 = arith.addf %43, %45 : vector<128x128xf32>
      %c0_34 = arith.constant 0 : index
      %c0_35 = arith.constant 0 : index
      %c0_36 = arith.constant 0 : index
      %47 = vector.load %arg3[%c0_34, %c0_35, %c0_36] : memref<1x128x128xf32, #tpu.memory_space<vmem>>, vector<1x128x128xf32>
      %48 = vector.shape_cast %47 : vector<1x128x128xf32> to vector<128x128xf32>
      %49 = arith.addf %48, %46 : vector<128x128xf32>
      %c0_37 = arith.constant 0 : index
      %c0_38 = arith.constant 0 : index
      %c0_39 = arith.constant 0 : index
      %50 = vector.load %arg9[%c0_37, %c0_38, %c0_39] : memref<1x128x128xf32, #tpu.memory_space<vmem>>, vector<1x128x128xf32>
      %51 = vector.shape_cast %50 : vector<1x128x128xf32> to vector<128x128xf32>
      %52 = vector.shape_cast %49 : vector<128x128xf32> to vector<1x128x128xf32>
      tpu.vector_store %arg9[%c0_37, %c0_38, %c0_39], %52 {strides = array<i32>} : memref<1x128x128xf32, #tpu.memory_space<vmem>>, vector<1x128x128xf32>,
    } else {
    }
    return
  }
  func.func @transform_0(%arg0: i32, %arg1: i32, %arg2: i32) -> (i32, i32, i32) {
    %c0_i32 = arith.constant 0 : i32
    %c0_i32_0 = arith.constant 0 : i32
    return %arg0, %arg1, %c0_i32 : i32, i32, i32
  }
  func.func @transform_1(%arg0: i32, %arg1: i32, %arg2: i32) -> (i32, i32, i32) {
    %c0_i32 = arith.constant 0 : i32
    %c0_i32_0 = arith.constant 0 : i32
    return %arg0, %arg1, %c0_i32 : i32, i32, i32
  }
  func.func @transform_2(%arg0: i32, %arg1: i32, %arg2: i32) -> (i32, i32, i32) {
    %c0_i32 = arith.constant 0 : i32
    %c0_i32_0 = arith.constant 0 : i32
    return %arg0, %arg2, %c0_i32 : i32, i32, i32
  }
  func.func @transform_3(%arg0: i32, %arg1: i32, %arg2: i32) -> (i32, i32, i32) {
    %c0_i32 = arith.constant 0 : i32
    %c0_i32_0 = arith.constant 0 : i32
    return %arg0, %arg2, %c0_i32 : i32, i32, i32
  }
  func.func @transform_4(%arg0: i32, %arg1: i32, %arg2: i32) -> (i32, i32) {
    %c0_i32 = arith.constant 0 : i32
    %c0_i32_0 = arith.constant 0 : i32
    %c0_i32_1 = arith.constant 0 : i32
    return %c0_i32, %c0_i32_0 : i32, i32
  }
  func.func @transform_5(%arg0: i32, %arg1: i32, %arg2: i32) -> (i32, i32) {
    %c0_i32 = arith.constant 0 : i32
    %c0_i32_0 = arith.constant 0 : i32
    %c0_i32_1 = arith.constant 0 : i32
    return %c0_i32, %c0_i32_0 : i32, i32
  }
  func.func @transform_6(%arg0: i32, %arg1: i32, %arg2: i32) -> (i32, i32, i32) {
    %c0_i32 = arith.constant 0 : i32
    %c0_i32_0 = arith.constant 0 : i32
    return %arg0, %arg1, %c0_i32 : i32, i32, i32
  }
}

</mosaic_0001>

<llo_original>
// kernel: attn_block.3
$region0: #{attn_block.3}
  #allocation0 [shape = 'u32[]', space=smem, size = 0x4, offset = 0x4, fixed_abs, tag = 'smem constant byte address 0x4 - core index']
  #allocation1 [shape = 'u32[144,128]{1,0:T(1,128)}', space=vmem, size = 0x12000, scoped, tag = 'internal scratch']
  #allocation2 [shape = 'f32[1,128]{1,0:T(1,128)}', space=vmem, size = 0x200, scoped, tag = 'scratch operand']
  #allocation3 [shape = 'f32[1,128]{1,0:T(1,128)}', space=vmem, size = 0x200, scoped, tag = 'scratch operand']
  %s0 = inlined_call_operand.vmem [shape: f32[2,256,128], index: 0, kind: input, shape index: {}]
  %s1 = inlined_call_operand.vmem [shape: f32[1,128], index: 1, kind: input, shape index: {}]
  %s2 = inlined_call_operand.vmem [shape: f32[1,128], index: 2, kind: input, shape index: {}]
  %s3 = inlined_call_operand.vmem [shape: f32[128,32], index: 3, kind: input, shape index: {}]
  %s4 = inlined_call_operand.vmem [shape: f32[32,128], index: 4, kind: input, shape index: {}]
  %s5 = inlined_call_operand.vmem [shape: f32[2,2,128], index: 5, kind: output, shape index: {}]
  %s6 = sld [smem:[#allocation0]]
  $region61: #{attn_block.3} parent=0
    _
  %s8 = ssub.s32 1, %s6
  %s9 = scalar_select 0, %s8, %s6
  loop: start=0, step=1, limit=6
  $region2: #{attn_block.3} parent=0 // loop_pre_header
    _
  $region3: #{attn_block.3} parent=0 // loop_header
    %s11 = sphi 0, %s15
    %p12 = scmp.ge.s32.totalorder %s11, 6
    %s18 = sphi 0, %s30
    %s19 = sphi 0, %s26
    %s20 = sphi 0, %s18
    %s21 = sphi 0, %s19
    %s22 = sphi 0, %s20
    %s23 = sphi 0, %s21
    %s35 = sphi 0, %s37
    %s38 = sphi 0, %s35
    %s39 = sphi 0, %s38
    %s55 = sphi 0, %s39
    %s59 = sphi 0, %s59
    %s61 = sphi 0, %s59
    %s62 = sphi 0, %s61
    %s76 = sphi 0, %s62
    %s80 = sphi 0, %s80
    %s82 = sphi 0, %s80
    %s83 = sphi 0, %s82
    %s97 = sphi 0, %s83
    %s101 = sphi 0, %s101
    %s103 = sphi 0, %s101
    %s104 = sphi 0, %s103
    %s118 = sphi 0, %s104
    %s122 = sphi 0, %s122
    %s124 = sphi 0, %s122
    %s125 = sphi 0, %s124
    %s139 = sphi 0, %s125
    %s145 = sphi 0, %s147
    %s148 = sphi 0, %s145
    %s149 = sphi 0, %s148
    %s165 = sphi 0, %s149
  $region4: #{attn_block.3} parent=0 // loop_header_branch
    %14 = sbr.rel (%p12) target = $region8
  $region5: #{attn_block.3} parent=0 // loop_body
    %s16 = ssub.s32 %s11, 1
    %s17 = ssub.s32 %s11, 2
    %s24 = sadd.s32 1, %s19
    %p25 = scmp.ge.s32.totalorder %s24, 2
    %s26 = scalar_select %p25, 0, %s24
    %s27 = sadd.s32 1, %s18
    %s28 = scalar_select %p25, %s27, %s18
    %p29 = scmp.ge.s32.totalorder %s28, 2
    %s30 = scalar_select %p29, 0, %s28
    %s31 = ssub.s32 %s18, %s30
    %s32 = ssub.s32 %s19, %s26
    %s33 = sor.u32 %s31, %s32
    %p34 = scmp.eq.s32.totalorder %s33, 0
    %s36 = sadd.s32 %s35, 1
    %s37 = scalar_select %p34, %s35, %s36
    %p40 = pneg %p34
    %p41 = scmp.eq.s32.totalorder %s11, 3
    %p42 = por %p40, %p41
    %p43 = scmp.ne.s32.totalorder %s35, %s38
    %p44 = scmp.eq.s32.totalorder %s11, 0
    %p45 = por %p43, %p44
    %p46 = scmp.ne.s32.totalorder %s35, %s38
    %p47 = scmp.eq.s32.totalorder %s16, 3
    %p48 = por %p46, %p47
    %p49 = scmp.ne.s32.totalorder %s38, %s39
    %p50 = scmp.eq.s32.totalorder %s16, 0
    %p51 = por %p49, %p50
    %p52 = scmp.ne.s32.totalorder %s38, %s39
    %p53 = scmp.eq.s32.totalorder %s17, 3
    %p54 = por %p52, %p53
    %p56 = scmp.ne.s32.totalorder %s39, %s55
    %p57 = scmp.eq.s32.totalorder %s17, 0
    %p58 = por %p56, %p57
    %s60 = sadd.s32 %s59, 1
    %p63 = scmp.eq.s32.totalorder %s11, 3
    %p64 = scmp.ne.s32.totalorder %s59, %s61
    %p65 = scmp.eq.s32.totalorder %s11, 0
    %p66 = por %p64, %p65
    %p67 = scmp.ne.s32.totalorder %s59, %s61
    %p68 = scmp.eq.s32.totalorder %s16, 3
    %p69 = por %p67, %p68
    %p70 = scmp.ne.s32.totalorder %s61, %s62
    %p71 = scmp.eq.s32.totalorder %s16, 0
    %p72 = por %p70, %p71
    %p73 = scmp.ne.s32.totalorder %s61, %s62
    %p74 = scmp.eq.s32.totalorder %s17, 3
    %p75 = por %p73, %p74
    %p77 = scmp.ne.s32.totalorder %s62, %s76
    %p78 = scmp.eq.s32.totalorder %s17, 0
    %p79 = por %p77, %p78
    %s81 = sadd.s32 %s80, 1
    %p84 = scmp.eq.s32.totalorder %s11, 3
    %p85 = scmp.ne.s32.totalorder %s80, %s82
    %p86 = scmp.eq.s32.totalorder %s11, 0
    %p87 = por %p85, %p86
    %p88 = scmp.ne.s32.totalorder %s80, %s82
    %p89 = scmp.eq.s32.totalorder %s16, 3
    %p90 = por %p88, %p89
    %p91 = scmp.ne.s32.totalorder %s82, %s83
    %p92 = scmp.eq.s32.totalorder %s16, 0
    %p93 = por %p91, %p92
    %p94 = scmp.ne.s32.totalorder %s82, %s83
    %p95 = scmp.eq.s32.totalorder %s17, 3
    %p96 = por %p94, %p95
    %p98 = scmp.ne.s32.totalorder %s83, %s97
    %p99 = scmp.eq.s32.totalorder %s17, 0
    %p100 = por %p98, %p99
    %s102 = sadd.s32 %s101, 1
    %p105 = scmp.eq.s32.totalorder %s11, 3
    %p106 = scmp.ne.s32.totalorder %s101, %s103
    %p107 = scmp.eq.s32.totalorder %s11, 0
    %p108 = por %p106, %p107
    %p109 = scmp.ne.s32.totalorder %s101, %s103
    %p110 = scmp.eq.s32.totalorder %s16, 3
    %p111 = por %p109, %p110
    %p112 = scmp.ne.s32.totalorder %s103, %s104
    %p113 = scmp.eq.s32.totalorder %s16, 0
    %p114 = por %p112, %p113
    %p115 = scmp.ne.s32.totalorder %s103, %s104
    %p116 = scmp.eq.s32.totalorder %s17, 3
    %p117 = por %p115, %p116
    %p119 = scmp.ne.s32.totalorder %s104, %s118
    %p120 = scmp.eq.s32.totalorder %s17, 0
    %p121 = por %p119, %p120
    %s123 = sadd.s32 %s122, 1
    %p126 = scmp.eq.s32.totalorder %s11, 3
    %p127 = scmp.ne.s32.totalorder %s122, %s124
    %p128 = scmp.eq.s32.totalorder %s11, 0
    %p129 = por %p127, %p128
    %p130 = scmp.ne.s32.totalorder %s122, %s124
    %p131 = scmp.eq.s32.totalorder %s16, 3
    %p132 = por %p130, %p131
    %p133 = scmp.ne.s32.totalorder %s124, %s125
    %p134 = scmp.eq.s32.totalorder %s16, 0
    %p135 = por %p133, %p134
    %p136 = scmp.ne.s32.totalorder %s124, %s125
    %p137 = scmp.eq.s32.totalorder %s17, 3
    %p138 = por %p136, %p137
    %p140 = scmp.ne.s32.totalorder %s125, %s139
    %p141 = scmp.eq.s32.totalorder %s17, 0
    %p142 = por %p140, %p141
    %s143 = ssub.s32 %s18, %s30
    %p144 = scmp.eq.s32.totalorder %s143, 0
    %s146 = sadd.s32 %s145, 1
    %s147 = scalar_select %p144, %s145, %s146
    %p150 = pneg %p144
    %p151 = scmp.eq.s32.totalorder %s11, 3
    %p152 = por %p150, %p151
    %p153 = scmp.ne.s32.totalorder %s145, %s148
    %p154 = scmp.eq.s32.totalorder %s11, 0
    %p155 = por %p153, %p154
    %p156 = scmp.ne.s32.totalorder %s145, %s148
    %p157 = scmp.eq.s32.totalorder %s16, 3
    %p158 = por %p156, %p157
    %p159 = scmp.ne.s32.totalorder %s148, %s149
    %p160 = scmp.eq.s32.totalorder %s16, 0
    %p161 = por %p159, %p160
    %p162 = scmp.ne.s32.totalorder %s148, %s149
    %p163 = scmp.eq.s32.totalorder %s17, 3
    %p164 = por %p162, %p163
    %p166 = scmp.ne.s32.totalorder %s149, %s165
    %p167 = scmp.eq.s32.totalorder %s17, 0
    %p168 = por %p166, %p167
    %p169 = scmp.le.s32.totalorder 1, %s11
    %p170 = scmp.lt.s32.totalorder %s11, 5
    %p171 = pnand %p169, %p170
    %p172 = pneg %p171
    // Predicated region
    $region9: #{attn_block.3} parent=5 // pred_check
      _
    $region10: #{attn_block.3} parent=5 // pred_check_branch
      %174 = sbr.rel (%p171) target = $region12
    $region11: #{attn_block.3} parent=5 // pred_region
      %s175 = ssub.s32 %s11, 1
      // Predicated region
      $region13: #{attn_block.3} parent=11 // pred_check
        %p176 = pneg %p72
      $region14: #{attn_block.3} parent=11 // pred_check_branch
        %178 = sbr.rel (%p176) target = $region16
      $region15: #{attn_block.3} parent=11 // pred_region
        _
      $region16: #{attn_block.3} parent=11 // pred_fallthru
        _
      // Predicated region
      $region17: #{attn_block.3} parent=11 // pred_check
        %p179 = pneg %p93
      $region18: #{attn_block.3} parent=11 // pred_check_branch
        %181 = sbr.rel (%p179) target = $region20
      $region19: #{attn_block.3} parent=11 // pred_region
        _
      $region20: #{attn_block.3} parent=11 // pred_fallthru
        _
      // Predicated region
      $region21: #{attn_block.3} parent=11 // pred_check
        %p182 = pneg %p114
      $region22: #{attn_block.3} parent=11 // pred_check_branch
        %184 = sbr.rel (%p182) target = $region24
      $region23: #{attn_block.3} parent=11 // pred_region
        _
      $region24: #{attn_block.3} parent=11 // pred_fallthru
        _
      // Predicated region
      $region25: #{attn_block.3} parent=11 // pred_check
        %p185 = pneg %p135
      $region26: #{attn_block.3} parent=11 // pred_check_branch
        %187 = sbr.rel (%p185) target = $region28
      $region27: #{attn_block.3} parent=11 // pred_region
        _
      $region28: #{attn_block.3} parent=11 // pred_fallthru
        _
    $region12: #{attn_block.3} parent=5 // pred_fallthru
      _
    %p188 = scmp.lt.s32.totalorder %s11, 4
    // Predicated region
    $region29: #{attn_block.3} parent=5 // pred_check
      %p189 = pneg %p188
    $region30: #{attn_block.3} parent=5 // pred_check_branch
      %191 = sbr.rel (%p189) target = $region32
    $region31: #{attn_block.3} parent=5 // pred_region
      // Predicated region
      $region33: #{attn_block.3} parent=31 // pred_check
        %p192 = pneg %p45
      $region34: #{attn_block.3} parent=31 // pred_check_branch
        %194 = sbr.rel (%p192) target = $region36
      $region35: #{attn_block.3} parent=31 // pred_region
        %s195 = smul.u32 16, %s19
        %p196 = scmp.lt.s32.totalorder %s18, 1
        %s197 = scalar_select %p196, %s18, 1
        %p198 = scmp.lt.s32.totalorder %s195, 31
        %s199 = scalar_select %p198, %s195, 31
        %s200 = smul.addr %s197, 32
        %s201 = sadd.s32 %s199, %s200
        %s202 = smul.addr %s201, 8
        %s203 = scalar_lea.vmem %s0, %s202
        %s204 = smul.u32 16, %s19
      $region36: #{attn_block.3} parent=31 // pred_fallthru
        _
    $region32: #{attn_block.3} parent=5 // pred_fallthru
      _
    %p205 = scmp.le.s32.totalorder 1, %s11
    %p206 = scmp.lt.s32.totalorder %s11, 5
    %p207 = pnand %p205, %p206
    %p208 = pneg %p207
    // Predicated region
    $region37: #{attn_block.3} parent=5 // pred_check
      _
    $region38: #{attn_block.3} parent=5 // pred_check_branch
      %210 = sbr.rel (%p207) target = $region40
    $region39: #{attn_block.3} parent=5 // pred_region
      %s211 = ssub.s32 %s11, 1
      %s212 = smul.u32 16, %s21
      %p213 = scmp.lt.s32.totalorder %s20, 1
      %s214 = scalar_select %p213, %s20, 1
      %p215 = scmp.lt.s32.totalorder %s212, 31
      %s216 = scalar_select %p215, %s212, 31
      %s217 = smul.addr %s214, 32
      %s218 = sadd.s32 %s216, %s217
      %s219 = smul.addr %s218, 8
      %s220 = scalar_lea.vmem %s0, %s219
      %p221 = pneg %p51
      %p222 = pneg %p48
      %p223 = pneg %p72
      %p224 = pneg %p69
      %p225 = pneg %p93
      %p226 = pneg %p90
      %p227 = pneg %p114
      %p228 = pneg %p111
      %p229 = pneg %p135
      %p230 = pneg %p132
      %p231 = pneg %p161
      %p232 = pneg %p158
      %p233 = scmp.lt.s32.totalorder %s20, 1
      %s234 = scalar_select %p233, %s20, 1
      %s235 = smul.addr %s234, 2
      %s236 = scalar_lea.vmem %s5, %s235
      %s237 = smul.u32 16, %s21
      %p238 = scmp.lt.s32.totalorder %s20, 1
      %s239 = scalar_select %p238, %s20, 1
      %p240 = scmp.lt.s32.totalorder %s237, 31
      %s241 = scalar_select %p240, %s237, 31
      %s242 = smul.addr %s239, 32
      %s243 = sadd.s32 %s241, %s242
      %s244 = smul.addr %s243, 8
      %s245 = scalar_lea.vmem %s0, %s244
      %s246 = smul.u32 16, %s21
      %p247 = scmp.lt.s32.totalorder %s20, 1
      %s248 = scalar_select %p247, %s20, 1
      %s249 = smul.addr %s248, 2
      %s250 = scalar_lea.vmem %s5, %s249
      %p251 = scmp.eq.s32.totalorder %s21, 0
      // Predicated region
      $region41: #{attn_block.3} parent=39 // pred_check
        %p252 = pneg %p251
      $region42: #{attn_block.3} parent=39 // pred_check_branch
        %254 = sbr.rel (%p252) target = $region44
      $region43: #{attn_block.3} parent=39 // pred_region
        %255 = vst [vmem:[#allocation2] sm:$0x1] 0.0
        %256 = vst [vmem:[#allocation3] sm:$0x1] 0.0
      $region44: #{attn_block.3} parent=39 // pred_fallthru
        _
      %v257 = vld [vmem:[%s245] sm:$0xff]
      %v258 = vld [vmem:[%s245 + $0x8] sm:$0xff]
      %v259 = vld [vmem:[%s245 + $0x10] sm:$0xff]
      %v260 = vld [vmem:[%s245 + $0x18] sm:$0xff]
      %v261 = vld [vmem:[%s245 + $0x20] sm:$0xff]
      %v262 = vld [vmem:[%s245 + $0x28] sm:$0xff]
      %v263 = vld [vmem:[%s245 + $0x30] sm:$0xff]
      %v264 = vld [vmem:[%s245 + $0x38] sm:$0xff]
      %v265 = vld [vmem:[%s245 + $0x40] sm:$0xff]
      %v266 = vld [vmem:[%s245 + $0x48] sm:$0xff]
      %v267 = vld [vmem:[%s245 + $0x50] sm:$0xff]
      %v268 = vld [vmem:[%s245 + $0x58] sm:$0xff]
      %v269 = vld [vmem:[%s245 + $0x60] sm:$0xff]
      %v270 = vld [vmem:[%s245 + $0x68] sm:$0xff]
      %v271 = vld [vmem:[%s245 + $0x70] sm:$0xff]
      %v272 = vld [vmem:[%s245 + $0x78] sm:$0xff]
      %v273 = vld [vmem:[#allocation2] sm:$0x1]
      %v274 = vadd.f32 %v257, %v258
      %v275 = vadd.f32 %v274, %v259
      %v276 = vadd.f32 %v275, %v260
      %v277 = vadd.f32 %v276, %v261
      %v278 = vadd.f32 %v277, %v262
      %v279 = vadd.f32 %v278, %v263
      %v280 = vadd.f32 %v279, %v264
      %v281 = vadd.f32 %v280, %v265
      %v282 = vadd.f32 %v281, %v266
      %v283 = vadd.f32 %v282, %v267
      %v284 = vadd.f32 %v283, %v268
      %v285 = vadd.f32 %v284, %v269
      %v286 = vadd.f32 %v285, %v270
      %v287 = vadd.f32 %v286, %v271
      %v288 = vadd.f32 %v287, %v272
      %v289 = vrot.slane %v288, 4
      %v290 = vadd.f32 %v288, %v289
      %v291 = vrot.slane %v290, 2
      %v292 = vadd.f32 %v290, %v291
      %v293 = vrot.slane %v292, 1
      %v294 = vadd.f32 %v292, %v293
      %v295 = vadd.f32 %v273, %v294
      %296 = vst [vmem:[#allocation2] sm:$0x1] %v295
      %v297 = vld [vmem:[#allocation3] sm:$0x1]
      %v298 = vmul.f32 %v257, %v257
      %v299 = vmul.f32 %v258, %v258
      %v300 = vmul.f32 %v259, %v259
      %v301 = vmul.f32 %v260, %v260
      %v302 = vmul.f32 %v261, %v261
      %v303 = vmul.f32 %v262, %v262
      %v304 = vmul.f32 %v263, %v263
      %v305 = vmul.f32 %v264, %v264
      %v306 = vmul.f32 %v265, %v265
      %v307 = vmul.f32 %v266, %v266
      %v308 = vmul.f32 %v267, %v267
      %v309 = vmul.f32 %v268, %v268
      %v310 = vmul.f32 %v269, %v269
      %v311 = vmul.f32 %v270, %v270
      %v312 = vmul.f32 %v271, %v271
      %v313 = vmul.f32 %v272, %v272
      %v314 = vadd.f32 %v298, %v299
      %v315 = vadd.f32 %v314, %v300
      %v316 = vadd.f32 %v315, %v301
      %v317 = vadd.f32 %v316, %v302
      %v318 = vadd.f32 %v317, %v303
      %v319 = vadd.f32 %v318, %v304
      %v320 = vadd.f32 %v319, %v305
      %v321 = vadd.f32 %v320, %v306
      %v322 = vadd.f32 %v321, %v307
      %v323 = vadd.f32 %v322, %v308
      %v324 = vadd.f32 %v323, %v309
      %v325 = vadd.f32 %v324, %v310
      %v326 = vadd.f32 %v325, %v311
      %v327 = vadd.f32 %v326, %v312
      %v328 = vadd.f32 %v327, %v313
      %v329 = vrot.slane %v328, 4
      %v330 = vadd.f32 %v328, %v329
      %v331 = vrot.slane %v330, 2
      %v332 = vadd.f32 %v330, %v331
      %v333 = vrot.slane %v332, 1
      %v334 = vadd.f32 %v332, %v333
      %v335 = vadd.f32 %v297, %v334
      %336 = vst [vmem:[#allocation3] sm:$0x1] %v335
      %p337 = scmp.eq.s32.totalorder %s21, 1
      // Predicated region
      $region45: #{attn_block.3} parent=39 // pred_check
        %p338 = pneg %p337
      $region46: #{attn_block.3} parent=39 // pred_check_branch
        %340 = sbr.rel (%p338) target = $region48
      $region47: #{attn_block.3} parent=39 // pred_region
        %v341 = vld [vmem:[#allocation2] sm:$0x1]
        %v342 = vld [vmem:[%s3] sm:$0xff]
        %v343 = vld [vmem:[%s3 + $0x8] sm:$0xff]
        %v344 = vld [vmem:[%s3 + $0x10] sm:$0xff]
        %v345 = vld [vmem:[%s3 + $0x18] sm:$0xff]
        %v346 = vld [vmem:[%s3 + $0x20] sm:$0xff]
        %v347 = vld [vmem:[%s3 + $0x28] sm:$0xff]
        %v348 = vld [vmem:[%s3 + $0x30] sm:$0xff]
        %v349 = vld [vmem:[%s3 + $0x38] sm:$0xff]
        %v350 = vld [vmem:[%s3 + $0x40] sm:$0xff]
        %v351 = vld [vmem:[%s3 + $0x48] sm:$0xff]
        %v352 = vld [vmem:[%s3 + $0x50] sm:$0xff]
        %v353 = vld [vmem:[%s3 + $0x58] sm:$0xff]
        %v354 = vld [vmem:[%s3 + $0x60] sm:$0xff]
        %v355 = vld [vmem:[%s3 + $0x68] sm:$0xff]
        %v356 = vld [vmem:[%s3 + $0x70] sm:$0xff]
        %v357 = vld [vmem:[%s3 + $0x78] sm:$0xff]
        %358 = vmatprep.subr.mxu0 0.0
        %359 = vmatpush1.msra.mxu0 %v342
        %360 = vmatprep.subr.mxu0 0.0
        %361 = vmatpush1.msra.mxu0 %v343
        %362 = vmatprep.subr.mxu0 0.0
        %363 = vmatpush1.msra.mxu0 %v344
        %364 = vmatprep.subr.mxu0 0.0
        %365 = vmatpush1.msra.mxu0 %v345
        %366 = vmatprep.subr.mxu0 0.0
        %367 = vmatpush1.msra.mxu0 %v346
        %368 = vmatprep.subr.mxu0 0.0
        %369 = vmatpush1.msra.mxu0 %v347
        %370 = vmatprep.subr.mxu0 0.0
        %371 = vmatpush1.msra.mxu0 %v348
        %372 = vmatprep.subr.mxu0 0.0
        %373 = vmatpush1.msra.mxu0 %v349
        %374 = vmatprep.subr.mxu0 0.0
        %375 = vmatpush1.msra.mxu0 %v350
        %376 = vmatprep.subr.mxu0 0.0
        %377 = vmatpush1.msra.mxu0 %v351
        %378 = vmatprep.subr.mxu0 0.0
        %379 = vmatpush1.msra.mxu0 %v352
        %380 = vmatprep.subr.mxu0 0.0
        %381 = vmatpush1.msra.mxu0 %v353
        %382 = vmatprep.subr.mxu0 0.0
        %383 = vmatpush1.msra.mxu0 %v354
        %384 = vmatprep.subr.mxu0 0.0
        %385 = vmatpush1.msra.mxu0 %v355
        %386 = vmatprep.subr.mxu0 0.0
        %387 = vmatpush1.msra.mxu0 %v356
        %388 = vmatprep.subr.mxu0 0.0
        %389 = vmatpush1.msra.mxu0 %v357
        %390 = vmatprep.subr.mxu0 0.0
        %391 = vmatpush1.msra.mxu0 0.0
        %392 = vmatprep.subr.mxu0 0.0
        %393 = vmatpush1.msra.mxu0 0.0
        %394 = vmatprep.subr.mxu0 0.0
        %395 = vmatpush1.msra.mxu0 0.0
        %396 = vmatprep.subr.mxu0 0.0
        %397 = vmatpush1.msra.mxu0 0.0
        %398 = vmatprep.subr.mxu0 0.0
        %399 = vmatpush1.msra.mxu0 0.0
        %400 = vmatprep.subr.mxu0 0.0
        %401 = vmatpush1.msra.mxu0 0.0
        %402 = vmatprep.subr.mxu0 0.0
        %403 = vmatpush1.msra.mxu0 0.0
        %404 = vmatprep.subr.mxu0 0.0
        %405 = vmatpush1.msra.mxu0 0.0
        %406 = vmatprep.subr.mxu0 0.0
        %407 = vmatpush1.msra.mxu0 0.0
        %408 = vmatprep.subr.mxu0 0.0
        %409 = vmatpush1.msra.mxu0 0.0
        %410 = vmatprep.subr.mxu0 0.0
        %411 = vmatpush1.msra.mxu0 0.0
        %412 = vmatprep.subr.mxu0 0.0
        %413 = vmatpush1.msra.mxu0 0.0
        %414 = vmatprep.subr.mxu0 0.0
        %415 = vmatpush1.msra.mxu0 0.0
        %416 = vmatprep.subr.mxu0 0.0
        %417 = vmatpush1.msra.mxu0 0.0
        %418 = vmatprep.subr.mxu0 0.0
        %419 = vmatpush1.msra.mxu0 0.0
        %420 = vmatprep.subr.mxu0 0.0
        %421 = vmatpush1.msra.mxu0 0.0
        %422 = vmatprep.mubr.f32.mxu0 0.0
        %423 = vmatmul.mubr.f32.gmra.mrb[0].mxu0 %v341
        %v424 = vpop.f32.mrb[0].mxu0
        %v425 = vadd.f32 0.0, %v424
        %v426 = vpop.f32.mrb[0].mxu0
        %427 = vdwg.mxu0
        %v428 = vld [vmem:[#allocation3] sm:$0x1]
        %429 = vmatprep.subr.mxu0 0.0
        %430 = vmatpush1.msra.mxu0 %v342
        %431 = vmatprep.subr.mxu0 0.0
        %432 = vmatpush1.msra.mxu0 %v343
        %433 = vmatprep.subr.mxu0 0.0
        %434 = vmatpush1.msra.mxu0 %v344
        %435 = vmatprep.subr.mxu0 0.0
        %436 = vmatpush1.msra.mxu0 %v345
        %437 = vmatprep.subr.mxu0 0.0
        %438 = vmatpush1.msra.mxu0 %v346
        %439 = vmatprep.subr.mxu0 0.0
        %440 = vmatpush1.msra.mxu0 %v347
        %441 = vmatprep.subr.mxu0 0.0
        %442 = vmatpush1.msra.mxu0 %v348
        %443 = vmatprep.subr.mxu0 0.0
        %444 = vmatpush1.msra.mxu0 %v349
        %445 = vmatprep.subr.mxu0 0.0
        %446 = vmatpush1.msra.mxu0 %v350
        %447 = vmatprep.subr.mxu0 0.0
        %448 = vmatpush1.msra.mxu0 %v351
        %449 = vmatprep.subr.mxu0 0.0
        %450 = vmatpush1.msra.mxu0 %v352
        %451 = vmatprep.subr.mxu0 0.0
        %452 = vmatpush1.msra.mxu0 %v353
        %453 = vmatprep.subr.mxu0 0.0
        %454 = vmatpush1.msra.mxu0 %v354
        %455 = vmatprep.subr.mxu0 0.0
        %456 = vmatpush1.msra.mxu0 %v355
        %457 = vmatprep.subr.mxu0 0.0
        %458 = vmatpush1.msra.mxu0 %v356
        %459 = vmatprep.subr.mxu0 0.0
        %460 = vmatpush1.msra.mxu0 %v357
        %461 = vmatprep.subr.mxu0 0.0
        %462 = vmatpush1.msra.mxu0 0.0
        %463 = vmatprep.subr.mxu0 0.0
        %464 = vmatpush1.msra.mxu0 0.0
        %465 = vmatprep.subr.mxu0 0.0
        %466 = vmatpush1.msra.mxu0 0.0
        %467 = vmatprep.subr.mxu0 0.0
        %468 = vmatpush1.msra.mxu0 0.0
        %469 = vmatprep.subr.mxu0 0.0
        %470 = vmatpush1.msra.mxu0 0.0
        %471 = vmatprep.subr.mxu0 0.0
        %472 = vmatpush1.msra.mxu0 0.0
        %473 = vmatprep.subr.mxu0 0.0
        %474 = vmatpush1.msra.mxu0 0.0
        %475 = vmatprep.subr.mxu0 0.0
        %476 = vmatpush1.msra.mxu0 0.0
        %477 = vmatprep.subr.mxu0 0.0
        %478 = vmatpush1.msra.mxu0 0.0
        %479 = vmatprep.subr.mxu0 0.0
        %480 = vmatpush1.msra.mxu0 0.0
        %481 = vmatprep.subr.mxu0 0.0
        %482 = vmatpush1.msra.mxu0 0.0
        %483 = vmatprep.subr.mxu0 0.0
        %484 = vmatpush1.msra.mxu0 0.0
        %485 = vmatprep.subr.mxu0 0.0
        %486 = vmatpush1.msra.mxu0 0.0
        %487 = vmatprep.subr.mxu0 0.0
        %488 = vmatpush1.msra.mxu0 0.0
        %489 = vmatprep.subr.mxu0 0.0
        %490 = vmatpush1.msra.mxu0 0.0
        %491 = vmatprep.subr.mxu0 0.0
        %492 = vmatpush1.msra.mxu0 0.0
        %493 = vmatprep.mubr.f32.mxu0 0.0
        %494 = vmatmul.mubr.f32.gmra.mrb[0].mxu0 %v428
        %v495 = vpop.f32.mrb[0].mxu0
        %v496 = vadd.f32 0.0, %v495
        %v497 = vpop.f32.mrb[0].mxu0
        %498 = vdwg.mxu0
        %v499 = vmul.f32 %v425, 0.001953125
        %v500 = vmul.f32 %v496, 0.001953125
        %v501 = vmul.f32 %v499, %v499
        %v502 = vsub.f32 %v500, %v501
        %v503 = vmax.f32 %v502, 0.0
        %v504 = vadd.f32 %v503, 1e-06
        %v505 = vrsqrt.pop %v504
        %v506 = vld [vmem:[%s4] sm:$0xff]
        %v507 = vld [vmem:[%s4 + $0x8] sm:$0xff]
        %v508 = vld [vmem:[%s4 + $0x10] sm:$0xff]
        %v509 = vld [vmem:[%s4 + $0x18] sm:$0xff]
        %vm510 = vcmask 261120
        %v512 = vsel %vm510, %v499, 0
        %514 = vmatprep.subr.mxu0 0.0
        %515 = vmatpush1.msra.mxu0 %v506
        %516 = vmatprep.subr.mxu0 0.0
        %517 = vmatpush1.msra.mxu0 %v507
        %518 = vmatprep.subr.mxu0 0.0
        %519 = vmatpush1.msra.mxu0 %v508
        %520 = vmatprep.subr.mxu0 0.0
        %521 = vmatpush1.msra.mxu0 %v509
        %522 = vmatprep.subr.mxu0 0.0
        %523 = vmatpush1.msra.mxu0 0.0
        %524 = vmatprep.subr.mxu0 0.0
        %525 = vmatpush1.msra.mxu0 0.0
        %526 = vmatprep.subr.mxu0 0.0
        %527 = vmatpush1.msra.mxu0 0.0
        %528 = vmatprep.subr.mxu0 0.0
        %529 = vmatpush1.msra.mxu0 0.0
        %530 = vmatprep.subr.mxu0 0.0
        %531 = vmatpush1.msra.mxu0 0.0
        %532 = vmatprep.subr.mxu0 0.0
        %533 = vmatpush1.msra.mxu0 0.0
        %534 = vmatprep.subr.mxu0 0.0
        %535 = vmatpush1.msra.mxu0 0.0
        %536 = vmatprep.subr.mxu0 0.0
        %537 = vmatpush1.msra.mxu0 0.0
        %538 = vmatprep.subr.mxu0 0.0
        %539 = vmatpush1.msra.mxu0 0.0
        %540 = vmatprep.subr.mxu0 0.0
        %541 = vmatpush1.msra.mxu0 0.0
        %542 = vmatprep.subr.mxu0 0.0
        %543 = vmatpush1.msra.mxu0 0.0
        %544 = vmatprep.subr.mxu0 0.0
        %545 = vmatpush1.msra.mxu0 0.0
        %546 = vmatprep.subr.mxu0 0.0
        %547 = vmatpush1.msra.mxu0 0.0
        %548 = vmatprep.subr.mxu0 0.0
        %549 = vmatpush1.msra.mxu0 0.0
        %550 = vmatprep.subr.mxu0 0.0
        %551 = vmatpush1.msra.mxu0 0.0
        %552 = vmatprep.subr.mxu0 0.0
        %553 = vmatpush1.msra.mxu0 0.0
        %554 = vmatprep.subr.mxu0 0.0
        %555 = vmatpush1.msra.mxu0 0.0
        %556 = vmatprep.subr.mxu0 0.0
        %557 = vmatpush1.msra.mxu0 0.0
        %558 = vmatprep.subr.mxu0 0.0
        %559 = vmatpush1.msra.mxu0 0.0
        %560 = vmatprep.subr.mxu0 0.0
        %561 = vmatpush1.msra.mxu0 0.0
        %562 = vmatprep.subr.mxu0 0.0
        %563 = vmatpush1.msra.mxu0 0.0
        %564 = vmatprep.subr.mxu0 0.0
        %565 = vmatpush1.msra.mxu0 0.0
        %566 = vmatprep.subr.mxu0 0.0
        %567 = vmatpush1.msra.mxu0 0.0
        %568 = vmatprep.subr.mxu0 0.0
        %569 = vmatpush1.msra.mxu0 0.0
        %570 = vmatprep.subr.mxu0 0.0
        %571 = vmatpush1.msra.mxu0 0.0
        %572 = vmatprep.subr.mxu0 0.0
        %573 = vmatpush1.msra.mxu0 0.0
        %574 = vmatprep.subr.mxu0 0.0
        %575 = vmatpush1.msra.mxu0 0.0
        %576 = vmatprep.subr.mxu0 0.0
        %577 = vmatpush1.msra.mxu0 0.0
        %578 = vmatprep.mubr.f32.mxu0 0.0
        %579 = vmatmul.mubr.f32.gmra.mrb[0].mxu0 %v512
        %v580 = vpop.f32.mrb[0].mxu0
        %v581 = vadd.f32 0.0, %v580
        %v582 = vpop.f32.mrb[0].mxu0
        %583 = vdwg.mxu0
        %v585 = vsel %vm510, %v505, 0
        %587 = vmatprep.subr.mxu0 0.0
        %588 = vmatpush1.msra.mxu0 %v506
        %589 = vmatprep.subr.mxu0 0.0
        %590 = vmatpush1.msra.mxu0 %v507
        %591 = vmatprep.subr.mxu0 0.0
        %592 = vmatpush1.msra.mxu0 %v508
        %593 = vmatprep.subr.mxu0 0.0
        %594 = vmatpush1.msra.mxu0 %v509
        %595 = vmatprep.subr.mxu0 0.0
        %596 = vmatpush1.msra.mxu0 0.0
        %597 = vmatprep.subr.mxu0 0.0
        %598 = vmatpush1.msra.mxu0 0.0
        %599 = vmatprep.subr.mxu0 0.0
        %600 = vmatpush1.msra.mxu0 0.0
        %601 = vmatprep.subr.mxu0 0.0
        %602 = vmatpush1.msra.mxu0 0.0
        %603 = vmatprep.subr.mxu0 0.0
        %604 = vmatpush1.msra.mxu0 0.0
        %605 = vmatprep.subr.mxu0 0.0
        %606 = vmatpush1.msra.mxu0 0.0
        %607 = vmatprep.subr.mxu0 0.0
        %608 = vmatpush1.msra.mxu0 0.0
        %609 = vmatprep.subr.mxu0 0.0
        %610 = vmatpush1.msra.mxu0 0.0
        %611 = vmatprep.subr.mxu0 0.0
        %612 = vmatpush1.msra.mxu0 0.0
        %613 = vmatprep.subr.mxu0 0.0
        %614 = vmatpush1.msra.mxu0 0.0
        %615 = vmatprep.subr.mxu0 0.0
        %616 = vmatpush1.msra.mxu0 0.0
        %617 = vmatprep.subr.mxu0 0.0
        %618 = vmatpush1.msra.mxu0 0.0
        %619 = vmatprep.subr.mxu0 0.0
        %620 = vmatpush1.msra.mxu0 0.0
        %621 = vmatprep.subr.mxu0 0.0
        %622 = vmatpush1.msra.mxu0 0.0
        %623 = vmatprep.subr.mxu0 0.0
        %624 = vmatpush1.msra.mxu0 0.0
        %625 = vmatprep.subr.mxu0 0.0
        %626 = vmatpush1.msra.mxu0 0.0
        %627 = vmatprep.subr.mxu0 0.0
        %628 = vmatpush1.msra.mxu0 0.0
        %629 = vmatprep.subr.mxu0 0.0
        %630 = vmatpush1.msra.mxu0 0.0
        %631 = vmatprep.subr.mxu0 0.0
        %632 = vmatpush1.msra.mxu0 0.0
        %633 = vmatprep.subr.mxu0 0.0
        %634 = vmatpush1.msra.mxu0 0.0
        %635 = vmatprep.subr.mxu0 0.0
        %636 = vmatpush1.msra.mxu0 0.0
        %637 = vmatprep.subr.mxu0 0.0
        %638 = vmatpush1.msra.mxu0 0.0
        %639 = vmatprep.subr.mxu0 0.0
        %640 = vmatpush1.msra.mxu0 0.0
        %641 = vmatprep.subr.mxu0 0.0
        %642 = vmatpush1.msra.mxu0 0.0
        %643 = vmatprep.subr.mxu0 0.0
        %644 = vmatpush1.msra.mxu0 0.0
        %645 = vmatprep.subr.mxu0 0.0
        %646 = vmatpush1.msra.mxu0 0.0
        %647 = vmatprep.subr.mxu0 0.0
        %648 = vmatpush1.msra.mxu0 0.0
        %649 = vmatprep.subr.mxu0 0.0
        %650 = vmatpush1.msra.mxu0 0.0
        %651 = vmatprep.mubr.f32.mxu0 0.0
        %652 = vmatmul.mubr.f32.gmra.mrb[0].mxu0 %v585
        %v653 = vpop.f32.mrb[0].mxu0
        %v654 = vadd.f32 0.0, %v653
        %v655 = vpop.f32.mrb[0].mxu0
        %656 = vdwg.mxu0
        %v657 = vld [vmem:[%s1] sm:$0x1]
        %v658 = vmul.f32 %v654, %v657
        %v659 = vld [vmem:[%s2] sm:$0x1]
        %v660 = vmul.f32 %v581, %v658
        %v661 = vsub.f32 %v659, %v660
        %v663 = vlaneseq
        %v664 = vshrl.u32 %v663, 7
        %v665 = vsub.s32 0, %v664
        %v666 = vrot.slane %v661, %v665
        %vm668 = vcmask 1040384
        %v669 = vsel %vm668, %v658, %v666
        %670 = vst [vmem:[%s250] sm:$0x3] %v669
      $region48: #{attn_block.3} parent=39 // pred_fallthru
        _
      %p671 = scmp.lt.s32.totalorder %s20, 1
      %s672 = scalar_select %p671, %s20, 1
      %s673 = smul.addr %s672, 2
      %s674 = scalar_lea.vmem %s5, %s673
      // Predicated region
      $region49: #{attn_block.3} parent=39 // pred_check
        %p675 = pneg %p158
      $region50: #{attn_block.3} parent=39 // pred_check_branch
        %677 = sbr.rel (%p675) target = $region52
      $region51: #{attn_block.3} parent=39 // pred_region
        _
      $region52: #{attn_block.3} parent=39 // pred_fallthru
        _
    $region40: #{attn_block.3} parent=5 // pred_fallthru
      _
    %p678 = scmp.le.s32.totalorder 2, %s11
    // Predicated region
    $region53: #{attn_block.3} parent=5 // pred_check
      %p679 = pneg %p678
    $region54: #{attn_block.3} parent=5 // pred_check_branch
      %681 = sbr.rel (%p679) target = $region56
    $region55: #{attn_block.3} parent=5 // pred_region
      %s682 = ssub.s32 %s11, 2
      // Predicated region
      $region57: #{attn_block.3} parent=55 // pred_check
        %p683 = pneg %p164
      $region58: #{attn_block.3} parent=55 // pred_check_branch
        %685 = sbr.rel (%p683) target = $region60
      $region59: #{attn_block.3} parent=55 // pred_region
        %p686 = scmp.lt.s32.totalorder %s22, 1
        %s687 = scalar_select %p686, %s22, 1
        %s688 = smul.addr %s687, 2
        %s689 = scalar_lea.vmem %s5, %s688
      $region60: #{attn_block.3} parent=55 // pred_fallthru
        _
    $region56: #{attn_block.3} parent=5 // pred_fallthru
      _
  $region6: #{attn_block.3} parent=0 // loop_footer
    %s15 = sadd.s32 1, %s11
  $region7: #{attn_block.3} parent=0 // loop_footer_branch
    %10 = sbr.rel target = $region3
  $region8: #{attn_block.3} parent=0 // loop_exit
    _

// kernel: attn_block.4
$region0: #{attn_block.4}
  #allocation0 [shape = 'u32[]', space=smem, size = 0x4, offset = 0x4, fixed_abs, tag = 'smem constant byte address 0x4 - core index']
  #allocation1 [shape = 'u32[144,128]{1,0:T(1,128)}', space=vmem, size = 0x12000, scoped, tag = 'internal scratch']
  %s0 = inlined_call_operand.vmem [shape: f32[2,256,128], index: 0, kind: input, shape index: {}]
  %s1 = inlined_call_operand.vmem [shape: f32[2,2,128], index: 1, kind: input, shape index: {}]
  %s2 = inlined_call_operand.vmem [shape: bf16[128,384], index: 2, kind: input, shape index: {}]
  %s3 = inlined_call_operand.vmem [shape: f32[1,384], index: 3, kind: input, shape index: {}]
  %s4 = inlined_call_operand.vmem [shape: bf16[2,256,128], index: 4, kind: output, shape index: {0}]
  %s5 = inlined_call_operand.vmem [shape: bf16[2,256,128], index: 5, kind: output, shape index: {1}]
  %s6 = inlined_call_operand.vmem [shape: bf16[2,256,128], index: 6, kind: output, shape index: {2}]
  %7 = xla_tuple %s4, %s5, %s6
  %s8 = sld [smem:[#allocation0]]
  $region65: #{attn_block.4} parent=0
    _
  %s10 = ssub.s32 1, %s8
  %s11 = scalar_select 0, %s10, %s8
  loop: start=0, step=1, limit=6
  $region2: #{attn_block.4} parent=0 // loop_pre_header
    _
  $region3: #{attn_block.4} parent=0 // loop_header
    %s13 = sphi 0, %s17
    %p14 = scmp.ge.s32.totalorder %s13, 6
    %s20 = sphi 0, %s32
    %s21 = sphi 0, %s28
    %s22 = sphi 0, %s20
    %s23 = sphi 0, %s21
    %s24 = sphi 0, %s22
    %s25 = sphi 0, %s23
    %s37 = sphi 0, %s39
    %s40 = sphi 0, %s37
    %s41 = sphi 0, %s40
    %s57 = sphi 0, %s41
    %s63 = sphi 0, %s65
    %s66 = sphi 0, %s63
    %s67 = sphi 0, %s66
    %s83 = sphi 0, %s67
    %s87 = sphi 0, %s87
    %s89 = sphi 0, %s87
    %s90 = sphi 0, %s89
    %s104 = sphi 0, %s90
    %s108 = sphi 0, %s108
    %s110 = sphi 0, %s108
    %s111 = sphi 0, %s110
    %s125 = sphi 0, %s111
    %s133 = sphi 0, %s135
    %s136 = sphi 0, %s133
    %s137 = sphi 0, %s136
    %s153 = sphi 0, %s137
    %s161 = sphi 0, %s163
    %s164 = sphi 0, %s161
    %s165 = sphi 0, %s164
    %s181 = sphi 0, %s165
    %s189 = sphi 0, %s191
    %s192 = sphi 0, %s189
    %s193 = sphi 0, %s192
    %s209 = sphi 0, %s193
  $region4: #{attn_block.4} parent=0 // loop_header_branch
    %16 = sbr.rel (%p14) target = $region8
  $region5: #{attn_block.4} parent=0 // loop_body
    %s18 = ssub.s32 %s13, 1
    %s19 = ssub.s32 %s13, 2
    %s26 = sadd.s32 1, %s21
    %p27 = scmp.ge.s32.totalorder %s26, 2
    %s28 = scalar_select %p27, 0, %s26
    %s29 = sadd.s32 1, %s20
    %s30 = scalar_select %p27, %s29, %s20
    %p31 = scmp.ge.s32.totalorder %s30, 2
    %s32 = scalar_select %p31, 0, %s30
    %s33 = ssub.s32 %s20, %s32
    %s34 = ssub.s32 %s21, %s28
    %s35 = sor.u32 %s33, %s34
    %p36 = scmp.eq.s32.totalorder %s35, 0
    %s38 = sadd.s32 %s37, 1
    %s39 = scalar_select %p36, %s37, %s38
    %p42 = pneg %p36
    %p43 = scmp.eq.s32.totalorder %s13, 3
    %p44 = por %p42, %p43
    %p45 = scmp.ne.s32.totalorder %s37, %s40
    %p46 = scmp.eq.s32.totalorder %s13, 0
    %p47 = por %p45, %p46
    %p48 = scmp.ne.s32.totalorder %s37, %s40
    %p49 = scmp.eq.s32.totalorder %s18, 3
    %p50 = por %p48, %p49
    %p51 = scmp.ne.s32.totalorder %s40, %s41
    %p52 = scmp.eq.s32.totalorder %s18, 0
    %p53 = por %p51, %p52
    %p54 = scmp.ne.s32.totalorder %s40, %s41
    %p55 = scmp.eq.s32.totalorder %s19, 3
    %p56 = por %p54, %p55
    %p58 = scmp.ne.s32.totalorder %s41, %s57
    %p59 = scmp.eq.s32.totalorder %s19, 0
    %p60 = por %p58, %p59
    %s61 = ssub.s32 %s20, %s32
    %p62 = scmp.eq.s32.totalorder %s61, 0
    %s64 = sadd.s32 %s63, 1
    %s65 = scalar_select %p62, %s63, %s64
    %p68 = pneg %p62
    %p69 = scmp.eq.s32.totalorder %s13, 3
    %p70 = por %p68, %p69
    %p71 = scmp.ne.s32.totalorder %s63, %s66
    %p72 = scmp.eq.s32.totalorder %s13, 0
    %p73 = por %p71, %p72
    %p74 = scmp.ne.s32.totalorder %s63, %s66
    %p75 = scmp.eq.s32.totalorder %s18, 3
    %p76 = por %p74, %p75
    %p77 = scmp.ne.s32.totalorder %s66, %s67
    %p78 = scmp.eq.s32.totalorder %s18, 0
    %p79 = por %p77, %p78
    %p80 = scmp.ne.s32.totalorder %s66, %s67
    %p81 = scmp.eq.s32.totalorder %s19, 3
    %p82 = por %p80, %p81
    %p84 = scmp.ne.s32.totalorder %s67, %s83
    %p85 = scmp.eq.s32.totalorder %s19, 0
    %p86 = por %p84, %p85
    %s88 = sadd.s32 %s87, 1
    %p91 = scmp.eq.s32.totalorder %s13, 3
    %p92 = scmp.ne.s32.totalorder %s87, %s89
    %p93 = scmp.eq.s32.totalorder %s13, 0
    %p94 = por %p92, %p93
    %p95 = scmp.ne.s32.totalorder %s87, %s89
    %p96 = scmp.eq.s32.totalorder %s18, 3
    %p97 = por %p95, %p96
    %p98 = scmp.ne.s32.totalorder %s89, %s90
    %p99 = scmp.eq.s32.totalorder %s18, 0
    %p100 = por %p98, %p99
    %p101 = scmp.ne.s32.totalorder %s89, %s90
    %p102 = scmp.eq.s32.totalorder %s19, 3
    %p103 = por %p101, %p102
    %p105 = scmp.ne.s32.totalorder %s90, %s104
    %p106 = scmp.eq.s32.totalorder %s19, 0
    %p107 = por %p105, %p106
    %s109 = sadd.s32 %s108, 1
    %p112 = scmp.eq.s32.totalorder %s13, 3
    %p113 = scmp.ne.s32.totalorder %s108, %s110
    %p114 = scmp.eq.s32.totalorder %s13, 0
    %p115 = por %p113, %p114
    %p116 = scmp.ne.s32.totalorder %s108, %s110
    %p117 = scmp.eq.s32.totalorder %s18, 3
    %p118 = por %p116, %p117
    %p119 = scmp.ne.s32.totalorder %s110, %s111
    %p120 = scmp.eq.s32.totalorder %s18, 0
    %p121 = por %p119, %p120
    %p122 = scmp.ne.s32.totalorder %s110, %s111
    %p123 = scmp.eq.s32.totalorder %s19, 3
    %p124 = por %p122, %p123
    %p126 = scmp.ne.s32.totalorder %s111, %s125
    %p127 = scmp.eq.s32.totalorder %s19, 0
    %p128 = por %p126, %p127
    %s129 = ssub.s32 %s20, %s32
    %s130 = ssub.s32 %s21, %s28
    %s131 = sor.u32 %s129, %s130
    %p132 = scmp.eq.s32.totalorder %s131, 0
    %s134 = sadd.s32 %s133, 1
    %s135 = scalar_select %p132, %s133, %s134
    %p138 = pneg %p132
    %p139 = scmp.eq.s32.totalorder %s13, 3
    %p140 = por %p138, %p139
    %p141 = scmp.ne.s32.totalorder %s133, %s136
    %p142 = scmp.eq.s32.totalorder %s13, 0
    %p143 = por %p141, %p142
    %p144 = scmp.ne.s32.totalorder %s133, %s136
    %p145 = scmp.eq.s32.totalorder %s18, 3
    %p146 = por %p144, %p145
    %p147 = scmp.ne.s32.totalorder %s136, %s137
    %p148 = scmp.eq.s32.totalorder %s18, 0
    %p149 = por %p147, %p148
    %p150 = scmp.ne.s32.totalorder %s136, %s137
    %p151 = scmp.eq.s32.totalorder %s19, 3
    %p152 = por %p150, %p151
    %p154 = scmp.ne.s32.totalorder %s137, %s153
    %p155 = scmp.eq.s32.totalorder %s19, 0
    %p156 = por %p154, %p155
    %s157 = ssub.s32 %s20, %s32
    %s158 = ssub.s32 %s21, %s28
    %s159 = sor.u32 %s157, %s158
    %p160 = scmp.eq.s32.totalorder %s159, 0
    %s162 = sadd.s32 %s161, 1
    %s163 = scalar_select %p160, %s161, %s162
    %p166 = pneg %p160
    %p167 = scmp.eq.s32.totalorder %s13, 3
    %p168 = por %p166, %p167
    %p169 = scmp.ne.s32.totalorder %s161, %s164
    %p170 = scmp.eq.s32.totalorder %s13, 0
    %p171 = por %p169, %p170
    %p172 = scmp.ne.s32.totalorder %s161, %s164
    %p173 = scmp.eq.s32.totalorder %s18, 3
    %p174 = por %p172, %p173
    %p175 = scmp.ne.s32.totalorder %s164, %s165
    %p176 = scmp.eq.s32.totalorder %s18, 0
    %p177 = por %p175, %p176
    %p178 = scmp.ne.s32.totalorder %s164, %s165
    %p179 = scmp.eq.s32.totalorder %s19, 3
    %p180 = por %p178, %p179
    %p182 = scmp.ne.s32.totalorder %s165, %s181
    %p183 = scmp.eq.s32.totalorder %s19, 0
    %p184 = por %p182, %p183
    %s185 = ssub.s32 %s20, %s32
    %s186 = ssub.s32 %s21, %s28
    %s187 = sor.u32 %s185, %s186
    %p188 = scmp.eq.s32.totalorder %s187, 0
    %s190 = sadd.s32 %s189, 1
    %s191 = scalar_select %p188, %s189, %s190
    %p194 = pneg %p188
    %p195 = scmp.eq.s32.totalorder %s13, 3
    %p196 = por %p194, %p195
    %p197 = scmp.ne.s32.totalorder %s189, %s192
    %p198 = scmp.eq.s32.totalorder %s13, 0
    %p199 = por %p197, %p198
    %p200 = scmp.ne.s32.totalorder %s189, %s192
    %p201 = scmp.eq.s32.totalorder %s18, 3
    %p202 = por %p200, %p201
    %p203 = scmp.ne.s32.totalorder %s192, %s193
    %p204 = scmp.eq.s32.totalorder %s18, 0
    %p205 = por %p203, %p204
    %p206 = scmp.ne.s32.totalorder %s192, %s193
    %p207 = scmp.eq.s32.totalorder %s19, 3
    %p208 = por %p206, %p207
    %p210 = scmp.ne.s32.totalorder %s193, %s209
    %p211 = scmp.eq.s32.totalorder %s19, 0
    %p212 = por %p210, %p211
    %p213 = scmp.le.s32.totalorder 1, %s13
    %p214 = scmp.lt.s32.totalorder %s13, 5
    %p215 = pnand %p213, %p214
    %p216 = pneg %p215
    // Predicated region
    $region9: #{attn_block.4} parent=5 // pred_check
      _
    $region10: #{attn_block.4} parent=5 // pred_check_branch
      %218 = sbr.rel (%p215) target = $region12
    $region11: #{attn_block.4} parent=5 // pred_region
      %s219 = ssub.s32 %s13, 1
      // Predicated region
      $region13: #{attn_block.4} parent=11 // pred_check
        %p220 = pneg %p100
      $region14: #{attn_block.4} parent=11 // pred_check_branch
        %222 = sbr.rel (%p220) target = $region16
      $region15: #{attn_block.4} parent=11 // pred_region
        _
      $region16: #{attn_block.4} parent=11 // pred_fallthru
        _
      // Predicated region
      $region17: #{attn_block.4} parent=11 // pred_check
        %p223 = pneg %p121
      $region18: #{attn_block.4} parent=11 // pred_check_branch
        %225 = sbr.rel (%p223) target = $region20
      $region19: #{attn_block.4} parent=11 // pred_region
        _
      $region20: #{attn_block.4} parent=11 // pred_fallthru
        _
    $region12: #{attn_block.4} parent=5 // pred_fallthru
      _
    %p226 = scmp.lt.s32.totalorder %s13, 4
    // Predicated region
    $region21: #{attn_block.4} parent=5 // pred_check
      %p227 = pneg %p226
    $region22: #{attn_block.4} parent=5 // pred_check_branch
      %229 = sbr.rel (%p227) target = $region24
    $region23: #{attn_block.4} parent=5 // pred_region
      // Predicated region
      $region25: #{attn_block.4} parent=23 // pred_check
        %p230 = pneg %p47
      $region26: #{attn_block.4} parent=23 // pred_check_branch
        %232 = sbr.rel (%p230) target = $region28
      $region27: #{attn_block.4} parent=23 // pred_region
        %s233 = smul.u32 16, %s21
        %p234 = scmp.lt.s32.totalorder %s20, 1
        %s235 = scalar_select %p234, %s20, 1
        %p236 = scmp.lt.s32.totalorder %s233, 31
        %s237 = scalar_select %p236, %s233, 31
        %s238 = smul.addr %s235, 32
        %s239 = sadd.s32 %s237, %s238
        %s240 = smul.addr %s239, 8
        %s241 = scalar_lea.vmem %s0, %s240
        %s242 = smul.u32 16, %s21
      $region28: #{attn_block.4} parent=23 // pred_fallthru
        _
      // Predicated region
      $region29: #{attn_block.4} parent=23 // pred_check
        %p243 = pneg %p73
      $region30: #{attn_block.4} parent=23 // pred_check_branch
        %245 = sbr.rel (%p243) target = $region32
      $region31: #{attn_block.4} parent=23 // pred_region
        %p246 = scmp.lt.s32.totalorder %s20, 1
        %s247 = scalar_select %p246, %s20, 1
        %s248 = smul.addr %s247, 2
        %s249 = scalar_lea.vmem %s1, %s248
      $region32: #{attn_block.4} parent=23 // pred_fallthru
        _
    $region24: #{attn_block.4} parent=5 // pred_fallthru
      _
    %p250 = scmp.le.s32.totalorder 1, %s13
    %p251 = scmp.lt.s32.totalorder %s13, 5
    %p252 = pnand %p250, %p251
    %p253 = pneg %p252
    // Predicated region
    $region33: #{attn_block.4} parent=5 // pred_check
      _
    $region34: #{attn_block.4} parent=5 // pred_check_branch
      %255 = sbr.rel (%p252) target = $region36
    $region35: #{attn_block.4} parent=5 // pred_region
      %s256 = ssub.s32 %s13, 1
      %s257 = smul.u32 16, %s23
      %p258 = scmp.lt.s32.totalorder %s22, 1
      %s259 = scalar_select %p258, %s22, 1
      %p260 = scmp.lt.s32.totalorder %s257, 31
      %s261 = scalar_select %p260, %s257, 31
      %s262 = smul.addr %s259, 32
      %s263 = sadd.s32 %s261, %s262
      %s264 = smul.addr %s263, 8
      %s265 = scalar_lea.vmem %s0, %s264
      %p266 = pneg %p53
      %p267 = pneg %p50
      %p268 = scmp.lt.s32.totalorder %s22, 1
      %s269 = scalar_select %p268, %s22, 1
      %s270 = smul.addr %s269, 2
      %s271 = scalar_lea.vmem %s1, %s270
      %p272 = pneg %p79
      %p273 = pneg %p76
      %p274 = pneg %p100
      %p275 = pneg %p97
      %p276 = pneg %p121
      %p277 = pneg %p118
      %p278 = pneg %p149
      %p279 = pneg %p146
      %s280 = smul.u32 16, %s23
      %p281 = scmp.lt.s32.totalorder %s22, 1
      %s282 = scalar_select %p281, %s22, 1
      %p283 = scmp.lt.s32.totalorder %s280, 31
      %s284 = scalar_select %p283, %s280, 31
      %s285 = smul.addr %s282, 32
      %s286 = sadd.s32 %s284, %s285
      %s287 = smul.addr %s286, 4
      %s288 = scalar_lea.vmem %s4, %s287
      %p289 = pneg %p177
      %p290 = pneg %p174
      %s291 = smul.u32 16, %s23
      %p292 = scmp.lt.s32.totalorder %s22, 1
      %s293 = scalar_select %p292, %s22, 1
      %p294 = scmp.lt.s32.totalorder %s291, 31
      %s295 = scalar_select %p294, %s291, 31
      %s296 = smul.addr %s293, 32
      %s297 = sadd.s32 %s295, %s296
      %s298 = smul.addr %s297, 4
      %s299 = scalar_lea.vmem %s5, %s298
      %p300 = pneg %p205
      %p301 = pneg %p202
      %s302 = smul.u32 16, %s23
      %p303 = scmp.lt.s32.totalorder %s22, 1
      %s304 = scalar_select %p303, %s22, 1
      %p305 = scmp.lt.s32.totalorder %s302, 31
      %s306 = scalar_select %p305, %s302, 31
      %s307 = smul.addr %s304, 32
      %s308 = sadd.s32 %s306, %s307
      %s309 = smul.addr %s308, 4
      %s310 = scalar_lea.vmem %s6, %s309
      %s311 = smul.u32 16, %s23
      %p312 = scmp.lt.s32.totalorder %s22, 1
      %s313 = scalar_select %p312, %s22, 1
      %p314 = scmp.lt.s32.totalorder %s311, 31
      %s315 = scalar_select %p314, %s311, 31
      %s316 = smul.addr %s313, 32
      %s317 = sadd.s32 %s315, %s316
      %s318 = smul.addr %s317, 8
      %s319 = scalar_lea.vmem %s0, %s318
      %s320 = smul.u32 16, %s23
      %p321 = scmp.lt.s32.totalorder %s22, 1
      %s322 = scalar_select %p321, %s22, 1
      %s323 = smul.addr %s322, 2
      %s324 = scalar_lea.vmem %s1, %s323
      %s325 = smul.u32 16, %s23
      %p326 = scmp.lt.s32.totalorder %s22, 1
      %s327 = scalar_select %p326, %s22, 1
      %p328 = scmp.lt.s32.totalorder %s325, 31
      %s329 = scalar_select %p328, %s325, 31
      %s330 = smul.addr %s327, 32
      %s331 = sadd.s32 %s329, %s330
      %s332 = smul.addr %s331, 4
      %s333 = scalar_lea.vmem %s4, %s332
      %s334 = smul.u32 16, %s23
      %s335 = smul.u32 16, %s23
      %p336 = scmp.lt.s32.totalorder %s22, 1
      %s337 = scalar_select %p336, %s22, 1
      %p338 = scmp.lt.s32.totalorder %s335, 31
      %s339 = scalar_select %p338, %s335, 31
      %s340 = smul.addr %s337, 32
      %s341 = sadd.s32 %s339, %s340
      %s342 = smul.addr %s341, 4
      %s343 = scalar_lea.vmem %s5, %s342
      %s344 = smul.u32 16, %s23
      %s345 = smul.u32 16, %s23
      %p346 = scmp.lt.s32.totalorder %s22, 1
      %s347 = scalar_select %p346, %s22, 1
      %p348 = scmp.lt.s32.totalorder %s345, 31
      %s349 = scalar_select %p348, %s345, 31
      %s350 = smul.addr %s347, 32
      %s351 = sadd.s32 %s349, %s350
      %s352 = smul.addr %s351, 4
      %s353 = scalar_lea.vmem %s6, %s352
      %s354 = smul.u32 16, %s23
      %v356 = vld [vmem:[%s319] sm:$0xff]
      %v357 = vld [vmem:[%s319 + $0x8] sm:$0xff]
      %v358 = vld [vmem:[%s319 + $0x10] sm:$0xff]
      %v359 = vld [vmem:[%s319 + $0x18] sm:$0xff]
      %v360 = vld [vmem:[%s319 + $0x20] sm:$0xff]
      %v361 = vld [vmem:[%s319 + $0x28] sm:$0xff]
      %v362 = vld [vmem:[%s319 + $0x30] sm:$0xff]
      %v363 = vld [vmem:[%s319 + $0x38] sm:$0xff]
      %v364 = vld [vmem:[%s319 + $0x40] sm:$0xff]
      %v365 = vld [vmem:[%s319 + $0x48] sm:$0xff]
      %v366 = vld [vmem:[%s319 + $0x50] sm:$0xff]
      %v367 = vld [vmem:[%s319 + $0x58] sm:$0xff]
      %v368 = vld [vmem:[%s319 + $0x60] sm:$0xff]
      %v369 = vld [vmem:[%s319 + $0x68] sm:$0xff]
      %v370 = vld [vmem:[%s319 + $0x70] sm:$0xff]
      %v371 = vld [vmem:[%s319 + $0x78] sm:$0xff]
      %v372 = vld [vmem:[%s324] sm:$0x3]
      %v373 = vlaneseq
      %v374 = vshrl.u32 %v373, 7
      %v375 = vsub.s32 0, %v374
      %v376 = vrot.slane %v372, %v375
      %v377 = vmul.f32 %v356, %v376
      %v378 = vmul.f32 %v357, %v376
      %v379 = vmul.f32 %v358, %v376
      %v380 = vmul.f32 %v359, %v376
      %v381 = vmul.f32 %v360, %v376
      %v382 = vmul.f32 %v361, %v376
      %v383 = vmul.f32 %v362, %v376
      %v384 = vmul.f32 %v363, %v376
      %v385 = vmul.f32 %v364, %v376
      %v386 = vmul.f32 %v365, %v376
      %v387 = vmul.f32 %v366, %v376
      %v388 = vmul.f32 %v367, %v376
      %v389 = vmul.f32 %v368, %v376
      %v390 = vmul.f32 %v369, %v376
      %v391 = vmul.f32 %v370, %v376
      %v392 = vmul.f32 %v371, %v376
      %v393 = vlaneseq
      %v394 = vshrl.u32 %v393, 7
      %v395 = vsub.s32 1, %v394
      %v396 = vrot.slane %v372, %v395
      %v397 = vadd.f32 %v377, %v396
      %v398 = vadd.f32 %v378, %v396
      %v399 = vadd.f32 %v379, %v396
      %v400 = vadd.f32 %v380, %v396
      %v401 = vadd.f32 %v381, %v396
      %v402 = vadd.f32 %v382, %v396
      %v403 = vadd.f32 %v383, %v396
      %v404 = vadd.f32 %v384, %v396
      %v405 = vadd.f32 %v385, %v396
      %v406 = vadd.f32 %v386, %v396
      %v407 = vadd.f32 %v387, %v396
      %v408 = vadd.f32 %v388, %v396
      %v409 = vadd.f32 %v389, %v396
      %v410 = vadd.f32 %v390, %v396
      %v411 = vadd.f32 %v391, %v396
      %v412 = vadd.f32 %v392, %v396
      %v413 = vpack.c.bf16 %v398, %v397
      %v414 = vpack.c.bf16 %v400, %v399
      %v415 = vpack.c.bf16 %v402, %v401
      %v416 = vpack.c.bf16 %v404, %v403
      %v417 = vpack.c.bf16 %v406, %v405
      %v418 = vpack.c.bf16 %v408, %v407
      %v419 = vpack.c.bf16 %v410, %v409
      %v420 = vpack.c.bf16 %v412, %v411
      %v421 = vld [vmem:[%s2] sm:$0xf]
      %v422 = vld [vmem:[%s2 + $0xc] sm:$0xf]
      %v423 = vld [vmem:[%s2 + $0x18] sm:$0xf]
      %v424 = vld [vmem:[%s2 + $0x24] sm:$0xf]
      %v425 = vld [vmem:[%s2 + $0x30] sm:$0xf]
      %v426 = vld [vmem:[%s2 + $0x3c] sm:$0xf]
      %v427 = vld [vmem:[%s2 + $0x48] sm:$0xf]
      %v428 = vld [vmem:[%s2 + $0x54] sm:$0xf]
      %v429 = vld [vmem:[%s2 + $0x60] sm:$0xf]
      %v430 = vld [vmem:[%s2 + $0x6c] sm:$0xf]
      %v431 = vld [vmem:[%s2 + $0x78] sm:$0xf]
      %v432 = vld [vmem:[%s2 + $0x84] sm:$0xf]
      %v433 = vld [vmem:[%s2 + $0x90] sm:$0xf]
      %v434 = vld [vmem:[%s2 + $0x9c] sm:$0xf]
      %v435 = vld [vmem:[%s2 + $0xa8] sm:$0xf]
      %v436 = vld [vmem:[%s2 + $0xb4] sm:$0xf]
      %v437 = vld [vmem:[%s3] sm:$0x1]
      %v439 = vlaneseq
      %v440 = vshrl.u32 %v439, 7
      %v441 = vsub.s32 0, %v440
      %v442 = vrot.slane %v437, %v441
      %v460 = vunpack.c.l.b16 %v421
      %v461 = vunpack.c.l.b16 %v422
      %v462 = vunpack.c.l.b16 %v423
      %v463 = vunpack.c.l.b16 %v424
      %v464 = vunpack.c.l.b16 %v425
      %v465 = vunpack.c.l.b16 %v426
      %v466 = vunpack.c.l.b16 %v427
      %v467 = vunpack.c.l.b16 %v428
      %v468 = vunpack.c.l.b16 %v429
      %v469 = vunpack.c.l.b16 %v430
      %v470 = vunpack.c.l.b16 %v431
      %v471 = vunpack.c.l.b16 %v432
      %v472 = vunpack.c.l.b16 %v433
      %v473 = vunpack.c.l.b16 %v434
      %v474 = vunpack.c.l.b16 %v435
      %v475 = vunpack.c.l.b16 %v436
      %v476 = vpack.c.b16 %v461, %v460
      %v477 = vpack.c.b16 %v463, %v462
      %v478 = vpack.c.b16 %v465, %v464
      %v479 = vpack.c.b16 %v467, %v466
      %v480 = vpack.c.b16 %v469, %v468
      %v481 = vpack.c.b16 %v471, %v470
      %v482 = vpack.c.b16 %v473, %v472
      %v483 = vpack.c.b16 %v475, %v474
      %492 = vmatprep.subr.bf16.mxu0 0
      %493 = vmatpush1.bf16.msra.mxu0 %v476
      %494 = vmatprep.subr.bf16.mxu0 0
      %495 = vmatpush1.bf16.msra.mxu0 %v477
      %496 = vmatprep.subr.bf16.mxu0 0
      %497 = vmatpush1.bf16.msra.mxu0 %v478
      %498 = vmatprep.subr.bf16.mxu0 0
      %499 = vmatpush1.bf16.msra.mxu0 %v479
      %500 = vmatprep.subr.bf16.mxu0 0
      %501 = vmatpush1.bf16.msra.mxu0 %v480
      %502 = vmatprep.subr.bf16.mxu0 0
      %503 = vmatpush1.bf16.msra.mxu0 %v481
      %504 = vmatprep.subr.bf16.mxu0 0
      %505 = vmatpush1.bf16.msra.mxu0 %v482
      %506 = vmatprep.subr.bf16.mxu0 0
      %507 = vmatpush1.bf16.msra.mxu0 %v483
      %508 = vmatprep.subr.bf16.mxu0 0
      %509 = vmatpush1.bf16.msra.mxu0 0
      %510 = vmatprep.subr.bf16.mxu0 0
      %511 = vmatpush1.bf16.msra.mxu0 0
      %512 = vmatprep.subr.bf16.mxu0 0
      %513 = vmatpush1.bf16.msra.mxu0 0
      %514 = vmatprep.subr.bf16.mxu0 0
      %515 = vmatpush1.bf16.msra.mxu0 0
      %516 = vmatprep.subr.bf16.mxu0 0
      %517 = vmatpush1.bf16.msra.mxu0 0
      %518 = vmatprep.subr.bf16.mxu0 0
      %519 = vmatpush1.bf16.msra.mxu0 0
      %520 = vmatprep.subr.bf16.mxu0 0
      %521 = vmatpush1.bf16.msra.mxu0 0
      %522 = vmatprep.subr.bf16.mxu0 0
      %523 = vmatpush1.bf16.msra.mxu0 0
      %524 = vmatprep.mubr.bf16.mxu0 0
      %525 = vmatmul.mubr.bf16.gmra.mrb[0].mxu0 %v413
      %v526 = vpop.f32.mrb[0].mxu0
      %v527 = vadd.f32 %v442, %v526
      %v528 = vpop.f32.mrb[0].mxu0
      %v529 = vpop.f32.mrb[0].mxu0
      %v530 = vadd.f32 %v442, %v529
      %v531 = vpop.f32.mrb[0].mxu0
      %532 = vmatprep.mubr.bf16.mxu0 0
      %533 = vmatmul.mubr.bf16.gmra.mrb[0].mxu0 %v414
      %v534 = vpop.f32.mrb[0].mxu0
      %v535 = vadd.f32 %v442, %v534
      %v536 = vpop.f32.mrb[0].mxu0
      %v537 = vpop.f32.mrb[0].mxu0
      %v538 = vadd.f32 %v442, %v537
      %v539 = vpop.f32.mrb[0].mxu0
      %540 = vmatprep.mubr.bf16.mxu0 0
      %541 = vmatmul.mubr.bf16.gmra.mrb[0].mxu0 %v415
      %v542 = vpop.f32.mrb[0].mxu0
      %v543 = vadd.f32 %v442, %v542
      %v544 = vpop.f32.mrb[0].mxu0
      %v545 = vpop.f32.mrb[0].mxu0
      %v546 = vadd.f32 %v442, %v545
      %v547 = vpop.f32.mrb[0].mxu0
      %548 = vmatprep.mubr.bf16.mxu0 0
      %549 = vmatmul.mubr.bf16.gmra.mrb[0].mxu0 %v416
      %v550 = vpop.f32.mrb[0].mxu0
      %v551 = vadd.f32 %v442, %v550
      %v552 = vpop.f32.mrb[0].mxu0
      %v553 = vpop.f32.mrb[0].mxu0
      %v554 = vadd.f32 %v442, %v553
      %v555 = vpop.f32.mrb[0].mxu0
      %556 = vmatprep.mubr.bf16.mxu0 0
      %557 = vmatmul.mubr.bf16.gmra.mrb[0].mxu0 %v417
      %v558 = vpop.f32.mrb[0].mxu0
      %v559 = vadd.f32 %v442, %v558
      %v560 = vpop.f32.mrb[0].mxu0
      %v561 = vpop.f32.mrb[0].mxu0
      %v562 = vadd.f32 %v442, %v561
      %v563 = vpop.f32.mrb[0].mxu0
      %564 = vmatprep.mubr.bf16.mxu0 0
      %565 = vmatmul.mubr.bf16.gmra.mrb[0].mxu0 %v418
      %v566 = vpop.f32.mrb[0].mxu0
      %v567 = vadd.f32 %v442, %v566
      %v568 = vpop.f32.mrb[0].mxu0
      %v569 = vpop.f32.mrb[0].mxu0
      %v570 = vadd.f32 %v442, %v569
      %v571 = vpop.f32.mrb[0].mxu0
      %572 = vmatprep.mubr.bf16.mxu0 0
      %573 = vmatmul.mubr.bf16.gmra.mrb[0].mxu0 %v419
      %v574 = vpop.f32.mrb[0].mxu0
      %v575 = vadd.f32 %v442, %v574
      %v576 = vpop.f32.mrb[0].mxu0
      %v577 = vpop.f32.mrb[0].mxu0
      %v578 = vadd.f32 %v442, %v577
      %v579 = vpop.f32.mrb[0].mxu0
      %580 = vmatprep.mubr.bf16.mxu0 0
      %581 = vmatmul.mubr.bf16.gmra.mrb[0].mxu0 %v420
      %v582 = vpop.f32.mrb[0].mxu0
      %v583 = vadd.f32 %v442, %v582
      %v584 = vpop.f32.mrb[0].mxu0
      %v585 = vpop.f32.mrb[0].mxu0
      %v586 = vadd.f32 %v442, %v585
      %v587 = vpop.f32.mrb[0].mxu0
      %588 = vdwg.mxu0
      %v589 = vpack.c.bf16 %v530, %v527
      %v590 = vpack.c.bf16 %v538, %v535
      %v591 = vpack.c.bf16 %v546, %v543
      %v592 = vpack.c.bf16 %v554, %v551
      %v593 = vpack.c.bf16 %v562, %v559
      %v594 = vpack.c.bf16 %v570, %v567
      %v595 = vpack.c.bf16 %v578, %v575
      %v596 = vpack.c.bf16 %v586, %v583
      %v605 = vunpack.c.l.b16 %v589
      %v606 = vunpack.c.h.b16 %v589
      %v607 = vunpack.c.l.b16 %v590
      %v608 = vunpack.c.h.b16 %v590
      %v609 = vunpack.c.l.b16 %v591
      %v610 = vunpack.c.h.b16 %v591
      %v611 = vunpack.c.l.b16 %v592
      %v612 = vunpack.c.h.b16 %v592
      %v613 = vunpack.c.l.b16 %v593
      %v614 = vunpack.c.h.b16 %v593
      %v615 = vunpack.c.l.b16 %v594
      %v616 = vunpack.c.h.b16 %v594
      %v617 = vunpack.c.l.b16 %v595
      %v618 = vunpack.c.h.b16 %v595
      %v619 = vunpack.c.l.b16 %v596
      %v620 = vunpack.c.h.b16 %v596
      %v621 = vpack.c.b16 %v605, %v605
      %v622 = vpack.c.b16 %v606, %v606
      %v623 = vpack.c.b16 %v607, %v607
      %v624 = vpack.c.b16 %v608, %v608
      %v625 = vpack.c.b16 %v609, %v609
      %v626 = vpack.c.b16 %v610, %v610
      %v627 = vpack.c.b16 %v611, %v611
      %v628 = vpack.c.b16 %v612, %v612
      %v629 = vpack.c.b16 %v613, %v613
      %v630 = vpack.c.b16 %v614, %v614
      %v631 = vpack.c.b16 %v615, %v615
      %v632 = vpack.c.b16 %v616, %v616
      %v633 = vpack.c.b16 %v617, %v617
      %v634 = vpack.c.b16 %v618, %v618
      %v635 = vpack.c.b16 %v619, %v619
      %v636 = vpack.c.b16 %v620, %v620
      %653 = vst [vmem:[%s333] sm:$0xf] %v621
      %654 = vst [vmem:[%s333 + $0x4] sm:$0xf] %v622
      %655 = vst [vmem:[%s333 + $0x8] sm:$0xf] %v623
      %656 = vst [vmem:[%s333 + $0xc] sm:$0xf] %v624
      %657 = vst [vmem:[%s333 + $0x10] sm:$0xf] %v625
      %658 = vst [vmem:[%s333 + $0x14] sm:$0xf] %v626
      %659 = vst [vmem:[%s333 + $0x18] sm:$0xf] %v627
      %660 = vst [vmem:[%s333 + $0x1c] sm:$0xf] %v628
      %661 = vst [vmem:[%s333 + $0x20] sm:$0xf] %v629
      %662 = vst [vmem:[%s333 + $0x24] sm:$0xf] %v630
      %663 = vst [vmem:[%s333 + $0x28] sm:$0xf] %v631
      %664 = vst [vmem:[%s333 + $0x2c] sm:$0xf] %v632
      %665 = vst [vmem:[%s333 + $0x30] sm:$0xf] %v633
      %666 = vst [vmem:[%s333 + $0x34] sm:$0xf] %v634
      %667 = vst [vmem:[%s333 + $0x38] sm:$0xf] %v635
      %668 = vst [vmem:[%s333 + $0x3c] sm:$0xf] %v636
      %v669 = vld [vmem:[%s2 + $0x4] sm:$0xf]
      %v670 = vld [vmem:[%s2 + $0x10] sm:$0xf]
      %v671 = vld [vmem:[%s2 + $0x1c] sm:$0xf]
      %v672 = vld [vmem:[%s2 + $0x28] sm:$0xf]
      %v673 = vld [vmem:[%s2 + $0x34] sm:$0xf]
      %v674 = vld [vmem:[%s2 + $0x40] sm:$0xf]
      %v675 = vld [vmem:[%s2 + $0x4c] sm:$0xf]
      %v676 = vld [vmem:[%s2 + $0x58] sm:$0xf]
      %v677 = vld [vmem:[%s2 + $0x64] sm:$0xf]
      %v678 = vld [vmem:[%s2 + $0x70] sm:$0xf]
      %v679 = vld [vmem:[%s2 + $0x7c] sm:$0xf]
      %v680 = vld [vmem:[%s2 + $0x88] sm:$0xf]
      %v681 = vld [vmem:[%s2 + $0x94] sm:$0xf]
      %v682 = vld [vmem:[%s2 + $0xa0] sm:$0xf]
      %v683 = vld [vmem:[%s2 + $0xac] sm:$0xf]
      %v684 = vld [vmem:[%s2 + $0xb8] sm:$0xf]
      %v685 = vld [vmem:[%s3 + $0x1] sm:$0x1]
      %v687 = vlaneseq
      %v688 = vshrl.u32 %v687, 7
      %v689 = vsub.s32 0, %v688
      %v690 = vrot.slane %v685, %v689
      %v708 = vunpack.c.l.b16 %v669
      %v709 = vunpack.c.l.b16 %v670
      %v710 = vunpack.c.l.b16 %v671
      %v711 = vunpack.c.l.b16 %v672
      %v712 = vunpack.c.l.b16 %v673
      %v713 = vunpack.c.l.b16 %v674
      %v714 = vunpack.c.l.b16 %v675
      %v715 = vunpack.c.l.b16 %v676
      %v716 = vunpack.c.l.b16 %v677
      %v717 = vunpack.c.l.b16 %v678
      %v718 = vunpack.c.l.b16 %v679
      %v719 = vunpack.c.l.b16 %v680
      %v720 = vunpack.c.l.b16 %v681
      %v721 = vunpack.c.l.b16 %v682
      %v722 = vunpack.c.l.b16 %v683
      %v723 = vunpack.c.l.b16 %v684
      %v724 = vpack.c.b16 %v709, %v708
      %v725 = vpack.c.b16 %v711, %v710
      %v726 = vpack.c.b16 %v713, %v712
      %v727 = vpack.c.b16 %v715, %v714
      %v728 = vpack.c.b16 %v717, %v716
      %v729 = vpack.c.b16 %v719, %v718
      %v730 = vpack.c.b16 %v721, %v720
      %v731 = vpack.c.b16 %v723, %v722
      %740 = vmatprep.subr.bf16.mxu0 0
      %741 = vmatpush1.bf16.msra.mxu0 %v724
      %742 = vmatprep.subr.bf16.mxu0 0
      %743 = vmatpush1.bf16.msra.mxu0 %v725
      %744 = vmatprep.subr.bf16.mxu0 0
      %745 = vmatpush1.bf16.msra.mxu0 %v726
      %746 = vmatprep.subr.bf16.mxu0 0
      %747 = vmatpush1.bf16.msra.mxu0 %v727
      %748 = vmatprep.subr.bf16.mxu0 0
      %749 = vmatpush1.bf16.msra.mxu0 %v728
      %750 = vmatprep.subr.bf16.mxu0 0
      %751 = vmatpush1.bf16.msra.mxu0 %v729
      %752 = vmatprep.subr.bf16.mxu0 0
      %753 = vmatpush1.bf16.msra.mxu0 %v730
      %754 = vmatprep.subr.bf16.mxu0 0
      %755 = vmatpush1.bf16.msra.mxu0 %v731
      %756 = vmatprep.subr.bf16.mxu0 0
      %757 = vmatpush1.bf16.msra.mxu0 0
      %758 = vmatprep.subr.bf16.mxu0 0
      %759 = vmatpush1.bf16.msra.mxu0 0
      %760 = vmatprep.subr.bf16.mxu0 0
      %761 = vmatpush1.bf16.msra.mxu0 0
      %762 = vmatprep.subr.bf16.mxu0 0
      %763 = vmatpush1.bf16.msra.mxu0 0
      %764 = vmatprep.subr.bf16.mxu0 0
      %765 = vmatpush1.bf16.msra.mxu0 0
      %766 = vmatprep.subr.bf16.mxu0 0
      %767 = vmatpush1.bf16.msra.mxu0 0
      %768 = vmatprep.subr.bf16.mxu0 0
      %769 = vmatpush1.bf16.msra.mxu0 0
      %770 = vmatprep.subr.bf16.mxu0 0
      %771 = vmatpush1.bf16.msra.mxu0 0
      %772 = vmatprep.mubr.bf16.mxu0 0
      %773 = vmatmul.mubr.bf16.gmra.mrb[0].mxu0 %v413
      %v774 = vpop.f32.mrb[0].mxu0
      %v775 = vadd.f32 %v690, %v774
      %v776 = vpop.f32.mrb[0].mxu0
      %v777 = vpop.f32.mrb[0].mxu0
      %v778 = vadd.f32 %v690, %v777
      %v779 = vpop.f32.mrb[0].mxu0
      %780 = vmatprep.mubr.bf16.mxu0 0
      %781 = vmatmul.mubr.bf16.gmra.mrb[0].mxu0 %v414
      %v782 = vpop.f32.mrb[0].mxu0
      %v783 = vadd.f32 %v690, %v782
      %v784 = vpop.f32.mrb[0].mxu0
      %v785 = vpop.f32.mrb[0].mxu0
      %v786 = vadd.f32 %v690, %v785
      %v787 = vpop.f32.mrb[0].mxu0
      %788 = vmatprep.mubr.bf16.mxu0 0
      %789 = vmatmul.mubr.bf16.gmra.mrb[0].mxu0 %v415
      %v790 = vpop.f32.mrb[0].mxu0
      %v791 = vadd.f32 %v690, %v790
      %v792 = vpop.f32.mrb[0].mxu0
      %v793 = vpop.f32.mrb[0].mxu0
      %v794 = vadd.f32 %v690, %v793
      %v795 = vpop.f32.mrb[0].mxu0
      %796 = vmatprep.mubr.bf16.mxu0 0
      %797 = vmatmul.mubr.bf16.gmra.mrb[0].mxu0 %v416
      %v798 = vpop.f32.mrb[0].mxu0
      %v799 = vadd.f32 %v690, %v798
      %v800 = vpop.f32.mrb[0].mxu0
      %v801 = vpop.f32.mrb[0].mxu0
      %v802 = vadd.f32 %v690, %v801
      %v803 = vpop.f32.mrb[0].mxu0
      %804 = vmatprep.mubr.bf16.mxu0 0
      %805 = vmatmul.mubr.bf16.gmra.mrb[0].mxu0 %v417
      %v806 = vpop.f32.mrb[0].mxu0
      %v807 = vadd.f32 %v690, %v806
      %v808 = vpop.f32.mrb[0].mxu0
      %v809 = vpop.f32.mrb[0].mxu0
      %v810 = vadd.f32 %v690, %v809
      %v811 = vpop.f32.mrb[0].mxu0
      %812 = vmatprep.mubr.bf16.mxu0 0
      %813 = vmatmul.mubr.bf16.gmra.mrb[0].mxu0 %v418
      %v814 = vpop.f32.mrb[0].mxu0
      %v815 = vadd.f32 %v690, %v814
      %v816 = vpop.f32.mrb[0].mxu0
      %v817 = vpop.f32.mrb[0].mxu0
      %v818 = vadd.f32 %v690, %v817
      %v819 = vpop.f32.mrb[0].mxu0
      %820 = vmatprep.mubr.bf16.mxu0 0
      %821 = vmatmul.mubr.bf16.gmra.mrb[0].mxu0 %v419
      %v822 = vpop.f32.mrb[0].mxu0
      %v823 = vadd.f32 %v690, %v822
      %v824 = vpop.f32.mrb[0].mxu0
      %v825 = vpop.f32.mrb[0].mxu0
      %v826 = vadd.f32 %v690, %v825
      %v827 = vpop.f32.mrb[0].mxu0
      %828 = vmatprep.mubr.bf16.mxu0 0
      %829 = vmatmul.mubr.bf16.gmra.mrb[0].mxu0 %v420
      %v830 = vpop.f32.mrb[0].mxu0
      %v831 = vadd.f32 %v690, %v830
      %v832 = vpop.f32.mrb[0].mxu0
      %v833 = vpop.f32.mrb[0].mxu0
      %v834 = vadd.f32 %v690, %v833
      %v835 = vpop.f32.mrb[0].mxu0
      %836 = vdwg.mxu0
      %v837 = vpack.c.bf16 %v778, %v775
      %v838 = vpack.c.bf16 %v786, %v783
      %v839 = vpack.c.bf16 %v794, %v791
      %v840 = vpack.c.bf16 %v802, %v799
      %v841 = vpack.c.bf16 %v810, %v807
      %v842 = vpack.c.bf16 %v818, %v815
      %v843 = vpack.c.bf16 %v826, %v823
      %v844 = vpack.c.bf16 %v834, %v831
      %v853 = vunpack.c.l.b16 %v837
      %v854 = vunpack.c.h.b16 %v837
      %v855 = vunpack.c.l.b16 %v838
      %v856 = vunpack.c.h.b16 %v838
      %v857 = vunpack.c.l.b16 %v839
      %v858 = vunpack.c.h.b16 %v839
      %v859 = vunpack.c.l.b16 %v840
      %v860 = vunpack.c.h.b16 %v840
      %v861 = vunpack.c.l.b16 %v841
      %v862 = vunpack.c.h.b16 %v841
      %v863 = vunpack.c.l.b16 %v842
      %v864 = vunpack.c.h.b16 %v842
      %v865 = vunpack.c.l.b16 %v843
      %v866 = vunpack.c.h.b16 %v843
      %v867 = vunpack.c.l.b16 %v844
      %v868 = vunpack.c.h.b16 %v844
      %v869 = vpack.c.b16 %v853, %v853
      %v870 = vpack.c.b16 %v854, %v854
      %v871 = vpack.c.b16 %v855, %v855
      %v872 = vpack.c.b16 %v856, %v856
      %v873 = vpack.c.b16 %v857, %v857
      %v874 = vpack.c.b16 %v858, %v858
      %v875 = vpack.c.b16 %v859, %v859
      %v876 = vpack.c.b16 %v860, %v860
      %v877 = vpack.c.b16 %v861, %v861
      %v878 = vpack.c.b16 %v862, %v862
      %v879 = vpack.c.b16 %v863, %v863
      %v880 = vpack.c.b16 %v864, %v864
      %v881 = vpack.c.b16 %v865, %v865
      %v882 = vpack.c.b16 %v866, %v866
      %v883 = vpack.c.b16 %v867, %v867
      %v884 = vpack.c.b16 %v868, %v868
      %901 = vst [vmem:[%s343] sm:$0xf] %v869
      %902 = vst [vmem:[%s343 + $0x4] sm:$0xf] %v870
      %903 = vst [vmem:[%s343 + $0x8] sm:$0xf] %v871
      %904 = vst [vmem:[%s343 + $0xc] sm:$0xf] %v872
      %905 = vst [vmem:[%s343 + $0x10] sm:$0xf] %v873
      %906 = vst [vmem:[%s343 + $0x14] sm:$0xf] %v874
      %907 = vst [vmem:[%s343 + $0x18] sm:$0xf] %v875
      %908 = vst [vmem:[%s343 + $0x1c] sm:$0xf] %v876
      %909 = vst [vmem:[%s343 + $0x20] sm:$0xf] %v877
      %910 = vst [vmem:[%s343 + $0x24] sm:$0xf] %v878
      %911 = vst [vmem:[%s343 + $0x28] sm:$0xf] %v879
      %912 = vst [vmem:[%s343 + $0x2c] sm:$0xf] %v880
      %913 = vst [vmem:[%s343 + $0x30] sm:$0xf] %v881
      %914 = vst [vmem:[%s343 + $0x34] sm:$0xf] %v882
      %915 = vst [vmem:[%s343 + $0x38] sm:$0xf] %v883
      %916 = vst [vmem:[%s343 + $0x3c] sm:$0xf] %v884
      %v917 = vld [vmem:[%s2 + $0x8] sm:$0xf]
      %v918 = vld [vmem:[%s2 + $0x14] sm:$0xf]
      %v919 = vld [vmem:[%s2 + $0x20] sm:$0xf]
      %v920 = vld [vmem:[%s2 + $0x2c] sm:$0xf]
      %v921 = vld [vmem:[%s2 + $0x38] sm:$0xf]
      %v922 = vld [vmem:[%s2 + $0x44] sm:$0xf]
      %v923 = vld [vmem:[%s2 + $0x50] sm:$0xf]
      %v924 = vld [vmem:[%s2 + $0x5c] sm:$0xf]
      %v925 = vld [vmem:[%s2 + $0x68] sm:$0xf]
      %v926 = vld [vmem:[%s2 + $0x74] sm:$0xf]
      %v927 = vld [vmem:[%s2 + $0x80] sm:$0xf]
      %v928 = vld [vmem:[%s2 + $0x8c] sm:$0xf]
      %v929 = vld [vmem:[%s2 + $0x98] sm:$0xf]
      %v930 = vld [vmem:[%s2 + $0xa4] sm:$0xf]
      %v931 = vld [vmem:[%s2 + $0xb0] sm:$0xf]
      %v932 = vld [vmem:[%s2 + $0xbc] sm:$0xf]
      %v933 = vld [vmem:[%s3 + $0x2] sm:$0x1]
      %v935 = vlaneseq
      %v936 = vshrl.u32 %v935, 7
      %v937 = vsub.s32 0, %v936
      %v938 = vrot.slane %v933, %v937
      %v956 = vunpack.c.l.b16 %v917
      %v957 = vunpack.c.l.b16 %v918
      %v958 = vunpack.c.l.b16 %v919
      %v959 = vunpack.c.l.b16 %v920
      %v960 = vunpack.c.l.b16 %v921
      %v961 = vunpack.c.l.b16 %v922
      %v962 = vunpack.c.l.b16 %v923
      %v963 = vunpack.c.l.b16 %v924
      %v964 = vunpack.c.l.b16 %v925
      %v965 = vunpack.c.l.b16 %v926
      %v966 = vunpack.c.l.b16 %v927
      %v967 = vunpack.c.l.b16 %v928
      %v968 = vunpack.c.l.b16 %v929
      %v969 = vunpack.c.l.b16 %v930
      %v970 = vunpack.c.l.b16 %v931
      %v971 = vunpack.c.l.b16 %v932
      %v972 = vpack.c.b16 %v957, %v956
      %v973 = vpack.c.b16 %v959, %v958
      %v974 = vpack.c.b16 %v961, %v960
      %v975 = vpack.c.b16 %v963, %v962
      %v976 = vpack.c.b16 %v965, %v964
      %v977 = vpack.c.b16 %v967, %v966
      %v978 = vpack.c.b16 %v969, %v968
      %v979 = vpack.c.b16 %v971, %v970
      %988 = vmatprep.subr.bf16.mxu0 0
      %989 = vmatpush1.bf16.msra.mxu0 %v972
      %990 = vmatprep.subr.bf16.mxu0 0
      %991 = vmatpush1.bf16.msra.mxu0 %v973
      %992 = vmatprep.subr.bf16.mxu0 0
      %993 = vmatpush1.bf16.msra.mxu0 %v974
      %994 = vmatprep.subr.bf16.mxu0 0
      %995 = vmatpush1.bf16.msra.mxu0 %v975
      %996 = vmatprep.subr.bf16.mxu0 0
      %997 = vmatpush1.bf16.msra.mxu0 %v976
      %998 = vmatprep.subr.bf16.mxu0 0
      %999 = vmatpush1.bf16.msra.mxu0 %v977
      %1000 = vmatprep.subr.bf16.mxu0 0
      %1001 = vmatpush1.bf16.msra.mxu0 %v978
      %1002 = vmatprep.subr.bf16.mxu0 0
      %1003 = vmatpush1.bf16.msra.mxu0 %v979
      %1004 = vmatprep.subr.bf16.mxu0 0
      %1005 = vmatpush1.bf16.msra.mxu0 0
      %1006 = vmatprep.subr.bf16.mxu0 0
      %1007 = vmatpush1.bf16.msra.mxu0 0
      %1008 = vmatprep.subr.bf16.mxu0 0
      %1009 = vmatpush1.bf16.msra.mxu0 0
      %1010 = vmatprep.subr.bf16.mxu0 0
      %1011 = vmatpush1.bf16.msra.mxu0 0
      %1012 = vmatprep.subr.bf16.mxu0 0
      %1013 = vmatpush1.bf16.msra.mxu0 0
      %1014 = vmatprep.subr.bf16.mxu0 0
      %1015 = vmatpush1.bf16.msra.mxu0 0
      %1016 = vmatprep.subr.bf16.mxu0 0
      %1017 = vmatpush1.bf16.msra.mxu0 0
      %1018 = vmatprep.subr.bf16.mxu0 0
      %1019 = vmatpush1.bf16.msra.mxu0 0
      %1020 = vmatprep.mubr.bf16.mxu0 0
      %1021 = vmatmul.mubr.bf16.gmra.mrb[0].mxu0 %v413
      %v1022 = vpop.f32.mrb[0].mxu0
      %v1023 = vadd.f32 %v938, %v1022
      %v1024 = vpop.f32.mrb[0].mxu0
      %v1025 = vpop.f32.mrb[0].mxu0
      %v1026 = vadd.f32 %v938, %v1025
      %v1027 = vpop.f32.mrb[0].mxu0
      %1028 = vmatprep.mubr.bf16.mxu0 0
      %1029 = vmatmul.mubr.bf16.gmra.mrb[0].mxu0 %v414
      %v1030 = vpop.f32.mrb[0].mxu0
      %v1031 = vadd.f32 %v938, %v1030
      %v1032 = vpop.f32.mrb[0].mxu0
      %v1033 = vpop.f32.mrb[0].mxu0
      %v1034 = vadd.f32 %v938, %v1033
      %v1035 = vpop.f32.mrb[0].mxu0
      %1036 = vmatprep.mubr.bf16.mxu0 0
      %1037 = vmatmul.mubr.bf16.gmra.mrb[0].mxu0 %v415
      %v1038 = vpop.f32.mrb[0].mxu0
      %v1039 = vadd.f32 %v938, %v1038
      %v1040 = vpop.f32.mrb[0].mxu0
      %v1041 = vpop.f32.mrb[0].mxu0
      %v1042 = vadd.f32 %v938, %v1041
      %v1043 = vpop.f32.mrb[0].mxu0
      %1044 = vmatprep.mubr.bf16.mxu0 0
      %1045 = vmatmul.mubr.bf16.gmra.mrb[0].mxu0 %v416
      %v1046 = vpop.f32.mrb[0].mxu0
      %v1047 = vadd.f32 %v938, %v1046
      %v1048 = vpop.f32.mrb[0].mxu0
      %v1049 = vpop.f32.mrb[0].mxu0
      %v1050 = vadd.f32 %v938, %v1049
      %v1051 = vpop.f32.mrb[0].mxu0
      %1052 = vmatprep.mubr.bf16.mxu0 0
      %1053 = vmatmul.mubr.bf16.gmra.mrb[0].mxu0 %v417
      %v1054 = vpop.f32.mrb[0].mxu0
      %v1055 = vadd.f32 %v938, %v1054
      %v1056 = vpop.f32.mrb[0].mxu0
      %v1057 = vpop.f32.mrb[0].mxu0
      %v1058 = vadd.f32 %v938, %v1057
      %v1059 = vpop.f32.mrb[0].mxu0
      %1060 = vmatprep.mubr.bf16.mxu0 0
      %1061 = vmatmul.mubr.bf16.gmra.mrb[0].mxu0 %v418
      %v1062 = vpop.f32.mrb[0].mxu0
      %v1063 = vadd.f32 %v938, %v1062
      %v1064 = vpop.f32.mrb[0].mxu0
      %v1065 = vpop.f32.mrb[0].mxu0
      %v1066 = vadd.f32 %v938, %v1065
      %v1067 = vpop.f32.mrb[0].mxu0
      %1068 = vmatprep.mubr.bf16.mxu0 0
      %1069 = vmatmul.mubr.bf16.gmra.mrb[0].mxu0 %v419
      %v1070 = vpop.f32.mrb[0].mxu0
      %v1071 = vadd.f32 %v938, %v1070
      %v1072 = vpop.f32.mrb[0].mxu0
      %v1073 = vpop.f32.mrb[0].mxu0
      %v1074 = vadd.f32 %v938, %v1073
      %v1075 = vpop.f32.mrb[0].mxu0
      %1076 = vmatprep.mubr.bf16.mxu0 0
      %1077 = vmatmul.mubr.bf16.gmra.mrb[0].mxu0 %v420
      %v1078 = vpop.f32.mrb[0].mxu0
      %v1079 = vadd.f32 %v938, %v1078
      %v1080 = vpop.f32.mrb[0].mxu0
      %v1081 = vpop.f32.mrb[0].mxu0
      %v1082 = vadd.f32 %v938, %v1081
      %v1083 = vpop.f32.mrb[0].mxu0
      %1084 = vdwg.mxu0
      %v1085 = vpack.c.bf16 %v1026, %v1023
      %v1086 = vpack.c.bf16 %v1034, %v1031
      %v1087 = vpack.c.bf16 %v1042, %v1039
      %v1088 = vpack.c.bf16 %v1050, %v1047
      %v1089 = vpack.c.bf16 %v1058, %v1055
      %v1090 = vpack.c.bf16 %v1066, %v1063
      %v1091 = vpack.c.bf16 %v1074, %v1071
      %v1092 = vpack.c.bf16 %v1082, %v1079
      %v1101 = vunpack.c.l.b16 %v1085
      %v1102 = vunpack.c.h.b16 %v1085
      %v1103 = vunpack.c.l.b16 %v1086
      %v1104 = vunpack.c.h.b16 %v1086
      %v1105 = vunpack.c.l.b16 %v1087
      %v1106 = vunpack.c.h.b16 %v1087
      %v1107 = vunpack.c.l.b16 %v1088
      %v1108 = vunpack.c.h.b16 %v1088
      %v1109 = vunpack.c.l.b16 %v1089
      %v1110 = vunpack.c.h.b16 %v1089
      %v1111 = vunpack.c.l.b16 %v1090
      %v1112 = vunpack.c.h.b16 %v1090
      %v1113 = vunpack.c.l.b16 %v1091
      %v1114 = vunpack.c.h.b16 %v1091
      %v1115 = vunpack.c.l.b16 %v1092
      %v1116 = vunpack.c.h.b16 %v1092
      %v1117 = vpack.c.b16 %v1101, %v1101
      %v1118 = vpack.c.b16 %v1102, %v1102
      %v1119 = vpack.c.b16 %v1103, %v1103
      %v1120 = vpack.c.b16 %v1104, %v1104
      %v1121 = vpack.c.b16 %v1105, %v1105
      %v1122 = vpack.c.b16 %v1106, %v1106
      %v1123 = vpack.c.b16 %v1107, %v1107
      %v1124 = vpack.c.b16 %v1108, %v1108
      %v1125 = vpack.c.b16 %v1109, %v1109
      %v1126 = vpack.c.b16 %v1110, %v1110
      %v1127 = vpack.c.b16 %v1111, %v1111
      %v1128 = vpack.c.b16 %v1112, %v1112
      %v1129 = vpack.c.b16 %v1113, %v1113
      %v1130 = vpack.c.b16 %v1114, %v1114
      %v1131 = vpack.c.b16 %v1115, %v1115
      %v1132 = vpack.c.b16 %v1116, %v1116
      %1149 = vst [vmem:[%s353] sm:$0xf] %v1117
      %1150 = vst [vmem:[%s353 + $0x4] sm:$0xf] %v1118
      %1151 = vst [vmem:[%s353 + $0x8] sm:$0xf] %v1119
      %1152 = vst [vmem:[%s353 + $0xc] sm:$0xf] %v1120
      %1153 = vst [vmem:[%s353 + $0x10] sm:$0xf] %v1121
      %1154 = vst [vmem:[%s353 + $0x14] sm:$0xf] %v1122
      %1155 = vst [vmem:[%s353 + $0x18] sm:$0xf] %v1123
      %1156 = vst [vmem:[%s353 + $0x1c] sm:$0xf] %v1124
      %1157 = vst [vmem:[%s353 + $0x20] sm:$0xf] %v1125
      %1158 = vst [vmem:[%s353 + $0x24] sm:$0xf] %v1126
      %1159 = vst [vmem:[%s353 + $0x28] sm:$0xf] %v1127
      %1160 = vst [vmem:[%s353 + $0x2c] sm:$0xf] %v1128
      %1161 = vst [vmem:[%s353 + $0x30] sm:$0xf] %v1129
      %1162 = vst [vmem:[%s353 + $0x34] sm:$0xf] %v1130
      %1163 = vst [vmem:[%s353 + $0x38] sm:$0xf] %v1131
      %1164 = vst [vmem:[%s353 + $0x3c] sm:$0xf] %v1132
      %s1165 = smul.u32 16, %s23
      %p1166 = scmp.lt.s32.totalorder %s22, 1
      %s1167 = scalar_select %p1166, %s22, 1
      %p1168 = scmp.lt.s32.totalorder %s1165, 31
      %s1169 = scalar_select %p1168, %s1165, 31
      %s1170 = smul.addr %s1167, 32
      %s1171 = sadd.s32 %s1169, %s1170
      %s1172 = smul.addr %s1171, 4
      %s1173 = scalar_lea.vmem %s4, %s1172
      %s1174 = smul.u32 16, %s23
      %p1175 = scmp.lt.s32.totalorder %s22, 1
      %s1176 = scalar_select %p1175, %s22, 1
      %p1177 = scmp.lt.s32.totalorder %s1174, 31
      %s1178 = scalar_select %p1177, %s1174, 31
      %s1179 = smul.addr %s1176, 32
      %s1180 = sadd.s32 %s1178, %s1179
      %s1181 = smul.addr %s1180, 4
      %s1182 = scalar_lea.vmem %s5, %s1181
      %s1183 = smul.u32 16, %s23
      %p1184 = scmp.lt.s32.totalorder %s22, 1
      %s1185 = scalar_select %p1184, %s22, 1
      %p1186 = scmp.lt.s32.totalorder %s1183, 31
      %s1187 = scalar_select %p1186, %s1183, 31
      %s1188 = smul.addr %s1185, 32
      %s1189 = sadd.s32 %s1187, %s1188
      %s1190 = smul.addr %s1189, 4
      %s1191 = scalar_lea.vmem %s6, %s1190
      // Predicated region
      $region37: #{attn_block.4} parent=35 // pred_check
        %p1192 = pneg %p146
      $region38: #{attn_block.4} parent=35 // pred_check_branch
        %1194 = sbr.rel (%p1192) target = $region40
      $region39: #{attn_block.4} parent=35 // pred_region
        %s1195 = smul.u32 16, %s23
      $region40: #{attn_block.4} parent=35 // pred_fallthru
        _
      // Predicated region
      $region41: #{attn_block.4} parent=35 // pred_check
        %p1196 = pneg %p174
      $region42: #{attn_block.4} parent=35 // pred_check_branch
        %1198 = sbr.rel (%p1196) target = $region44
      $region43: #{attn_block.4} parent=35 // pred_region
        %s1199 = smul.u32 16, %s23
      $region44: #{attn_block.4} parent=35 // pred_fallthru
        _
      // Predicated region
      $region45: #{attn_block.4} parent=35 // pred_check
        %p1200 = pneg %p202
      $region46: #{attn_block.4} parent=35 // pred_check_branch
        %1202 = sbr.rel (%p1200) target = $region48
      $region47: #{attn_block.4} parent=35 // pred_region
        %s1203 = smul.u32 16, %s23
      $region48: #{attn_block.4} parent=35 // pred_fallthru
        _
    $region36: #{attn_block.4} parent=5 // pred_fallthru
      _
    %p1204 = scmp.le.s32.totalorder 2, %s13
    // Predicated region
    $region49: #{attn_block.4} parent=5 // pred_check
      %p1205 = pneg %p1204
    $region50: #{attn_block.4} parent=5 // pred_check_branch
      %1207 = sbr.rel (%p1205) target = $region52
    $region51: #{attn_block.4} parent=5 // pred_region
      %s1208 = ssub.s32 %s13, 2
      // Predicated region
      $region53: #{attn_block.4} parent=51 // pred_check
        %p1209 = pneg %p152
      $region54: #{attn_block.4} parent=51 // pred_check_branch
        %1211 = sbr.rel (%p1209) target = $region56
      $region55: #{attn_block.4} parent=51 // pred_region
        %s1212 = smul.u32 16, %s25
        %p1213 = scmp.lt.s32.totalorder %s24, 1
        %s1214 = scalar_select %p1213, %s24, 1
        %p1215 = scmp.lt.s32.totalorder %s1212, 31
        %s1216 = scalar_select %p1215, %s1212, 31
        %s1217 = smul.addr %s1214, 32
        %s1218 = sadd.s32 %s1216, %s1217
        %s1219 = smul.addr %s1218, 4
        %s1220 = scalar_lea.vmem %s4, %s1219
      $region56: #{attn_block.4} parent=51 // pred_fallthru
        _
      // Predicated region
      $region57: #{attn_block.4} parent=51 // pred_check
        %p1221 = pneg %p180
      $region58: #{attn_block.4} parent=51 // pred_check_branch
        %1223 = sbr.rel (%p1221) target = $region60
      $region59: #{attn_block.4} parent=51 // pred_region
        %s1224 = smul.u32 16, %s25
        %p1225 = scmp.lt.s32.totalorder %s24, 1
        %s1226 = scalar_select %p1225, %s24, 1
        %p1227 = scmp.lt.s32.totalorder %s1224, 31
        %s1228 = scalar_select %p1227, %s1224, 31
        %s1229 = smul.addr %s1226, 32
        %s1230 = sadd.s32 %s1228, %s1229
        %s1231 = smul.addr %s1230, 4
        %s1232 = scalar_lea.vmem %s5, %s1231
      $region60: #{attn_block.4} parent=51 // pred_fallthru
        _
      // Predicated region
      $region61: #{attn_block.4} parent=51 // pred_check
        %p1233 = pneg %p208
      $region62: #{attn_block.4} parent=51 // pred_check_branch
        %1235 = sbr.rel (%p1233) target = $region64
      $region63: #{attn_block.4} parent=51 // pred_region
        %s1236 = smul.u32 16, %s25
        %p1237 = scmp.lt.s32.totalorder %s24, 1
        %s1238 = scalar_select %p1237, %s24, 1
        %p1239 = scmp.lt.s32.totalorder %s1236, 31
        %s1240 = scalar_select %p1239, %s1236, 31
        %s1241 = smul.addr %s1238, 32
        %s1242 = sadd.s32 %s1240, %s1241
        %s1243 = smul.addr %s1242, 4
        %s1244 = scalar_lea.vmem %s6, %s1243
      $region64: #{attn_block.4} parent=51 // pred_fallthru
        _
    $region52: #{attn_block.4} parent=5 // pred_fallthru
      _
  $region6: #{attn_block.4} parent=0 // loop_footer
    %s17 = sadd.s32 1, %s13
  $region7: #{attn_block.4} parent=0 // loop_footer_branch
    %12 = sbr.rel target = $region3
  $region8: #{attn_block.4} parent=0 // loop_exit
    _

// kernel: attn_block.5
$region0: #{attn_block.5}
  #allocation0 [shape = 'u32[]', space=smem, size = 0x4, offset = 0x4, fixed_abs, tag = 'smem constant byte address 0x4 - core index']
  #allocation1 [shape = 'u32[144,128]{1,0:T(1,128)}', space=vmem, size = 0x12000, scoped, tag = 'internal scratch']
  #allocation2 [shape = 'f32[128,128]{1,0:T(8,128)}', space=vmem, size = 0x10000, scoped, tag = 'scratch operand']
  #allocation3 [shape = 'f32[128,128]{1,0:T(8,128)}', space=vmem, size = 0x10000, scoped, tag = 'scratch operand']
  #allocation4 [shape = 'f32[128,128]{1,0:T(8,128)}', space=vmem, size = 0x10000, scoped, tag = 'scratch operand']
  %s0 = inlined_call_operand.vmem [shape: f32[2,256,128], index: 0, kind: input, shape index: {}, may-alias: {0,6}]
  %s1 = inlined_call_operand.vmem [shape: bf16[2,256,128], index: 1, kind: input, shape index: {}]
  %s2 = inlined_call_operand.vmem [shape: bf16[2,256,128], index: 2, kind: input, shape index: {}]
  %s3 = inlined_call_operand.vmem [shape: bf16[2,256,128], index: 3, kind: input, shape index: {}]
  %s4 = inlined_call_operand.vmem [shape: bf16[128,128], index: 4, kind: input, shape index: {}]
  %s5 = inlined_call_operand.vmem [shape: f32[1,128], index: 5, kind: input, shape index: {}]
  %s6 = inlined_call_operand.vmem [shape: f32[2,256,128], index: 6, kind: output, shape index: {}, may-alias: {0,6}]
  %s7 = sld [smem:[#allocation0]]
  $region65: #{attn_block.5} parent=0
    _
  %s9 = ssub.s32 1, %s7
  %s10 = scalar_select 0, %s9, %s7
  loop: start=0, step=1, limit=10
  $region2: #{attn_block.5} parent=0 // loop_pre_header
    _
  $region3: #{attn_block.5} parent=0 // loop_header
    %s12 = sphi 0, %s16
    %p13 = scmp.ge.s32.totalorder %s12, 10
    %s19 = sphi 0, %s38
    %s20 = sphi 0, %s34
    %s21 = sphi 0, %s30
    %s22 = sphi 0, %s19
    %s23 = sphi 0, %s20
    %s24 = sphi 0, %s21
    %s25 = sphi 0, %s22
    %s26 = sphi 0, %s23
    %s27 = sphi 0, %s24
    %s43 = sphi 0, %s45
    %s46 = sphi 0, %s43
    %s47 = sphi 0, %s46
    %s63 = sphi 0, %s47
    %s71 = sphi 0, %s73
    %s74 = sphi 0, %s71
    %s75 = sphi 0, %s74
    %s91 = sphi 0, %s75
    %s99 = sphi 0, %s101
    %s102 = sphi 0, %s99
    %s103 = sphi 0, %s102
    %s119 = sphi 0, %s103
    %s127 = sphi 0, %s129
    %s130 = sphi 0, %s127
    %s131 = sphi 0, %s130
    %s147 = sphi 0, %s131
    %s151 = sphi 0, %s151
    %s153 = sphi 0, %s151
    %s154 = sphi 0, %s153
    %s168 = sphi 0, %s154
    %s172 = sphi 0, %s172
    %s174 = sphi 0, %s172
    %s175 = sphi 0, %s174
    %s189 = sphi 0, %s175
    %s197 = sphi 0, %s199
    %s200 = sphi 0, %s197
    %s201 = sphi 0, %s200
    %s217 = sphi 0, %s201
  $region4: #{attn_block.5} parent=0 // loop_header_branch
    %15 = sbr.rel (%p13) target = $region8
  $region5: #{attn_block.5} parent=0 // loop_body
    %s17 = ssub.s32 %s12, 1
    %s18 = ssub.s32 %s12, 2
    %s28 = sadd.s32 1, %s21
    %p29 = scmp.ge.s32.totalorder %s28, 2
    %s30 = scalar_select %p29, 0, %s28
    %s31 = sadd.s32 1, %s20
    %s32 = scalar_select %p29, %s31, %s20
    %p33 = scmp.ge.s32.totalorder %s32, 2
    %s34 = scalar_select %p33, 0, %s32
    %s35 = sadd.s32 1, %s19
    %s36 = scalar_select %p33, %s35, %s19
    %p37 = scmp.ge.s32.totalorder %s36, 2
    %s38 = scalar_select %p37, 0, %s36
    %s39 = ssub.s32 %s19, %s38
    %s40 = ssub.s32 %s20, %s34
    %s41 = sor.u32 %s39, %s40
    %p42 = scmp.eq.s32.totalorder %s41, 0
    %s44 = sadd.s32 %s43, 1
    %s45 = scalar_select %p42, %s43, %s44
    %p48 = pneg %p42
    %p49 = scmp.eq.s32.totalorder %s12, 7
    %p50 = por %p48, %p49
    %p51 = scmp.ne.s32.totalorder %s43, %s46
    %p52 = scmp.eq.s32.totalorder %s12, 0
    %p53 = por %p51, %p52
    %p54 = scmp.ne.s32.totalorder %s43, %s46
    %p55 = scmp.eq.s32.totalorder %s17, 7
    %p56 = por %p54, %p55
    %p57 = scmp.ne.s32.totalorder %s46, %s47
    %p58 = scmp.eq.s32.totalorder %s17, 0
    %p59 = por %p57, %p58
    %p60 = scmp.ne.s32.totalorder %s46, %s47
    %p61 = scmp.eq.s32.totalorder %s18, 7
    %p62 = por %p60, %p61
    %p64 = scmp.ne.s32.totalorder %s47, %s63
    %p65 = scmp.eq.s32.totalorder %s18, 0
    %p66 = por %p64, %p65
    %s67 = ssub.s32 %s19, %s38
    %s68 = ssub.s32 %s20, %s34
    %s69 = sor.u32 %s67, %s68
    %p70 = scmp.eq.s32.totalorder %s69, 0
    %s72 = sadd.s32 %s71, 1
    %s73 = scalar_select %p70, %s71, %s72
    %p76 = pneg %p70
    %p77 = scmp.eq.s32.totalorder %s12, 7
    %p78 = por %p76, %p77
    %p79 = scmp.ne.s32.totalorder %s71, %s74
    %p80 = scmp.eq.s32.totalorder %s12, 0
    %p81 = por %p79, %p80
    %p82 = scmp.ne.s32.totalorder %s71, %s74
    %p83 = scmp.eq.s32.totalorder %s17, 7
    %p84 = por %p82, %p83
    %p85 = scmp.ne.s32.totalorder %s74, %s75
    %p86 = scmp.eq.s32.totalorder %s17, 0
    %p87 = por %p85, %p86
    %p88 = scmp.ne.s32.totalorder %s74, %s75
    %p89 = scmp.eq.s32.totalorder %s18, 7
    %p90 = por %p88, %p89
    %p92 = scmp.ne.s32.totalorder %s75, %s91
    %p93 = scmp.eq.s32.totalorder %s18, 0
    %p94 = por %p92, %p93
    %s95 = ssub.s32 %s19, %s38
    %s96 = ssub.s32 %s21, %s30
    %s97 = sor.u32 %s95, %s96
    %p98 = scmp.eq.s32.totalorder %s97, 0
    %s100 = sadd.s32 %s99, 1
    %s101 = scalar_select %p98, %s99, %s100
    %p104 = pneg %p98
    %p105 = scmp.eq.s32.totalorder %s12, 7
    %p106 = por %p104, %p105
    %p107 = scmp.ne.s32.totalorder %s99, %s102
    %p108 = scmp.eq.s32.totalorder %s12, 0
    %p109 = por %p107, %p108
    %p110 = scmp.ne.s32.totalorder %s99, %s102
    %p111 = scmp.eq.s32.totalorder %s17, 7
    %p112 = por %p110, %p111
    %p113 = scmp.ne.s32.totalorder %s102, %s103
    %p114 = scmp.eq.s32.totalorder %s17, 0
    %p115 = por %p113, %p114
    %p116 = scmp.ne.s32.totalorder %s102, %s103
    %p117 = scmp.eq.s32.totalorder %s18, 7
    %p118 = por %p116, %p117
    %p120 = scmp.ne.s32.totalorder %s103, %s119
    %p121 = scmp.eq.s32.totalorder %s18, 0
    %p122 = por %p120, %p121
    %s123 = ssub.s32 %s19, %s38
    %s124 = ssub.s32 %s21, %s30
    %s125 = sor.u32 %s123, %s124
    %p126 = scmp.eq.s32.totalorder %s125, 0
    %s128 = sadd.s32 %s127, 1
    %s129 = scalar_select %p126, %s127, %s128
    %p132 = pneg %p126
    %p133 = scmp.eq.s32.totalorder %s12, 7
    %p134 = por %p132, %p133
    %p135 = scmp.ne.s32.totalorder %s127, %s130
    %p136 = scmp.eq.s32.totalorder %s12, 0
    %p137 = por %p135, %p136
    %p138 = scmp.ne.s32.totalorder %s127, %s130
    %p139 = scmp.eq.s32.totalorder %s17, 7
    %p140 = por %p138, %p139
    %p141 = scmp.ne.s32.totalorder %s130, %s131
    %p142 = scmp.eq.s32.totalorder %s17, 0
    %p143 = por %p141, %p142
    %p144 = scmp.ne.s32.totalorder %s130, %s131
    %p145 = scmp.eq.s32.totalorder %s18, 7
    %p146 = por %p144, %p145
    %p148 = scmp.ne.s32.totalorder %s131, %s147
    %p149 = scmp.eq.s32.totalorder %s18, 0
    %p150 = por %p148, %p149
    %s152 = sadd.s32 %s151, 1
    %p155 = scmp.eq.s32.totalorder %s12, 7
    %p156 = scmp.ne.s32.totalorder %s151, %s153
    %p157 = scmp.eq.s32.totalorder %s12, 0
    %p158 = por %p156, %p157
    %p159 = scmp.ne.s32.totalorder %s151, %s153
    %p160 = scmp.eq.s32.totalorder %s17, 7
    %p161 = por %p159, %p160
    %p162 = scmp.ne.s32.totalorder %s153, %s154
    %p163 = scmp.eq.s32.totalorder %s17, 0
    %p164 = por %p162, %p163
    %p165 = scmp.ne.s32.totalorder %s153, %s154
    %p166 = scmp.eq.s32.totalorder %s18, 7
    %p167 = por %p165, %p166
    %p169 = scmp.ne.s32.totalorder %s154, %s168
    %p170 = scmp.eq.s32.totalorder %s18, 0
    %p171 = por %p169, %p170
    %s173 = sadd.s32 %s172, 1
    %p176 = scmp.eq.s32.totalorder %s12, 7
    %p177 = scmp.ne.s32.totalorder %s172, %s174
    %p178 = scmp.eq.s32.totalorder %s12, 0
    %p179 = por %p177, %p178
    %p180 = scmp.ne.s32.totalorder %s172, %s174
    %p181 = scmp.eq.s32.totalorder %s17, 7
    %p182 = por %p180, %p181
    %p183 = scmp.ne.s32.totalorder %s174, %s175
    %p184 = scmp.eq.s32.totalorder %s17, 0
    %p185 = por %p183, %p184
    %p186 = scmp.ne.s32.totalorder %s174, %s175
    %p187 = scmp.eq.s32.totalorder %s18, 7
    %p188 = por %p186, %p187
    %p190 = scmp.ne.s32.totalorder %s175, %s189
    %p191 = scmp.eq.s32.totalorder %s18, 0
    %p192 = por %p190, %p191
    %s193 = ssub.s32 %s19, %s38
    %s194 = ssub.s32 %s20, %s34
    %s195 = sor.u32 %s193, %s194
    %p196 = scmp.eq.s32.totalorder %s195, 0
    %s198 = sadd.s32 %s197, 1
    %s199 = scalar_select %p196, %s197, %s198
    %p202 = pneg %p196
    %p203 = scmp.eq.s32.totalorder %s12, 7
    %p204 = por %p202, %p203
    %p205 = scmp.ne.s32.totalorder %s197, %s200
    %p206 = scmp.eq.s32.totalorder %s12, 0
    %p207 = por %p205, %p206
    %p208 = scmp.ne.s32.totalorder %s197, %s200
    %p209 = scmp.eq.s32.totalorder %s17, 7
    %p210 = por %p208, %p209
    %p211 = scmp.ne.s32.totalorder %s200, %s201
    %p212 = scmp.eq.s32.totalorder %s17, 0
    %p213 = por %p211, %p212
    %p214 = scmp.ne.s32.totalorder %s200, %s201
    %p215 = scmp.eq.s32.totalorder %s18, 7
    %p216 = por %p214, %p215
    %p218 = scmp.ne.s32.totalorder %s201, %s217
    %p219 = scmp.eq.s32.totalorder %s18, 0
    %p220 = por %p218, %p219
    %p221 = scmp.le.s32.totalorder 1, %s12
    %p222 = scmp.lt.s32.totalorder %s12, 9
    %p223 = pnand %p221, %p222
    %p224 = pneg %p223
    // Predicated region
    $region9: #{attn_block.5} parent=5 // pred_check
      _
    $region10: #{attn_block.5} parent=5 // pred_check_branch
      %226 = sbr.rel (%p223) target = $region12
    $region11: #{attn_block.5} parent=5 // pred_region
      %s227 = ssub.s32 %s12, 1
      // Predicated region
      $region13: #{attn_block.5} parent=11 // pred_check
        %p228 = pneg %p164
      $region14: #{attn_block.5} parent=11 // pred_check_branch
        %230 = sbr.rel (%p228) target = $region16
      $region15: #{attn_block.5} parent=11 // pred_region
        _
      $region16: #{attn_block.5} parent=11 // pred_fallthru
        _
      // Predicated region
      $region17: #{attn_block.5} parent=11 // pred_check
        %p231 = pneg %p185
      $region18: #{attn_block.5} parent=11 // pred_check_branch
        %233 = sbr.rel (%p231) target = $region20
      $region19: #{attn_block.5} parent=11 // pred_region
        _
      $region20: #{attn_block.5} parent=11 // pred_fallthru
        _
    $region12: #{attn_block.5} parent=5 // pred_fallthru
      _
    %p234 = scmp.lt.s32.totalorder %s12, 8
    // Predicated region
    $region21: #{attn_block.5} parent=5 // pred_check
      %p235 = pneg %p234
    $region22: #{attn_block.5} parent=5 // pred_check_branch
      %237 = sbr.rel (%p235) target = $region24
    $region23: #{attn_block.5} parent=5 // pred_region
      // Predicated region
      $region25: #{attn_block.5} parent=23 // pred_check
        %p238 = pneg %p53
      $region26: #{attn_block.5} parent=23 // pred_check_branch
        %240 = sbr.rel (%p238) target = $region28
      $region27: #{attn_block.5} parent=23 // pred_region
        %s241 = smul.u32 16, %s20
        %p242 = scmp.lt.s32.totalorder %s19, 1
        %s243 = scalar_select %p242, %s19, 1
        %p244 = scmp.lt.s32.totalorder %s241, 31
        %s245 = scalar_select %p244, %s241, 31
        %s246 = smul.addr %s243, 32
        %s247 = sadd.s32 %s245, %s246
        %s248 = smul.addr %s247, 8
        %s249 = scalar_lea.vmem %s0, %s248
        %s250 = smul.u32 16, %s20
      $region28: #{attn_block.5} parent=23 // pred_fallthru
        _
      // Predicated region
      $region29: #{attn_block.5} parent=23 // pred_check
        %p251 = pneg %p81
      $region30: #{attn_block.5} parent=23 // pred_check_branch
        %253 = sbr.rel (%p251) target = $region32
      $region31: #{attn_block.5} parent=23 // pred_region
        %s254 = smul.u32 16, %s20
        %p255 = scmp.lt.s32.totalorder %s19, 1
        %s256 = scalar_select %p255, %s19, 1
        %p257 = scmp.lt.s32.totalorder %s254, 31
        %s258 = scalar_select %p257, %s254, 31
        %s259 = smul.addr %s256, 32
        %s260 = sadd.s32 %s258, %s259
        %s261 = smul.addr %s260, 4
        %s262 = scalar_lea.vmem %s1, %s261
        %s263 = smul.u32 16, %s20
      $region32: #{attn_block.5} parent=23 // pred_fallthru
        _
      // Predicated region
      $region33: #{attn_block.5} parent=23 // pred_check
        %p264 = pneg %p109
      $region34: #{attn_block.5} parent=23 // pred_check_branch
        %266 = sbr.rel (%p264) target = $region36
      $region35: #{attn_block.5} parent=23 // pred_region
        %s267 = smul.u32 16, %s21
        %p268 = scmp.lt.s32.totalorder %s19, 1
        %s269 = scalar_select %p268, %s19, 1
        %p270 = scmp.lt.s32.totalorder %s267, 31
        %s271 = scalar_select %p270, %s267, 31
        %s272 = smul.addr %s269, 32
        %s273 = sadd.s32 %s271, %s272
        %s274 = smul.addr %s273, 4
        %s275 = scalar_lea.vmem %s2, %s274
        %s276 = smul.u32 16, %s21
      $region36: #{attn_block.5} parent=23 // pred_fallthru
        _
      // Predicated region
      $region37: #{attn_block.5} parent=23 // pred_check
        %p277 = pneg %p137
      $region38: #{attn_block.5} parent=23 // pred_check_branch
        %279 = sbr.rel (%p277) target = $region40
      $region39: #{attn_block.5} parent=23 // pred_region
        %s280 = smul.u32 16, %s21
        %p281 = scmp.lt.s32.totalorder %s19, 1
        %s282 = scalar_select %p281, %s19, 1
        %p283 = scmp.lt.s32.totalorder %s280, 31
        %s284 = scalar_select %p283, %s280, 31
        %s285 = smul.addr %s282, 32
        %s286 = sadd.s32 %s284, %s285
        %s287 = smul.addr %s286, 4
        %s288 = scalar_lea.vmem %s3, %s287
        %s289 = smul.u32 16, %s21
      $region40: #{attn_block.5} parent=23 // pred_fallthru
        _
    $region24: #{attn_block.5} parent=5 // pred_fallthru
      _
    %p290 = scmp.le.s32.totalorder 1, %s12
    %p291 = scmp.lt.s32.totalorder %s12, 9
    %p292 = pnand %p290, %p291
    %p293 = pneg %p292
    // Predicated region
    $region41: #{attn_block.5} parent=5 // pred_check
      _
    $region42: #{attn_block.5} parent=5 // pred_check_branch
      %295 = sbr.rel (%p292) target = $region44
    $region43: #{attn_block.5} parent=5 // pred_region
      %s296 = ssub.s32 %s12, 1
      %s297 = smul.u32 16, %s23
      %p298 = scmp.lt.s32.totalorder %s22, 1
      %s299 = scalar_select %p298, %s22, 1
      %p300 = scmp.lt.s32.totalorder %s297, 31
      %s301 = scalar_select %p300, %s297, 31
      %s302 = smul.addr %s299, 32
      %s303 = sadd.s32 %s301, %s302
      %s304 = smul.addr %s303, 8
      %s305 = scalar_lea.vmem %s0, %s304
      %p306 = pneg %p59
      %p307 = pneg %p56
      %s308 = smul.u32 16, %s23
      %p309 = scmp.lt.s32.totalorder %s22, 1
      %s310 = scalar_select %p309, %s22, 1
      %p311 = scmp.lt.s32.totalorder %s308, 31
      %s312 = scalar_select %p311, %s308, 31
      %s313 = smul.addr %s310, 32
      %s314 = sadd.s32 %s312, %s313
      %s315 = smul.addr %s314, 4
      %s316 = scalar_lea.vmem %s1, %s315
      %p317 = pneg %p87
      %p318 = pneg %p84
      %s319 = smul.u32 16, %s24
      %p320 = scmp.lt.s32.totalorder %s22, 1
      %s321 = scalar_select %p320, %s22, 1
      %p322 = scmp.lt.s32.totalorder %s319, 31
      %s323 = scalar_select %p322, %s319, 31
      %s324 = smul.addr %s321, 32
      %s325 = sadd.s32 %s323, %s324
      %s326 = smul.addr %s325, 4
      %s327 = scalar_lea.vmem %s2, %s326
      %p328 = pneg %p115
      %p329 = pneg %p112
      %s330 = smul.u32 16, %s24
      %p331 = scmp.lt.s32.totalorder %s22, 1
      %s332 = scalar_select %p331, %s22, 1
      %p333 = scmp.lt.s32.totalorder %s330, 31
      %s334 = scalar_select %p333, %s330, 31
      %s335 = smul.addr %s332, 32
      %s336 = sadd.s32 %s334, %s335
      %s337 = smul.addr %s336, 4
      %s338 = scalar_lea.vmem %s3, %s337
      %p339 = pneg %p143
      %p340 = pneg %p140
      %p341 = pneg %p164
      %p342 = pneg %p161
      %p343 = pneg %p185
      %p344 = pneg %p182
      %p345 = pneg %p213
      %p346 = pneg %p210
      %s347 = smul.u32 16, %s23
      %p348 = scmp.lt.s32.totalorder %s22, 1
      %s349 = scalar_select %p348, %s22, 1
      %p350 = scmp.lt.s32.totalorder %s347, 31
      %s351 = scalar_select %p350, %s347, 31
      %s352 = smul.addr %s349, 32
      %s353 = sadd.s32 %s351, %s352
      %s354 = smul.addr %s353, 8
      %s355 = scalar_lea.vmem %s6, %s354
      %s356 = smul.u32 16, %s23
      %p357 = scmp.lt.s32.totalorder %s22, 1
      %s358 = scalar_select %p357, %s22, 1
      %p359 = scmp.lt.s32.totalorder %s356, 31
      %s360 = scalar_select %p359, %s356, 31
      %s361 = smul.addr %s358, 32
      %s362 = sadd.s32 %s360, %s361
      %s363 = smul.addr %s362, 8
      %s364 = scalar_lea.vmem %s0, %s363
      %s365 = smul.u32 16, %s23
      %s366 = smul.u32 16, %s23
      %p367 = scmp.lt.s32.totalorder %s22, 1
      %s368 = scalar_select %p367, %s22, 1
      %p369 = scmp.lt.s32.totalorder %s366, 31
      %s370 = scalar_select %p369, %s366, 31
      %s371 = smul.addr %s368, 32
      %s372 = sadd.s32 %s370, %s371
      %s373 = smul.addr %s372, 4
      %s374 = scalar_lea.vmem %s1, %s373
      %s375 = smul.u32 16, %s23
      %s376 = smul.u32 16, %s24
      %p377 = scmp.lt.s32.totalorder %s22, 1
      %s378 = scalar_select %p377, %s22, 1
      %p379 = scmp.lt.s32.totalorder %s376, 31
      %s380 = scalar_select %p379, %s376, 31
      %s381 = smul.addr %s378, 32
      %s382 = sadd.s32 %s380, %s381
      %s383 = smul.addr %s382, 4
      %s384 = scalar_lea.vmem %s2, %s383
      %s385 = smul.u32 16, %s24
      %s386 = smul.u32 16, %s24
      %p387 = scmp.lt.s32.totalorder %s22, 1
      %s388 = scalar_select %p387, %s22, 1
      %p389 = scmp.lt.s32.totalorder %s386, 31
      %s390 = scalar_select %p389, %s386, 31
      %s391 = smul.addr %s388, 32
      %s392 = sadd.s32 %s390, %s391
      %s393 = smul.addr %s392, 4
      %s394 = scalar_lea.vmem %s3, %s393
      %s395 = smul.u32 16, %s24
      %s396 = smul.u32 16, %s23
      %p397 = scmp.lt.s32.totalorder %s22, 1
      %s398 = scalar_select %p397, %s22, 1
      %p399 = scmp.lt.s32.totalorder %s396, 31
      %s400 = scalar_select %p399, %s396, 31
      %s401 = smul.addr %s398, 32
      %s402 = sadd.s32 %s400, %s401
      %s403 = smul.addr %s402, 8
      %s404 = scalar_lea.vmem %s6, %s403
      %s405 = smul.u32 16, %s23
      %p407 = scmp.eq.s32.totalorder %s24, 0
      // Predicated region
      $region45: #{attn_block.5} parent=43 // pred_check
        %p408 = pneg %p407
      $region46: #{attn_block.5} parent=43 // pred_check_branch
        %410 = sbr.rel (%p408) target = $region48
      $region47: #{attn_block.5} parent=43 // pred_region
        %411 = vst [vmem:[#allocation2] sm:$0xff] -inf
        %412 = vst [vmem:[#allocation2 + $0x8] sm:$0xff] -inf
        %413 = vst [vmem:[#allocation2 + $0x10] sm:$0xff] -inf
        %414 = vst [vmem:[#allocation2 + $0x18] sm:$0xff] -inf
        %415 = vst [vmem:[#allocation2 + $0x20] sm:$0xff] -inf
        %416 = vst [vmem:[#allocation2 + $0x28] sm:$0xff] -inf
        %417 = vst [vmem:[#allocation2 + $0x30] sm:$0xff] -inf
        %418 = vst [vmem:[#allocation2 + $0x38] sm:$0xff] -inf
        %419 = vst [vmem:[#allocation2 + $0x40] sm:$0xff] -inf
        %420 = vst [vmem:[#allocation2 + $0x48] sm:$0xff] -inf
        %421 = vst [vmem:[#allocation2 + $0x50] sm:$0xff] -inf
        %422 = vst [vmem:[#allocation2 + $0x58] sm:$0xff] -inf
        %423 = vst [vmem:[#allocation2 + $0x60] sm:$0xff] -inf
        %424 = vst [vmem:[#allocation2 + $0x68] sm:$0xff] -inf
        %425 = vst [vmem:[#allocation2 + $0x70] sm:$0xff] -inf
        %426 = vst [vmem:[#allocation2 + $0x78] sm:$0xff] -inf
        %427 = vst [vmem:[#allocation3] sm:$0xff] 0.0
        %428 = vst [vmem:[#allocation3 + $0x8] sm:$0xff] 0.0
        %429 = vst [vmem:[#allocation3 + $0x10] sm:$0xff] 0.0
        %430 = vst [vmem:[#allocation3 + $0x18] sm:$0xff] 0.0
        %431 = vst [vmem:[#allocation3 + $0x20] sm:$0xff] 0.0
        %432 = vst [vmem:[#allocation3 + $0x28] sm:$0xff] 0.0
        %433 = vst [vmem:[#allocation3 + $0x30] sm:$0xff] 0.0
        %434 = vst [vmem:[#allocation3 + $0x38] sm:$0xff] 0.0
        %435 = vst [vmem:[#allocation3 + $0x40] sm:$0xff] 0.0
        %436 = vst [vmem:[#allocation3 + $0x48] sm:$0xff] 0.0
        %437 = vst [vmem:[#allocation3 + $0x50] sm:$0xff] 0.0
        %438 = vst [vmem:[#allocation3 + $0x58] sm:$0xff] 0.0
        %439 = vst [vmem:[#allocation3 + $0x60] sm:$0xff] 0.0
        %440 = vst [vmem:[#allocation3 + $0x68] sm:$0xff] 0.0
        %441 = vst [vmem:[#allocation3 + $0x70] sm:$0xff] 0.0
        %442 = vst [vmem:[#allocation3 + $0x78] sm:$0xff] 0.0
        %443 = vst [vmem:[#allocation4] sm:$0xff] 0.0
        %444 = vst [vmem:[#allocation4 + $0x8] sm:$0xff] 0.0
        %445 = vst [vmem:[#allocation4 + $0x10] sm:$0xff] 0.0
        %446 = vst [vmem:[#allocation4 + $0x18] sm:$0xff] 0.0
        %447 = vst [vmem:[#allocation4 + $0x20] sm:$0xff] 0.0
        %448 = vst [vmem:[#allocation4 + $0x28] sm:$0xff] 0.0
        %449 = vst [vmem:[#allocation4 + $0x30] sm:$0xff] 0.0
        %450 = vst [vmem:[#allocation4 + $0x38] sm:$0xff] 0.0
        %451 = vst [vmem:[#allocation4 + $0x40] sm:$0xff] 0.0
        %452 = vst [vmem:[#allocation4 + $0x48] sm:$0xff] 0.0
        %453 = vst [vmem:[#allocation4 + $0x50] sm:$0xff] 0.0
        %454 = vst [vmem:[#allocation4 + $0x58] sm:$0xff] 0.0
        %455 = vst [vmem:[#allocation4 + $0x60] sm:$0xff] 0.0
        %456 = vst [vmem:[#allocation4 + $0x68] sm:$0xff] 0.0
        %457 = vst [vmem:[#allocation4 + $0x70] sm:$0xff] 0.0
        %458 = vst [vmem:[#allocation4 + $0x78] sm:$0xff] 0.0
      $region48: #{attn_block.5} parent=43 // pred_fallthru
        _
      %v459 = vld [vmem:[%s374] sm:$0xf]
      %v460 = vld [vmem:[%s374 + $0x4] sm:$0xf]
      %v461 = vld [vmem:[%s374 + $0x8] sm:$0xf]
      %v462 = vld [vmem:[%s374 + $0xc] sm:$0xf]
      %v463 = vld [vmem:[%s374 + $0x10] sm:$0xf]
      %v464 = vld [vmem:[%s374 + $0x14] sm:$0xf]
      %v465 = vld [vmem:[%s374 + $0x18] sm:$0xf]
      %v466 = vld [vmem:[%s374 + $0x1c] sm:$0xf]
      %v467 = vld [vmem:[%s374 + $0x20] sm:$0xf]
      %v468 = vld [vmem:[%s374 + $0x24] sm:$0xf]
      %v469 = vld [vmem:[%s374 + $0x28] sm:$0xf]
      %v470 = vld [vmem:[%s374 + $0x2c] sm:$0xf]
      %v471 = vld [vmem:[%s374 + $0x30] sm:$0xf]
      %v472 = vld [vmem:[%s374 + $0x34] sm:$0xf]
      %v473 = vld [vmem:[%s374 + $0x38] sm:$0xf]
      %v474 = vld [vmem:[%s374 + $0x3c] sm:$0xf]
      %v475 = vld [vmem:[%s384] sm:$0xf]
      %v476 = vld [vmem:[%s384 + $0x4] sm:$0xf]
      %v477 = vld [vmem:[%s384 + $0x8] sm:$0xf]
      %v478 = vld [vmem:[%s384 + $0xc] sm:$0xf]
      %v479 = vld [vmem:[%s384 + $0x10] sm:$0xf]
      %v480 = vld [vmem:[%s384 + $0x14] sm:$0xf]
      %v481 = vld [vmem:[%s384 + $0x18] sm:$0xf]
      %v482 = vld [vmem:[%s384 + $0x1c] sm:$0xf]
      %v483 = vld [vmem:[%s384 + $0x20] sm:$0xf]
      %v484 = vld [vmem:[%s384 + $0x24] sm:$0xf]
      %v485 = vld [vmem:[%s384 + $0x28] sm:$0xf]
      %v486 = vld [vmem:[%s384 + $0x2c] sm:$0xf]
      %v487 = vld [vmem:[%s384 + $0x30] sm:$0xf]
      %v488 = vld [vmem:[%s384 + $0x34] sm:$0xf]
      %v489 = vld [vmem:[%s384 + $0x38] sm:$0xf]
      %v490 = vld [vmem:[%s384 + $0x3c] sm:$0xf]
      %v507 = vunpack.c.l.b16 %v459
      %v508 = vunpack.c.l.b16 %v460
      %v509 = vunpack.c.l.b16 %v461
      %v510 = vunpack.c.l.b16 %v462
      %v511 = vunpack.c.l.b16 %v463
      %v512 = vunpack.c.l.b16 %v464
      %v513 = vunpack.c.l.b16 %v465
      %v514 = vunpack.c.l.b16 %v466
      %v515 = vunpack.c.l.b16 %v467
      %v516 = vunpack.c.l.b16 %v468
      %v517 = vunpack.c.l.b16 %v469
      %v518 = vunpack.c.l.b16 %v470
      %v519 = vunpack.c.l.b16 %v471
      %v520 = vunpack.c.l.b16 %v472
      %v521 = vunpack.c.l.b16 %v473
      %v522 = vunpack.c.l.b16 %v474
      %v523 = vpack.c.b16 %v508, %v507
      %v524 = vpack.c.b16 %v510, %v509
      %v525 = vpack.c.b16 %v512, %v511
      %v526 = vpack.c.b16 %v514, %v513
      %v527 = vpack.c.b16 %v516, %v515
      %v528 = vpack.c.b16 %v518, %v517
      %v529 = vpack.c.b16 %v520, %v519
      %v530 = vpack.c.b16 %v522, %v521
      %v555 = vunpack.c.l.b16 %v475
      %v556 = vunpack.c.l.b16 %v476
      %v557 = vunpack.c.l.b16 %v477
      %v558 = vunpack.c.l.b16 %v478
      %v559 = vunpack.c.l.b16 %v479
      %v560 = vunpack.c.l.b16 %v480
      %v561 = vunpack.c.l.b16 %v481
      %v562 = vunpack.c.l.b16 %v482
      %v563 = vunpack.c.l.b16 %v483
      %v564 = vunpack.c.l.b16 %v484
      %v565 = vunpack.c.l.b16 %v485
      %v566 = vunpack.c.l.b16 %v486
      %v567 = vunpack.c.l.b16 %v487
      %v568 = vunpack.c.l.b16 %v488
      %v569 = vunpack.c.l.b16 %v489
      %v570 = vunpack.c.l.b16 %v490
      %v571 = vpack.c.b16 %v556, %v555
      %v572 = vpack.c.b16 %v558, %v557
      %v573 = vpack.c.b16 %v560, %v559
      %v574 = vpack.c.b16 %v562, %v561
      %v575 = vpack.c.b16 %v564, %v563
      %v576 = vpack.c.b16 %v566, %v565
      %v577 = vpack.c.b16 %v568, %v567
      %v578 = vpack.c.b16 %v570, %v569
      %587 = vmatprep.subr.bf16.mxu0 0
      %588 = vmatpush1.bf16.xpose.msra.mxu0 %v571
      %589 = vmatprep.subr.bf16.mxu0 0
      %590 = vmatpush1.bf16.xpose.msra.mxu0 %v572
      %591 = vmatprep.subr.bf16.mxu0 0
      %592 = vmatpush1.bf16.xpose.msra.mxu0 %v573
      %593 = vmatprep.subr.bf16.mxu0 0
      %594 = vmatpush1.bf16.xpose.msra.mxu0 %v574
      %595 = vmatprep.subr.bf16.mxu0 0
      %596 = vmatpush1.bf16.xpose.msra.mxu0 %v575
      %597 = vmatprep.subr.bf16.mxu0 0
      %598 = vmatpush1.bf16.xpose.msra.mxu0 %v576
      %599 = vmatprep.subr.bf16.mxu0 0
      %600 = vmatpush1.bf16.xpose.msra.mxu0 %v577
      %601 = vmatprep.subr.bf16.mxu0 0
      %602 = vmatpush1.bf16.xpose.msra.mxu0 %v578
      %603 = vmatprep.subr.bf16.mxu0 0
      %604 = vmatpush1.bf16.xpose.msra.mxu0 0
      %605 = vmatprep.subr.bf16.mxu0 0
      %606 = vmatpush1.bf16.xpose.msra.mxu0 0
      %607 = vmatprep.subr.bf16.mxu0 0
      %608 = vmatpush1.bf16.xpose.msra.mxu0 0
      %609 = vmatprep.subr.bf16.mxu0 0
      %610 = vmatpush1.bf16.xpose.msra.mxu0 0
      %611 = vmatprep.subr.bf16.mxu0 0
      %612 = vmatpush1.bf16.xpose.msra.mxu0 0
      %613 = vmatprep.subr.bf16.mxu0 0
      %614 = vmatpush1.bf16.xpose.msra.mxu0 0
      %615 = vmatprep.subr.bf16.mxu0 0
      %616 = vmatpush1.bf16.xpose.msra.mxu0 0
      %617 = vmatprep.subr.bf16.mxu0 0
      %618 = vmatpush1.bf16.xpose.msra.mxu0 0
      %619 = vmatprep.mubr.bf16.mxu0 0
      %620 = vmatmul.mubr.bf16.gmra.mrb[0].mxu0 %v523
      %v621 = vpop.f32.mrb[0].mxu0
      %v622 = vadd.f32 0.0, %v621
      %v623 = vpop.f32.mrb[0].mxu0
      %v624 = vpop.f32.mrb[0].mxu0
      %v625 = vadd.f32 0.0, %v624
      %v626 = vpop.f32.mrb[0].mxu0
      %627 = vmatprep.mubr.bf16.mxu0 0
      %628 = vmatmul.mubr.bf16.gmra.mrb[0].mxu0 %v524
      %v629 = vpop.f32.mrb[0].mxu0
      %v630 = vadd.f32 0.0, %v629
      %v631 = vpop.f32.mrb[0].mxu0
      %v632 = vpop.f32.mrb[0].mxu0
      %v633 = vadd.f32 0.0, %v632
      %v634 = vpop.f32.mrb[0].mxu0
      %635 = vmatprep.mubr.bf16.mxu0 0
      %636 = vmatmul.mubr.bf16.gmra.mrb[0].mxu0 %v525
      %v637 = vpop.f32.mrb[0].mxu0
      %v638 = vadd.f32 0.0, %v637
      %v639 = vpop.f32.mrb[0].mxu0
      %v640 = vpop.f32.mrb[0].mxu0
      %v641 = vadd.f32 0.0, %v640
      %v642 = vpop.f32.mrb[0].mxu0
      %643 = vmatprep.mubr.bf16.mxu0 0
      %644 = vmatmul.mubr.bf16.gmra.mrb[0].mxu0 %v526
      %v645 = vpop.f32.mrb[0].mxu0
      %v646 = vadd.f32 0.0, %v645
      %v647 = vpop.f32.mrb[0].mxu0
      %v648 = vpop.f32.mrb[0].mxu0
      %v649 = vadd.f32 0.0, %v648
      %v650 = vpop.f32.mrb[0].mxu0
      %651 = vmatprep.mubr.bf16.mxu0 0
      %652 = vmatmul.mubr.bf16.gmra.mrb[0].mxu0 %v527
      %v653 = vpop.f32.mrb[0].mxu0
      %v654 = vadd.f32 0.0, %v653
      %v655 = vpop.f32.mrb[0].mxu0
      %v656 = vpop.f32.mrb[0].mxu0
      %v657 = vadd.f32 0.0, %v656
      %v658 = vpop.f32.mrb[0].mxu0
      %659 = vmatprep.mubr.bf16.mxu0 0
      %660 = vmatmul.mubr.bf16.gmra.mrb[0].mxu0 %v528
      %v661 = vpop.f32.mrb[0].mxu0
      %v662 = vadd.f32 0.0, %v661
      %v663 = vpop.f32.mrb[0].mxu0
      %v664 = vpop.f32.mrb[0].mxu0
      %v665 = vadd.f32 0.0, %v664
      %v666 = vpop.f32.mrb[0].mxu0
      %667 = vmatprep.mubr.bf16.mxu0 0
      %668 = vmatmul.mubr.bf16.gmra.mrb[0].mxu0 %v529
      %v669 = vpop.f32.mrb[0].mxu0
      %v670 = vadd.f32 0.0, %v669
      %v671 = vpop.f32.mrb[0].mxu0
      %v672 = vpop.f32.mrb[0].mxu0
      %v673 = vadd.f32 0.0, %v672
      %v674 = vpop.f32.mrb[0].mxu0
      %675 = vmatprep.mubr.bf16.mxu0 0
      %676 = vmatmul.mubr.bf16.gmra.mrb[0].mxu0 %v530
      %v677 = vpop.f32.mrb[0].mxu0
      %v678 = vadd.f32 0.0, %v677
      %v679 = vpop.f32.mrb[0].mxu0
      %v680 = vpop.f32.mrb[0].mxu0
      %v681 = vadd.f32 0.0, %v680
      %v682 = vpop.f32.mrb[0].mxu0
      %683 = vdwg.mxu0
      %v684 = vld [vmem:[#allocation2] sm:$0xff]
      %v685 = vld [vmem:[#allocation2 + $0x8] sm:$0xff]
      %v686 = vld [vmem:[#allocation2 + $0x10] sm:$0xff]
      %v687 = vld [vmem:[#allocation2 + $0x18] sm:$0xff]
      %v688 = vld [vmem:[#allocation2 + $0x20] sm:$0xff]
      %v689 = vld [vmem:[#allocation2 + $0x28] sm:$0xff]
      %v690 = vld [vmem:[#allocation2 + $0x30] sm:$0xff]
      %v691 = vld [vmem:[#allocation2 + $0x38] sm:$0xff]
      %v692 = vld [vmem:[#allocation2 + $0x40] sm:$0xff]
      %v693 = vld [vmem:[#allocation2 + $0x48] sm:$0xff]
      %v694 = vld [vmem:[#allocation2 + $0x50] sm:$0xff]
      %v695 = vld [vmem:[#allocation2 + $0x58] sm:$0xff]
      %v696 = vld [vmem:[#allocation2 + $0x60] sm:$0xff]
      %v697 = vld [vmem:[#allocation2 + $0x68] sm:$0xff]
      %v698 = vld [vmem:[#allocation2 + $0x70] sm:$0xff]
      %v699 = vld [vmem:[#allocation2 + $0x78] sm:$0xff]
      %700 = vmax.xlane.f32.xlu0 %v622
      %v701 = vpop.xlane.xlu0 %700
      %702 = vmax.xlane.f32.xlu0 %v625
      %v703 = vpop.xlane.xlu0 %702
      %704 = vmax.xlane.f32.xlu0 %v630
      %v705 = vpop.xlane.xlu0 %704
      %706 = vmax.xlane.f32.xlu0 %v633
      %v707 = vpop.xlane.xlu0 %706
      %708 = vmax.xlane.f32.xlu0 %v638
      %v709 = vpop.xlane.xlu0 %708
      %710 = vmax.xlane.f32.xlu0 %v641
      %v711 = vpop.xlane.xlu0 %710
      %712 = vmax.xlane.f32.xlu0 %v646
      %v713 = vpop.xlane.xlu0 %712
      %714 = vmax.xlane.f32.xlu0 %v649
      %v715 = vpop.xlane.xlu0 %714
      %716 = vmax.xlane.f32.xlu0 %v654
      %v717 = vpop.xlane.xlu0 %716
      %718 = vmax.xlane.f32.xlu0 %v657
      %v719 = vpop.xlane.xlu0 %718
      %720 = vmax.xlane.f32.xlu0 %v662
      %v721 = vpop.xlane.xlu0 %720
      %722 = vmax.xlane.f32.xlu0 %v665
      %v723 = vpop.xlane.xlu0 %722
      %724 = vmax.xlane.f32.xlu0 %v670
      %v725 = vpop.xlane.xlu0 %724
      %726 = vmax.xlane.f32.xlu0 %v673
      %v727 = vpop.xlane.xlu0 %726
      %728 = vmax.xlane.f32.xlu0 %v678
      %v729 = vpop.xlane.xlu0 %728
      %730 = vmax.xlane.f32.xlu0 %v681
      %v731 = vpop.xlane.xlu0 %730
      %v732 = vmax.f32 %v684, %v701
      %v733 = vmax.f32 %v685, %v703
      %v734 = vmax.f32 %v686, %v705
      %v735 = vmax.f32 %v687, %v707
      %v736 = vmax.f32 %v688, %v709
      %v737 = vmax.f32 %v689, %v711
      %v738 = vmax.f32 %v690, %v713
      %v739 = vmax.f32 %v691, %v715
      %v740 = vmax.f32 %v692, %v717
      %v741 = vmax.f32 %v693, %v719
      %v742 = vmax.f32 %v694, %v721
      %v743 = vmax.f32 %v695, %v723
      %v744 = vmax.f32 %v696, %v725
      %v745 = vmax.f32 %v697, %v727
      %v746 = vmax.f32 %v698, %v729
      %v747 = vmax.f32 %v699, %v731
      %v748 = vsub.f32 %v684, %v732
      %v749 = vsub.f32 %v685, %v733
      %v750 = vsub.f32 %v686, %v734
      %v751 = vsub.f32 %v687, %v735
      %v752 = vsub.f32 %v688, %v736
      %v753 = vsub.f32 %v689, %v737
      %v754 = vsub.f32 %v690, %v738
      %v755 = vsub.f32 %v691, %v739
      %v756 = vsub.f32 %v692, %v740
      %v757 = vsub.f32 %v693, %v741
      %v758 = vsub.f32 %v694, %v742
      %v759 = vsub.f32 %v695, %v743
      %v760 = vsub.f32 %v696, %v744
      %v761 = vsub.f32 %v697, %v745
      %v762 = vsub.f32 %v698, %v746
      %v763 = vsub.f32 %v699, %v747
      %v764 = vpow.pop %v748
      %v765 = vpow.pop %v749
      %v766 = vpow.pop %v750
      %v767 = vpow.pop %v751
      %v768 = vpow.pop %v752
      %v769 = vpow.pop %v753
      %v770 = vpow.pop %v754
      %v771 = vpow.pop %v755
      %v772 = vpow.pop %v756
      %v773 = vpow.pop %v757
      %v774 = vpow.pop %v758
      %v775 = vpow.pop %v759
      %v776 = vpow.pop %v760
      %v777 = vpow.pop %v761
      %v778 = vpow.pop %v762
      %v779 = vpow.pop %v763
      %781 = vset.pattern.permute.xlu0 0
      %782 = vperm.xlu0 %781, %v732
      %v783 = vpop.permute.xlu0 %782
      %786 = vset.pattern.permute.xlu0 0
      %787 = vperm.xlu0 %786, %v733
      %v788 = vpop.permute.xlu0 %787
      %791 = vset.pattern.permute.xlu0 0
      %792 = vperm.xlu0 %791, %v734
      %v793 = vpop.permute.xlu0 %792
      %796 = vset.pattern.permute.xlu0 0
      %797 = vperm.xlu0 %796, %v735
      %v798 = vpop.permute.xlu0 %797
      %801 = vset.pattern.permute.xlu0 0
      %802 = vperm.xlu0 %801, %v736
      %v803 = vpop.permute.xlu0 %802
      %806 = vset.pattern.permute.xlu0 0
      %807 = vperm.xlu0 %806, %v737
      %v808 = vpop.permute.xlu0 %807
      %811 = vset.pattern.permute.xlu0 0
      %812 = vperm.xlu0 %811, %v738
      %v813 = vpop.permute.xlu0 %812
      %816 = vset.pattern.permute.xlu0 0
      %817 = vperm.xlu0 %816, %v739
      %v818 = vpop.permute.xlu0 %817
      %821 = vset.pattern.permute.xlu0 0
      %822 = vperm.xlu0 %821, %v740
      %v823 = vpop.permute.xlu0 %822
      %826 = vset.pattern.permute.xlu0 0
      %827 = vperm.xlu0 %826, %v741
      %v828 = vpop.permute.xlu0 %827
      %831 = vset.pattern.permute.xlu0 0
      %832 = vperm.xlu0 %831, %v742
      %v833 = vpop.permute.xlu0 %832
      %836 = vset.pattern.permute.xlu0 0
      %837 = vperm.xlu0 %836, %v743
      %v838 = vpop.permute.xlu0 %837
      %841 = vset.pattern.permute.xlu0 0
      %842 = vperm.xlu0 %841, %v744
      %v843 = vpop.permute.xlu0 %842
      %846 = vset.pattern.permute.xlu0 0
      %847 = vperm.xlu0 %846, %v745
      %v848 = vpop.permute.xlu0 %847
      %851 = vset.pattern.permute.xlu0 0
      %852 = vperm.xlu0 %851, %v746
      %v853 = vpop.permute.xlu0 %852
      %856 = vset.pattern.permute.xlu0 0
      %857 = vperm.xlu0 %856, %v747
      %v858 = vpop.permute.xlu0 %857
      %v860 = vsub.f32 %v622, %v783
      %v861 = vsub.f32 %v625, %v788
      %v862 = vsub.f32 %v630, %v793
      %v863 = vsub.f32 %v633, %v798
      %v864 = vsub.f32 %v638, %v803
      %v865 = vsub.f32 %v641, %v808
      %v866 = vsub.f32 %v646, %v813
      %v867 = vsub.f32 %v649, %v818
      %v868 = vsub.f32 %v654, %v823
      %v869 = vsub.f32 %v657, %v828
      %v870 = vsub.f32 %v662, %v833
      %v871 = vsub.f32 %v665, %v838
      %v872 = vsub.f32 %v670, %v843
      %v873 = vsub.f32 %v673, %v848
      %v874 = vsub.f32 %v678, %v853
      %v875 = vsub.f32 %v681, %v858
      %v876 = vpow.pop %v860
      %v877 = vpow.pop %v861
      %v878 = vpow.pop %v862
      %v879 = vpow.pop %v863
      %v880 = vpow.pop %v864
      %v881 = vpow.pop %v865
      %v882 = vpow.pop %v866
      %v883 = vpow.pop %v867
      %v884 = vpow.pop %v868
      %v885 = vpow.pop %v869
      %v886 = vpow.pop %v870
      %v887 = vpow.pop %v871
      %v888 = vpow.pop %v872
      %v889 = vpow.pop %v873
      %v890 = vpow.pop %v874
      %v891 = vpow.pop %v875
      %v892 = vld [vmem:[#allocation3] sm:$0xff]
      %v893 = vld [vmem:[#allocation3 + $0x8] sm:$0xff]
      %v894 = vld [vmem:[#allocation3 + $0x10] sm:$0xff]
      %v895 = vld [vmem:[#allocation3 + $0x18] sm:$0xff]
      %v896 = vld [vmem:[#allocation3 + $0x20] sm:$0xff]
      %v897 = vld [vmem:[#allocation3 + $0x28] sm:$0xff]
      %v898 = vld [vmem:[#allocation3 + $0x30] sm:$0xff]
      %v899 = vld [vmem:[#allocation3 + $0x38] sm:$0xff]
      %v900 = vld [vmem:[#allocation3 + $0x40] sm:$0xff]
      %v901 = vld [vmem:[#allocation3 + $0x48] sm:$0xff]
      %v902 = vld [vmem:[#allocation3 + $0x50] sm:$0xff]
      %v903 = vld [vmem:[#allocation3 + $0x58] sm:$0xff]
      %v904 = vld [vmem:[#allocation3 + $0x60] sm:$0xff]
      %v905 = vld [vmem:[#allocation3 + $0x68] sm:$0xff]
      %v906 = vld [vmem:[#allocation3 + $0x70] sm:$0xff]
      %v907 = vld [vmem:[#allocation3 + $0x78] sm:$0xff]
      %v908 = vmul.f32 %v764, %v892
      %v909 = vmul.f32 %v765, %v893
      %v910 = vmul.f32 %v766, %v894
      %v911 = vmul.f32 %v767, %v895
      %v912 = vmul.f32 %v768, %v896
      %v913 = vmul.f32 %v769, %v897
      %v914 = vmul.f32 %v770, %v898
      %v915 = vmul.f32 %v771, %v899
      %v916 = vmul.f32 %v772, %v900
      %v917 = vmul.f32 %v773, %v901
      %v918 = vmul.f32 %v774, %v902
      %v919 = vmul.f32 %v775, %v903
      %v920 = vmul.f32 %v776, %v904
      %v921 = vmul.f32 %v777, %v905
      %v922 = vmul.f32 %v778, %v906
      %v923 = vmul.f32 %v779, %v907
      %924 = vadd.xlane.f32.xlu0 %v876
      %v925 = vpop.xlane.xlu0 %924
      %926 = vadd.xlane.f32.xlu0 %v877
      %v927 = vpop.xlane.xlu0 %926
      %928 = vadd.xlane.f32.xlu0 %v878
      %v929 = vpop.xlane.xlu0 %928
      %930 = vadd.xlane.f32.xlu0 %v879
      %v931 = vpop.xlane.xlu0 %930
      %932 = vadd.xlane.f32.xlu0 %v880
      %v933 = vpop.xlane.xlu0 %932
      %934 = vadd.xlane.f32.xlu0 %v881
      %v935 = vpop.xlane.xlu0 %934
      %936 = vadd.xlane.f32.xlu0 %v882
      %v937 = vpop.xlane.xlu0 %936
      %938 = vadd.xlane.f32.xlu0 %v883
      %v939 = vpop.xlane.xlu0 %938
      %940 = vadd.xlane.f32.xlu0 %v884
      %v941 = vpop.xlane.xlu0 %940
      %942 = vadd.xlane.f32.xlu0 %v885
      %v943 = vpop.xlane.xlu0 %942
      %944 = vadd.xlane.f32.xlu0 %v886
      %v945 = vpop.xlane.xlu0 %944
      %946 = vadd.xlane.f32.xlu0 %v887
      %v947 = vpop.xlane.xlu0 %946
      %948 = vadd.xlane.f32.xlu0 %v888
      %v949 = vpop.xlane.xlu0 %948
      %950 = vadd.xlane.f32.xlu0 %v889
      %v951 = vpop.xlane.xlu0 %950
      %952 = vadd.xlane.f32.xlu0 %v890
      %v953 = vpop.xlane.xlu0 %952
      %954 = vadd.xlane.f32.xlu0 %v891
      %v955 = vpop.xlane.xlu0 %954
      %v956 = vadd.f32 %v908, %v925
      %v957 = vadd.f32 %v909, %v927
      %v958 = vadd.f32 %v910, %v929
      %v959 = vadd.f32 %v911, %v931
      %v960 = vadd.f32 %v912, %v933
      %v961 = vadd.f32 %v913, %v935
      %v962 = vadd.f32 %v914, %v937
      %v963 = vadd.f32 %v915, %v939
      %v964 = vadd.f32 %v916, %v941
      %v965 = vadd.f32 %v917, %v943
      %v966 = vadd.f32 %v918, %v945
      %v967 = vadd.f32 %v919, %v947
      %v968 = vadd.f32 %v920, %v949
      %v969 = vadd.f32 %v921, %v951
      %v970 = vadd.f32 %v922, %v953
      %v971 = vadd.f32 %v923, %v955
      %972 = vst [vmem:[#allocation3] sm:$0xff] %v956
      %973 = vst [vmem:[#allocation3 + $0x8] sm:$0xff] %v957
      %974 = vst [vmem:[#allocation3 + $0x10] sm:$0xff] %v958
      %975 = vst [vmem:[#allocation3 + $0x18] sm:$0xff] %v959
      %976 = vst [vmem:[#allocation3 + $0x20] sm:$0xff] %v960
      %977 = vst [vmem:[#allocation3 + $0x28] sm:$0xff] %v961
      %978 = vst [vmem:[#allocation3 + $0x30] sm:$0xff] %v962
      %979 = vst [vmem:[#allocation3 + $0x38] sm:$0xff] %v963
      %980 = vst [vmem:[#allocation3 + $0x40] sm:$0xff] %v964
      %981 = vst [vmem:[#allocation3 + $0x48] sm:$0xff] %v965
      %982 = vst [vmem:[#allocation3 + $0x50] sm:$0xff] %v966
      %983 = vst [vmem:[#allocation3 + $0x58] sm:$0xff] %v967
      %984 = vst [vmem:[#allocation3 + $0x60] sm:$0xff] %v968
      %985 = vst [vmem:[#allocation3 + $0x68] sm:$0xff] %v969
      %986 = vst [vmem:[#allocation3 + $0x70] sm:$0xff] %v970
      %987 = vst [vmem:[#allocation3 + $0x78] sm:$0xff] %v971
      %v988 = vld [vmem:[#allocation4] sm:$0xff]
      %v989 = vld [vmem:[#allocation4 + $0x8] sm:$0xff]
      %v990 = vld [vmem:[#allocation4 + $0x10] sm:$0xff]
      %v991 = vld [vmem:[#allocation4 + $0x18] sm:$0xff]
      %v992 = vld [vmem:[#allocation4 + $0x20] sm:$0xff]
      %v993 = vld [vmem:[#allocation4 + $0x28] sm:$0xff]
      %v994 = vld [vmem:[#allocation4 + $0x30] sm:$0xff]
      %v995 = vld [vmem:[#allocation4 + $0x38] sm:$0xff]
      %v996 = vld [vmem:[#allocation4 + $0x40] sm:$0xff]
      %v997 = vld [vmem:[#allocation4 + $0x48] sm:$0xff]
      %v998 = vld [vmem:[#allocation4 + $0x50] sm:$0xff]
      %v999 = vld [vmem:[#allocation4 + $0x58] sm:$0xff]
      %v1000 = vld [vmem:[#allocation4 + $0x60] sm:$0xff]
      %v1001 = vld [vmem:[#allocation4 + $0x68] sm:$0xff]
      %v1002 = vld [vmem:[#allocation4 + $0x70] sm:$0xff]
      %v1003 = vld [vmem:[#allocation4 + $0x78] sm:$0xff]
      %v1004 = vmul.f32 %v764, %v988
      %v1005 = vmul.f32 %v765, %v989
      %v1006 = vmul.f32 %v766, %v990
      %v1007 = vmul.f32 %v767, %v991
      %v1008 = vmul.f32 %v768, %v992
      %v1009 = vmul.f32 %v769, %v993
      %v1010 = vmul.f32 %v770, %v994
      %v1011 = vmul.f32 %v771, %v995
      %v1012 = vmul.f32 %v772, %v996
      %v1013 = vmul.f32 %v773, %v997
      %v1014 = vmul.f32 %v774, %v998
      %v1015 = vmul.f32 %v775, %v999
      %v1016 = vmul.f32 %v776, %v1000
      %v1017 = vmul.f32 %v777, %v1001
      %v1018 = vmul.f32 %v778, %v1002
      %v1019 = vmul.f32 %v779, %v1003
      %v1020 = vpack.c.bf16 %v877, %v876
      %v1021 = vpack.c.bf16 %v879, %v878
      %v1022 = vpack.c.bf16 %v881, %v880
      %v1023 = vpack.c.bf16 %v883, %v882
      %v1024 = vpack.c.bf16 %v885, %v884
      %v1025 = vpack.c.bf16 %v887, %v886
      %v1026 = vpack.c.bf16 %v889, %v888
      %v1027 = vpack.c.bf16 %v891, %v890
      %v1028 = vld [vmem:[%s394] sm:$0xf]
      %v1029 = vld [vmem:[%s394 + $0x4] sm:$0xf]
      %v1030 = vld [vmem:[%s394 + $0x8] sm:$0xf]
      %v1031 = vld [vmem:[%s394 + $0xc] sm:$0xf]
      %v1032 = vld [vmem:[%s394 + $0x10] sm:$0xf]
      %v1033 = vld [vmem:[%s394 + $0x14] sm:$0xf]
      %v1034 = vld [vmem:[%s394 + $0x18] sm:$0xf]
      %v1035 = vld [vmem:[%s394 + $0x1c] sm:$0xf]
      %v1036 = vld [vmem:[%s394 + $0x20] sm:$0xf]
      %v1037 = vld [vmem:[%s394 + $0x24] sm:$0xf]
      %v1038 = vld [vmem:[%s394 + $0x28] sm:$0xf]
      %v1039 = vld [vmem:[%s394 + $0x2c] sm:$0xf]
      %v1040 = vld [vmem:[%s394 + $0x30] sm:$0xf]
      %v1041 = vld [vmem:[%s394 + $0x34] sm:$0xf]
      %v1042 = vld [vmem:[%s394 + $0x38] sm:$0xf]
      %v1043 = vld [vmem:[%s394 + $0x3c] sm:$0xf]
      %v1060 = vunpack.c.l.b16 %v1028
      %v1061 = vunpack.c.l.b16 %v1029
      %v1062 = vunpack.c.l.b16 %v1030
      %v1063 = vunpack.c.l.b16 %v1031
      %v1064 = vunpack.c.l.b16 %v1032
      %v1065 = vunpack.c.l.b16 %v1033
      %v1066 = vunpack.c.l.b16 %v1034
      %v1067 = vunpack.c.l.b16 %v1035
      %v1068 = vunpack.c.l.b16 %v1036
      %v1069 = vunpack.c.l.b16 %v1037
      %v1070 = vunpack.c.l.b16 %v1038
      %v1071 = vunpack.c.l.b16 %v1039
      %v1072 = vunpack.c.l.b16 %v1040
      %v1073 = vunpack.c.l.b16 %v1041
      %v1074 = vunpack.c.l.b16 %v1042
      %v1075 = vunpack.c.l.b16 %v1043
      %v1076 = vpack.c.b16 %v1061, %v1060
      %v1077 = vpack.c.b16 %v1063, %v1062
      %v1078 = vpack.c.b16 %v1065, %v1064
      %v1079 = vpack.c.b16 %v1067, %v1066
      %v1080 = vpack.c.b16 %v1069, %v1068
      %v1081 = vpack.c.b16 %v1071, %v1070
      %v1082 = vpack.c.b16 %v1073, %v1072
      %v1083 = vpack.c.b16 %v1075, %v1074
      %1092 = vmatprep.subr.bf16.mxu0 0
      %1093 = vmatpush1.bf16.msra.mxu0 %v1076
      %1094 = vmatprep.subr.bf16.mxu0 0
      %1095 = vmatpush1.bf16.msra.mxu0 %v1077
      %1096 = vmatprep.subr.bf16.mxu0 0
      %1097 = vmatpush1.bf16.msra.mxu0 %v1078
      %1098 = vmatprep.subr.bf16.mxu0 0
      %1099 = vmatpush1.bf16.msra.mxu0 %v1079
      %1100 = vmatprep.subr.bf16.mxu0 0
      %1101 = vmatpush1.bf16.msra.mxu0 %v1080
      %1102 = vmatprep.subr.bf16.mxu0 0
      %1103 = vmatpush1.bf16.msra.mxu0 %v1081
      %1104 = vmatprep.subr.bf16.mxu0 0
      %1105 = vmatpush1.bf16.msra.mxu0 %v1082
      %1106 = vmatprep.subr.bf16.mxu0 0
      %1107 = vmatpush1.bf16.msra.mxu0 %v1083
      %1108 = vmatprep.subr.bf16.mxu0 0
      %1109 = vmatpush1.bf16.msra.mxu0 0
      %1110 = vmatprep.subr.bf16.mxu0 0
      %1111 = vmatpush1.bf16.msra.mxu0 0
      %1112 = vmatprep.subr.bf16.mxu0 0
      %1113 = vmatpush1.bf16.msra.mxu0 0
      %1114 = vmatprep.subr.bf16.mxu0 0
      %1115 = vmatpush1.bf16.msra.mxu0 0
      %1116 = vmatprep.subr.bf16.mxu0 0
      %1117 = vmatpush1.bf16.msra.mxu0 0
      %1118 = vmatprep.subr.bf16.mxu0 0
      %1119 = vmatpush1.bf16.msra.mxu0 0
      %1120 = vmatprep.subr.bf16.mxu0 0
      %1121 = vmatpush1.bf16.msra.mxu0 0
      %1122 = vmatprep.subr.bf16.mxu0 0
      %1123 = vmatpush1.bf16.msra.mxu0 0
      %1124 = vmatprep.mubr.bf16.mxu0 0
      %1125 = vmatmul.mubr.bf16.gmra.mrb[0].mxu0 %v1020
      %v1126 = vpop.f32.mrb[0].mxu0
      %v1127 = vadd.f32 0.0, %v1126
      %v1128 = vpop.f32.mrb[0].mxu0
      %v1129 = vpop.f32.mrb[0].mxu0
      %v1130 = vadd.f32 0.0, %v1129
      %v1131 = vpop.f32.mrb[0].mxu0
      %1132 = vmatprep.mubr.bf16.mxu0 0
      %1133 = vmatmul.mubr.bf16.gmra.mrb[0].mxu0 %v1021
      %v1134 = vpop.f32.mrb[0].mxu0
      %v1135 = vadd.f32 0.0, %v1134
      %v1136 = vpop.f32.mrb[0].mxu0
      %v1137 = vpop.f32.mrb[0].mxu0
      %v1138 = vadd.f32 0.0, %v1137
      %v1139 = vpop.f32.mrb[0].mxu0
      %1140 = vmatprep.mubr.bf16.mxu0 0
      %1141 = vmatmul.mubr.bf16.gmra.mrb[0].mxu0 %v1022
      %v1142 = vpop.f32.mrb[0].mxu0
      %v1143 = vadd.f32 0.0, %v1142
      %v1144 = vpop.f32.mrb[0].mxu0
      %v1145 = vpop.f32.mrb[0].mxu0
      %v1146 = vadd.f32 0.0, %v1145
      %v1147 = vpop.f32.mrb[0].mxu0
      %1148 = vmatprep.mubr.bf16.mxu0 0
      %1149 = vmatmul.mubr.bf16.gmra.mrb[0].mxu0 %v1023
      %v1150 = vpop.f32.mrb[0].mxu0
      %v1151 = vadd.f32 0.0, %v1150
      %v1152 = vpop.f32.mrb[0].mxu0
      %v1153 = vpop.f32.mrb[0].mxu0
      %v1154 = vadd.f32 0.0, %v1153
      %v1155 = vpop.f32.mrb[0].mxu0
      %1156 = vmatprep.mubr.bf16.mxu0 0
      %1157 = vmatmul.mubr.bf16.gmra.mrb[0].mxu0 %v1024
      %v1158 = vpop.f32.mrb[0].mxu0
      %v1159 = vadd.f32 0.0, %v1158
      %v1160 = vpop.f32.mrb[0].mxu0
      %v1161 = vpop.f32.mrb[0].mxu0
      %v1162 = vadd.f32 0.0, %v1161
      %v1163 = vpop.f32.mrb[0].mxu0
      %1164 = vmatprep.mubr.bf16.mxu0 0
      %1165 = vmatmul.mubr.bf16.gmra.mrb[0].mxu0 %v1025
      %v1166 = vpop.f32.mrb[0].mxu0
      %v1167 = vadd.f32 0.0, %v1166
      %v1168 = vpop.f32.mrb[0].mxu0
      %v1169 = vpop.f32.mrb[0].mxu0
      %v1170 = vadd.f32 0.0, %v1169
      %v1171 = vpop.f32.mrb[0].mxu0
      %1172 = vmatprep.mubr.bf16.mxu0 0
      %1173 = vmatmul.mubr.bf16.gmra.mrb[0].mxu0 %v1026
      %v1174 = vpop.f32.mrb[0].mxu0
      %v1175 = vadd.f32 0.0, %v1174
      %v1176 = vpop.f32.mrb[0].mxu0
      %v1177 = vpop.f32.mrb[0].mxu0
      %v1178 = vadd.f32 0.0, %v1177
      %v1179 = vpop.f32.mrb[0].mxu0
      %1180 = vmatprep.mubr.bf16.mxu0 0
      %1181 = vmatmul.mubr.bf16.gmra.mrb[0].mxu0 %v1027
      %v1182 = vpop.f32.mrb[0].mxu0
      %v1183 = vadd.f32 0.0, %v1182
      %v1184 = vpop.f32.mrb[0].mxu0
      %v1185 = vpop.f32.mrb[0].mxu0
      %v1186 = vadd.f32 0.0, %v1185
      %v1187 = vpop.f32.mrb[0].mxu0
      %1188 = vdwg.mxu0
      %v1189 = vadd.f32 %v1004, %v1127
      %v1190 = vadd.f32 %v1005, %v1130
      %v1191 = vadd.f32 %v1006, %v1135
      %v1192 = vadd.f32 %v1007, %v1138
      %v1193 = vadd.f32 %v1008, %v1143
      %v1194 = vadd.f32 %v1009, %v1146
      %v1195 = vadd.f32 %v1010, %v1151
      %v1196 = vadd.f32 %v1011, %v1154
      %v1197 = vadd.f32 %v1012, %v1159
      %v1198 = vadd.f32 %v1013, %v1162
      %v1199 = vadd.f32 %v1014, %v1167
      %v1200 = vadd.f32 %v1015, %v1170
      %v1201 = vadd.f32 %v1016, %v1175
      %v1202 = vadd.f32 %v1017, %v1178
      %v1203 = vadd.f32 %v1018, %v1183
      %v1204 = vadd.f32 %v1019, %v1186
      %1205 = vst [vmem:[#allocation4] sm:$0xff] %v1189
      %1206 = vst [vmem:[#allocation4 + $0x8] sm:$0xff] %v1190
      %1207 = vst [vmem:[#allocation4 + $0x10] sm:$0xff] %v1191
      %1208 = vst [vmem:[#allocation4 + $0x18] sm:$0xff] %v1192
      %1209 = vst [vmem:[#allocation4 + $0x20] sm:$0xff] %v1193
      %1210 = vst [vmem:[#allocation4 + $0x28] sm:$0xff] %v1194
      %1211 = vst [vmem:[#allocation4 + $0x30] sm:$0xff] %v1195
      %1212 = vst [vmem:[#allocation4 + $0x38] sm:$0xff] %v1196
      %1213 = vst [vmem:[#allocation4 + $0x40] sm:$0xff] %v1197
      %1214 = vst [vmem:[#allocation4 + $0x48] sm:$0xff] %v1198
      %1215 = vst [vmem:[#allocation4 + $0x50] sm:$0xff] %v1199
      %1216 = vst [vmem:[#allocation4 + $0x58] sm:$0xff] %v1200
      %1217 = vst [vmem:[#allocation4 + $0x60] sm:$0xff] %v1201
      %1218 = vst [vmem:[#allocation4 + $0x68] sm:$0xff] %v1202
      %1219 = vst [vmem:[#allocation4 + $0x70] sm:$0xff] %v1203
      %1220 = vst [vmem:[#allocation4 + $0x78] sm:$0xff] %v1204
      %1221 = vst [vmem:[#allocation2] sm:$0xff] %v732
      %1222 = vst [vmem:[#allocation2 + $0x8] sm:$0xff] %v733
      %1223 = vst [vmem:[#allocation2 + $0x10] sm:$0xff] %v734
      %1224 = vst [vmem:[#allocation2 + $0x18] sm:$0xff] %v735
      %1225 = vst [vmem:[#allocation2 + $0x20] sm:$0xff] %v736
      %1226 = vst [vmem:[#allocation2 + $0x28] sm:$0xff] %v737
      %1227 = vst [vmem:[#allocation2 + $0x30] sm:$0xff] %v738
      %1228 = vst [vmem:[#allocation2 + $0x38] sm:$0xff] %v739
      %1229 = vst [vmem:[#allocation2 + $0x40] sm:$0xff] %v740
      %1230 = vst [vmem:[#allocation2 + $0x48] sm:$0xff] %v741
      %1231 = vst [vmem:[#allocation2 + $0x50] sm:$0xff] %v742
      %1232 = vst [vmem:[#allocation2 + $0x58] sm:$0xff] %v743
      %1233 = vst [vmem:[#allocation2 + $0x60] sm:$0xff] %v744
      %1234 = vst [vmem:[#allocation2 + $0x68] sm:$0xff] %v745
      %1235 = vst [vmem:[#allocation2 + $0x70] sm:$0xff] %v746
      %1236 = vst [vmem:[#allocation2 + $0x78] sm:$0xff] %v747
      %p1237 = scmp.eq.s32.totalorder %s24, 1
      // Predicated region
      $region49: #{attn_block.5} parent=43 // pred_check
        %p1238 = pneg %p1237
      $region50: #{attn_block.5} parent=43 // pred_check_branch
        %1240 = sbr.rel (%p1238) target = $region52
      $region51: #{attn_block.5} parent=43 // pred_region
        %v1241 = vld [vmem:[#allocation3] sm:$0xff]
        %v1242 = vld [vmem:[#allocation3 + $0x8] sm:$0xff]
        %v1243 = vld [vmem:[#allocation3 + $0x10] sm:$0xff]
        %v1244 = vld [vmem:[#allocation3 + $0x18] sm:$0xff]
        %v1245 = vld [vmem:[#allocation3 + $0x20] sm:$0xff]
        %v1246 = vld [vmem:[#allocation3 + $0x28] sm:$0xff]
        %v1247 = vld [vmem:[#allocation3 + $0x30] sm:$0xff]
        %v1248 = vld [vmem:[#allocation3 + $0x38] sm:$0xff]
        %v1249 = vld [vmem:[#allocation3 + $0x40] sm:$0xff]
        %v1250 = vld [vmem:[#allocation3 + $0x48] sm:$0xff]
        %v1251 = vld [vmem:[#allocation3 + $0x50] sm:$0xff]
        %v1252 = vld [vmem:[#allocation3 + $0x58] sm:$0xff]
        %v1253 = vld [vmem:[#allocation3 + $0x60] sm:$0xff]
        %v1254 = vld [vmem:[#allocation3 + $0x68] sm:$0xff]
        %v1255 = vld [vmem:[#allocation3 + $0x70] sm:$0xff]
        %v1256 = vld [vmem:[#allocation3 + $0x78] sm:$0xff]
        %v1257 = vld [vmem:[#allocation4] sm:$0xff]
        %v1258 = vld [vmem:[#allocation4 + $0x8] sm:$0xff]
        %v1259 = vld [vmem:[#allocation4 + $0x10] sm:$0xff]
        %v1260 = vld [vmem:[#allocation4 + $0x18] sm:$0xff]
        %v1261 = vld [vmem:[#allocation4 + $0x20] sm:$0xff]
        %v1262 = vld [vmem:[#allocation4 + $0x28] sm:$0xff]
        %v1263 = vld [vmem:[#allocation4 + $0x30] sm:$0xff]
        %v1264 = vld [vmem:[#allocation4 + $0x38] sm:$0xff]
        %v1265 = vld [vmem:[#allocation4 + $0x40] sm:$0xff]
        %v1266 = vld [vmem:[#allocation4 + $0x48] sm:$0xff]
        %v1267 = vld [vmem:[#allocation4 + $0x50] sm:$0xff]
        %v1268 = vld [vmem:[#allocation4 + $0x58] sm:$0xff]
        %v1269 = vld [vmem:[#allocation4 + $0x60] sm:$0xff]
        %v1270 = vld [vmem:[#allocation4 + $0x68] sm:$0xff]
        %v1271 = vld [vmem:[#allocation4 + $0x70] sm:$0xff]
        %v1272 = vld [vmem:[#allocation4 + $0x78] sm:$0xff]
        %v1273 = vrcp.pop %v1241
        %v1274 = vmul.f32 %v1257, %v1273
        %v1275 = vrcp.pop %v1242
        %v1276 = vmul.f32 %v1258, %v1275
        %v1277 = vrcp.pop %v1243
        %v1278 = vmul.f32 %v1259, %v1277
        %v1279 = vrcp.pop %v1244
        %v1280 = vmul.f32 %v1260, %v1279
        %v1281 = vrcp.pop %v1245
        %v1282 = vmul.f32 %v1261, %v1281
        %v1283 = vrcp.pop %v1246
        %v1284 = vmul.f32 %v1262, %v1283
        %v1285 = vrcp.pop %v1247
        %v1286 = vmul.f32 %v1263, %v1285
        %v1287 = vrcp.pop %v1248
        %v1288 = vmul.f32 %v1264, %v1287
        %v1289 = vrcp.pop %v1249
        %v1290 = vmul.f32 %v1265, %v1289
        %v1291 = vrcp.pop %v1250
        %v1292 = vmul.f32 %v1266, %v1291
        %v1293 = vrcp.pop %v1251
        %v1294 = vmul.f32 %v1267, %v1293
        %v1295 = vrcp.pop %v1252
        %v1296 = vmul.f32 %v1268, %v1295
        %v1297 = vrcp.pop %v1253
        %v1298 = vmul.f32 %v1269, %v1297
        %v1299 = vrcp.pop %v1254
        %v1300 = vmul.f32 %v1270, %v1299
        %v1301 = vrcp.pop %v1255
        %v1302 = vmul.f32 %v1271, %v1301
        %v1303 = vrcp.pop %v1256
        %v1304 = vmul.f32 %v1272, %v1303
        %v1305 = vpack.c.bf16 %v1276, %v1274
        %v1306 = vpack.c.bf16 %v1280, %v1278
        %v1307 = vpack.c.bf16 %v1284, %v1282
        %v1308 = vpack.c.bf16 %v1288, %v1286
        %v1309 = vpack.c.bf16 %v1292, %v1290
        %v1310 = vpack.c.bf16 %v1296, %v1294
        %v1311 = vpack.c.bf16 %v1300, %v1298
        %v1312 = vpack.c.bf16 %v1304, %v1302
        %v1313 = vld [vmem:[%s4] sm:$0xf]
        %v1314 = vld [vmem:[%s4 + $0x4] sm:$0xf]
        %v1315 = vld [vmem:[%s4 + $0x8] sm:$0xf]
        %v1316 = vld [vmem:[%s4 + $0xc] sm:$0xf]
        %v1317 = vld [vmem:[%s4 + $0x10] sm:$0xf]
        %v1318 = vld [vmem:[%s4 + $0x14] sm:$0xf]
        %v1319 = vld [vmem:[%s4 + $0x18] sm:$0xf]
        %v1320 = vld [vmem:[%s4 + $0x1c] sm:$0xf]
        %v1321 = vld [vmem:[%s4 + $0x20] sm:$0xf]
        %v1322 = vld [vmem:[%s4 + $0x24] sm:$0xf]
        %v1323 = vld [vmem:[%s4 + $0x28] sm:$0xf]
        %v1324 = vld [vmem:[%s4 + $0x2c] sm:$0xf]
        %v1325 = vld [vmem:[%s4 + $0x30] sm:$0xf]
        %v1326 = vld [vmem:[%s4 + $0x34] sm:$0xf]
        %v1327 = vld [vmem:[%s4 + $0x38] sm:$0xf]
        %v1328 = vld [vmem:[%s4 + $0x3c] sm:$0xf]
        %v1329 = vld [vmem:[%s5] sm:$0x1]
        %v1331 = vlaneseq
        %v1332 = vshrl.u32 %v1331, 7
        %v1333 = vsub.s32 0, %v1332
        %v1334 = vrot.slane %v1329, %v1333
        %v1352 = vunpack.c.l.b16 %v1313
        %v1353 = vunpack.c.l.b16 %v1314
        %v1354 = vunpack.c.l.b16 %v1315
        %v1355 = vunpack.c.l.b16 %v1316
        %v1356 = vunpack.c.l.b16 %v1317
        %v1357 = vunpack.c.l.b16 %v1318
        %v1358 = vunpack.c.l.b16 %v1319
        %v1359 = vunpack.c.l.b16 %v1320
        %v1360 = vunpack.c.l.b16 %v1321
        %v1361 = vunpack.c.l.b16 %v1322
        %v1362 = vunpack.c.l.b16 %v1323
        %v1363 = vunpack.c.l.b16 %v1324
        %v1364 = vunpack.c.l.b16 %v1325
        %v1365 = vunpack.c.l.b16 %v1326
        %v1366 = vunpack.c.l.b16 %v1327
        %v1367 = vunpack.c.l.b16 %v1328
        %v1368 = vpack.c.b16 %v1353, %v1352
        %v1369 = vpack.c.b16 %v1355, %v1354
        %v1370 = vpack.c.b16 %v1357, %v1356
        %v1371 = vpack.c.b16 %v1359, %v1358
        %v1372 = vpack.c.b16 %v1361, %v1360
        %v1373 = vpack.c.b16 %v1363, %v1362
        %v1374 = vpack.c.b16 %v1365, %v1364
        %v1375 = vpack.c.b16 %v1367, %v1366
        %1384 = vmatprep.subr.bf16.mxu0 0
        %1385 = vmatpush1.bf16.msra.mxu0 %v1368
        %1386 = vmatprep.subr.bf16.mxu0 0
        %1387 = vmatpush1.bf16.msra.mxu0 %v1369
        %1388 = vmatprep.subr.bf16.mxu0 0
        %1389 = vmatpush1.bf16.msra.mxu0 %v1370
        %1390 = vmatprep.subr.bf16.mxu0 0
        %1391 = vmatpush1.bf16.msra.mxu0 %v1371
        %1392 = vmatprep.subr.bf16.mxu0 0
        %1393 = vmatpush1.bf16.msra.mxu0 %v1372
        %1394 = vmatprep.subr.bf16.mxu0 0
        %1395 = vmatpush1.bf16.msra.mxu0 %v1373
        %1396 = vmatprep.subr.bf16.mxu0 0
        %1397 = vmatpush1.bf16.msra.mxu0 %v1374
        %1398 = vmatprep.subr.bf16.mxu0 0
        %1399 = vmatpush1.bf16.msra.mxu0 %v1375
        %1400 = vmatprep.subr.bf16.mxu0 0
        %1401 = vmatpush1.bf16.msra.mxu0 0
        %1402 = vmatprep.subr.bf16.mxu0 0
        %1403 = vmatpush1.bf16.msra.mxu0 0
        %1404 = vmatprep.subr.bf16.mxu0 0
        %1405 = vmatpush1.bf16.msra.mxu0 0
        %1406 = vmatprep.subr.bf16.mxu0 0
        %1407 = vmatpush1.bf16.msra.mxu0 0
        %1408 = vmatprep.subr.bf16.mxu0 0
        %1409 = vmatpush1.bf16.msra.mxu0 0
        %1410 = vmatprep.subr.bf16.mxu0 0
        %1411 = vmatpush1.bf16.msra.mxu0 0
        %1412 = vmatprep.subr.bf16.mxu0 0
        %1413 = vmatpush1.bf16.msra.mxu0 0
        %1414 = vmatprep.subr.bf16.mxu0 0
        %1415 = vmatpush1.bf16.msra.mxu0 0
        %1416 = vmatprep.mubr.bf16.mxu0 0
        %1417 = vmatmul.mubr.bf16.gmra.mrb[0].mxu0 %v1305
        %v1418 = vpop.f32.mrb[0].mxu0
        %v1419 = vadd.f32 %v1334, %v1418
        %v1420 = vpop.f32.mrb[0].mxu0
        %v1421 = vpop.f32.mrb[0].mxu0
        %v1422 = vadd.f32 %v1334, %v1421
        %v1423 = vpop.f32.mrb[0].mxu0
        %1424 = vmatprep.mubr.bf16.mxu0 0
        %1425 = vmatmul.mubr.bf16.gmra.mrb[0].mxu0 %v1306
        %v1426 = vpop.f32.mrb[0].mxu0
        %v1427 = vadd.f32 %v1334, %v1426
        %v1428 = vpop.f32.mrb[0].mxu0
        %v1429 = vpop.f32.mrb[0].mxu0
        %v1430 = vadd.f32 %v1334, %v1429
        %v1431 = vpop.f32.mrb[0].mxu0
        %1432 = vmatprep.mubr.bf16.mxu0 0
        %1433 = vmatmul.mubr.bf16.gmra.mrb[0].mxu0 %v1307
        %v1434 = vpop.f32.mrb[0].mxu0
        %v1435 = vadd.f32 %v1334, %v1434
        %v1436 = vpop.f32.mrb[0].mxu0
        %v1437 = vpop.f32.mrb[0].mxu0
        %v1438 = vadd.f32 %v1334, %v1437
        %v1439 = vpop.f32.mrb[0].mxu0
        %1440 = vmatprep.mubr.bf16.mxu0 0
        %1441 = vmatmul.mubr.bf16.gmra.mrb[0].mxu0 %v1308
        %v1442 = vpop.f32.mrb[0].mxu0
        %v1443 = vadd.f32 %v1334, %v1442
        %v1444 = vpop.f32.mrb[0].mxu0
        %v1445 = vpop.f32.mrb[0].mxu0
        %v1446 = vadd.f32 %v1334, %v1445
        %v1447 = vpop.f32.mrb[0].mxu0
        %1448 = vmatprep.mubr.bf16.mxu0 0
        %1449 = vmatmul.mubr.bf16.gmra.mrb[0].mxu0 %v1309
        %v1450 = vpop.f32.mrb[0].mxu0
        %v1451 = vadd.f32 %v1334, %v1450
        %v1452 = vpop.f32.mrb[0].mxu0
        %v1453 = vpop.f32.mrb[0].mxu0
        %v1454 = vadd.f32 %v1334, %v1453
        %v1455 = vpop.f32.mrb[0].mxu0
        %1456 = vmatprep.mubr.bf16.mxu0 0
        %1457 = vmatmul.mubr.bf16.gmra.mrb[0].mxu0 %v1310
        %v1458 = vpop.f32.mrb[0].mxu0
        %v1459 = vadd.f32 %v1334, %v1458
        %v1460 = vpop.f32.mrb[0].mxu0
        %v1461 = vpop.f32.mrb[0].mxu0
        %v1462 = vadd.f32 %v1334, %v1461
        %v1463 = vpop.f32.mrb[0].mxu0
        %1464 = vmatprep.mubr.bf16.mxu0 0
        %1465 = vmatmul.mubr.bf16.gmra.mrb[0].mxu0 %v1311
        %v1466 = vpop.f32.mrb[0].mxu0
        %v1467 = vadd.f32 %v1334, %v1466
        %v1468 = vpop.f32.mrb[0].mxu0
        %v1469 = vpop.f32.mrb[0].mxu0
        %v1470 = vadd.f32 %v1334, %v1469
        %v1471 = vpop.f32.mrb[0].mxu0
        %1472 = vmatprep.mubr.bf16.mxu0 0
        %1473 = vmatmul.mubr.bf16.gmra.mrb[0].mxu0 %v1312
        %v1474 = vpop.f32.mrb[0].mxu0
        %v1475 = vadd.f32 %v1334, %v1474
        %v1476 = vpop.f32.mrb[0].mxu0
        %v1477 = vpop.f32.mrb[0].mxu0
        %v1478 = vadd.f32 %v1334, %v1477
        %v1479 = vpop.f32.mrb[0].mxu0
        %1480 = vdwg.mxu0
        %v1481 = vld [vmem:[%s364] sm:$0xff]
        %v1482 = vld [vmem:[%s364 + $0x8] sm:$0xff]
        %v1483 = vld [vmem:[%s364 + $0x10] sm:$0xff]
        %v1484 = vld [vmem:[%s364 + $0x18] sm:$0xff]
        %v1485 = vld [vmem:[%s364 + $0x20] sm:$0xff]
        %v1486 = vld [vmem:[%s364 + $0x28] sm:$0xff]
        %v1487 = vld [vmem:[%s364 + $0x30] sm:$0xff]
        %v1488 = vld [vmem:[%s364 + $0x38] sm:$0xff]
        %v1489 = vld [vmem:[%s364 + $0x40] sm:$0xff]
        %v1490 = vld [vmem:[%s364 + $0x48] sm:$0xff]
        %v1491 = vld [vmem:[%s364 + $0x50] sm:$0xff]
        %v1492 = vld [vmem:[%s364 + $0x58] sm:$0xff]
        %v1493 = vld [vmem:[%s364 + $0x60] sm:$0xff]
        %v1494 = vld [vmem:[%s364 + $0x68] sm:$0xff]
        %v1495 = vld [vmem:[%s364 + $0x70] sm:$0xff]
        %v1496 = vld [vmem:[%s364 + $0x78] sm:$0xff]
        %v1497 = vadd.f32 %v1481, %v1419
        %v1498 = vadd.f32 %v1482, %v1422
        %v1499 = vadd.f32 %v1483, %v1427
        %v1500 = vadd.f32 %v1484, %v1430
        %v1501 = vadd.f32 %v1485, %v1435
        %v1502 = vadd.f32 %v1486, %v1438
        %v1503 = vadd.f32 %v1487, %v1443
        %v1504 = vadd.f32 %v1488, %v1446
        %v1505 = vadd.f32 %v1489, %v1451
        %v1506 = vadd.f32 %v1490, %v1454
        %v1507 = vadd.f32 %v1491, %v1459
        %v1508 = vadd.f32 %v1492, %v1462
        %v1509 = vadd.f32 %v1493, %v1467
        %v1510 = vadd.f32 %v1494, %v1470
        %v1511 = vadd.f32 %v1495, %v1475
        %v1512 = vadd.f32 %v1496, %v1478
        %1513 = vst [vmem:[%s404] sm:$0xff] %v1497
        %1514 = vst [vmem:[%s404 + $0x8] sm:$0xff] %v1498
        %1515 = vst [vmem:[%s404 + $0x10] sm:$0xff] %v1499
        %1516 = vst [vmem:[%s404 + $0x18] sm:$0xff] %v1500
        %1517 = vst [vmem:[%s404 + $0x20] sm:$0xff] %v1501
        %1518 = vst [vmem:[%s404 + $0x28] sm:$0xff] %v1502
        %1519 = vst [vmem:[%s404 + $0x30] sm:$0xff] %v1503
        %1520 = vst [vmem:[%s404 + $0x38] sm:$0xff] %v1504
        %1521 = vst [vmem:[%s404 + $0x40] sm:$0xff] %v1505
        %1522 = vst [vmem:[%s404 + $0x48] sm:$0xff] %v1506
        %1523 = vst [vmem:[%s404 + $0x50] sm:$0xff] %v1507
        %1524 = vst [vmem:[%s404 + $0x58] sm:$0xff] %v1508
        %1525 = vst [vmem:[%s404 + $0x60] sm:$0xff] %v1509
        %1526 = vst [vmem:[%s404 + $0x68] sm:$0xff] %v1510
        %1527 = vst [vmem:[%s404 + $0x70] sm:$0xff] %v1511
        %1528 = vst [vmem:[%s404 + $0x78] sm:$0xff] %v1512
      $region52: #{attn_block.5} parent=43 // pred_fallthru
        _
      %s1529 = smul.u32 16, %s23
      %p1530 = scmp.lt.s32.totalorder %s22, 1
      %s1531 = scalar_select %p1530, %s22, 1
      %p1532 = scmp.lt.s32.totalorder %s1529, 31
      %s1533 = scalar_select %p1532, %s1529, 31
      %s1534 = smul.addr %s1531, 32
      %s1535 = sadd.s32 %s1533, %s1534
      %s1536 = smul.addr %s1535, 8
      %s1537 = scalar_lea.vmem %s6, %s1536
      // Predicated region
      $region53: #{attn_block.5} parent=43 // pred_check
        %p1538 = pneg %p210
      $region54: #{attn_block.5} parent=43 // pred_check_branch
        %1540 = sbr.rel (%p1538) target = $region56
      $region55: #{attn_block.5} parent=43 // pred_region
        %s1541 = smul.u32 16, %s23
      $region56: #{attn_block.5} parent=43 // pred_fallthru
        _
    $region44: #{attn_block.5} parent=5 // pred_fallthru
      _
    %p1542 = scmp.le.s32.totalorder 2, %s12
    // Predicated region
    $region57: #{attn_block.5} parent=5 // pred_check
      %p1543 = pneg %p1542
    $region58: #{attn_block.5} parent=5 // pred_check_branch
      %1545 = sbr.rel (%p1543) target = $region60
    $region59: #{attn_block.5} parent=5 // pred_region
      %s1546 = ssub.s32 %s12, 2
      // Predicated region
      $region61: #{attn_block.5} parent=59 // pred_check
        %p1547 = pneg %p216
      $region62: #{attn_block.5} parent=59 // pred_check_branch
        %1549 = sbr.rel (%p1547) target = $region64
      $region63: #{attn_block.5} parent=59 // pred_region
        %s1550 = smul.u32 16, %s26
        %p1551 = scmp.lt.s32.totalorder %s25, 1
        %s1552 = scalar_select %p1551, %s25, 1
        %p1553 = scmp.lt.s32.totalorder %s1550, 31
        %s1554 = scalar_select %p1553, %s1550, 31
        %s1555 = smul.addr %s1552, 32
        %s1556 = sadd.s32 %s1554, %s1555
        %s1557 = smul.addr %s1556, 8
        %s1558 = scalar_lea.vmem %s6, %s1557
      $region64: #{attn_block.5} parent=59 // pred_fallthru
        _
    $region60: #{attn_block.5} parent=5 // pred_fallthru
      _
  $region6: #{attn_block.5} parent=0 // loop_footer
    %s16 = sadd.s32 1, %s12
  $region7: #{attn_block.5} parent=0 // loop_footer_branch
    %11 = sbr.rel target = $region3
  $region8: #{attn_block.5} parent=0 // loop_exit
    _

</llo_original>
